<compile_context>
chip_gen: v7x
topology: tpu7x:2x2x1
jax: 0.10.0
libtpu: 0.0.40
codegen_flags: <defaults>
</compile_context>

<pallas_src>
import functools

import jax
import jax.numpy as jnp
from jax import lax
from jax.experimental import pallas as pl
from jax.experimental.pallas import tpu as pltpu


VMEM_SPEC = pl.BlockSpec(memory_space=pltpu.MemorySpace.VMEM)


def _modal_spec(a, b):
    # [3, a, b] array blocked along the modality axis.
    return pl.BlockSpec((1, a, b), lambda m: (m, 0, 0))


# ----------------------------------------------------------------------------
# Pallas kernels
# ----------------------------------------------------------------------------
def _proj_gates_kernel(x_ref, wp_ref, bp_ref, wxf_ref, bxf_ref, wxb_ref, bxb_ref,
                       pre_f_ref, pre_b_ref):
    """Modality fc + BiGRU input-gate pre-activations (fwd & bwd directions)."""
    x = x_ref[0]                                        # [T*B, Dmax]  f32
    wp = wp_ref[0]                                      # [Dmax, D]    bf16
    feat = jnp.dot(x.astype(wp.dtype), wp,
                   preferred_element_type=jnp.float32) + bp_ref[0]
    wxf = wxf_ref[0]                                    # [D, 3*De]    bf16
    wxb = wxb_ref[0]
    fb = feat.astype(wxf.dtype)
    pre_f_ref[0] = jnp.dot(fb, wxf, preferred_element_type=jnp.float32) + bxf_ref[0]
    pre_b_ref[0] = jnp.dot(fb, wxb, preferred_element_type=jnp.float32) + bxb_ref[0]


def _bigru_kernel(pre_f_ref, pre_b_ref, m_ref, wh_ref, out_f_ref, out_b_ref, h_sc):
    """Utterance-mask-gated BiGRU; fwd+bwd of 3 modalities stacked = 6 chains.

    pre_f/pre_b: [T, 3, B, 3*De]   m: [T, B, 1]   wh: [6, De, 3*De]
    out_f/out_b: [T, 3, B, De]     h_sc: [6, B, De]
    """
    T, nm = pre_f_ref.shape[0], pre_f_ref.shape[1]
    De = out_f_ref.shape[-1]
    wh = wh_ref[...]                                    # loaded once (loop-invariant)
    h_sc[...] = jnp.zeros(h_sc.shape, h_sc.dtype)

    def step(t, carry):
        rt = T - 1 - t
        h_prev = h_sc[...]                              # [6, B, De]
        # single batched recurrent matmul for all 6 chains, fused r|z|n gates
        hh = jnp.einsum('cbk,ckg->cbg', h_prev, wh,
                        preferred_element_type=jnp.float32)          # [6, B, 3*De]
        pre = jnp.concatenate([pre_f_ref[t], pre_b_ref[rt]], axis=0)  # [6, B, 3*De]
        r = jax.nn.sigmoid(pre[..., 0:De] + hh[..., 0:De])
        z = jax.nn.sigmoid(pre[..., De:2 * De] + hh[..., De:2 * De])
        n = jnp.tanh(pre[..., 2 * De:3 * De] + r * hh[..., 2 * De:3 * De])
        h_new = (1.0 - z) * n + z * h_prev
        m_t = m_ref[t]                                  # [B, 1]
        m_rt = m_ref[rt]
        h_f = m_t * h_new[:nm] + (1.0 - m_t) * h_prev[:nm]
        h_b = m_rt * h_new[nm:] + (1.0 - m_rt) * h_prev[nm:]
        h_sc[...] = jnp.concatenate([h_f, h_b], axis=0)
        out_f_ref[t] = h_f
        out_b_ref[rt] = h_b
        return carry

    lax.fori_loop(0, T, step, 0)


def _fused_attn_kernel(feats_ref, wq_ref, bq_ref, wk_ref, bk_ref, wv_ref, bv_ref,
                       wo_ref, bo_ref, g1_ref, be1_ref, w1_ref, b1_ref,
                       w2_ref, b2_ref, g2_ref, be2_ref, o_ref, *, num_heads):
    """One fully fused cross-modal attention block (one modality per grid step)."""
    m = pl.program_id(0)
    nm, B, T, D = feats_ref.shape
    hd = D // num_heads
    scale = 1.0 / float(hd) ** 0.5

    def proj(x2d, w_ref, b_ref):
        w = w_ref[0]
        return jnp.dot(x2d.astype(w.dtype), w,
                       preferred_element_type=jnp.float32) + b_ref[0]

    xq = feats_ref[m]                                   # query modality   [B, T, D]
    kv1 = feats_ref[(m + 1) % nm]                       # other modalities
    kv2 = feats_ref[(m + 2) % nm]
    xkv = jnp.concatenate([kv1, kv2], axis=1)           # [B, 2T, D]  (VMEM only)
    S = 2 * T

    xq2 = xq.reshape(B * T, D)
    q = proj(xq2, wq_ref, bq_ref).reshape(B, T, D)
    xkv2 = xkv.reshape(B * S, D)
    k = proj(xkv2, wk_ref, bk_ref).reshape(B, S, D)
    v = proj(xkv2, wv_ref, bv_ref).reshape(B, S, D)

    # TODO(synk): the reference forward does not pass utterance_masks into
    # MultiAttnModel, so no key-padding mask is applied here either.
    heads = []
    for h in range(num_heads):
        sl = slice(h * hd, (h + 1) * hd)
        s = jnp.einsum('bqd,bkd->bqk', q[:, :, sl], k[:, :, sl],
                       preferred_element_type=jnp.float32) * scale
        s = s - jnp.max(s, axis=-1, keepdims=True)
        p = jnp.exp(s)
        p = p * pl.reciprocal(jnp.sum(p, axis=-1, keepdims=True), approx=True)
        heads.append(jnp.einsum('bqk,bkd->bqd', p, v[:, :, sl],
                                preferred_element_type=jnp.float32))
    attn = jnp.concatenate(heads, axis=-1).reshape(B * T, D)

    def layer_norm(x, g_ref, b_ref):
        mu = jnp.mean(x, axis=-1, keepdims=True)
        var = jnp.mean((x - mu) ** 2, axis=-1, keepdims=True)
        return (x - mu) * lax.rsqrt(var + 1e-5) * g_ref[0] + b_ref[0]

    x1 = layer_norm(xq2 + proj(attn, wo_ref, bo_ref), g1_ref, be1_ref)
    ff = jnp.maximum(proj(x1, w1_ref, b1_ref), 0.0)
    out = layer_norm(x1 + proj(ff, w2_ref, b2_ref), g2_ref, be2_ref)
    o_ref[0] = out.reshape(B, T, D)


def _head_kernel(feats_ref, wfc_ref, bfc_ref, w1_ref, b1_ref, w2_ref, b2_ref,
                 fc_ref, mlp_ref):
    """concat(text, audio, visual) -> fc -> MLP for all B*T rows."""
    nm, B, T, D = feats_ref.shape

    def mm(x, w_ref, b_ref):
        w = w_ref[...]
        return jnp.dot(x.astype(w.dtype), w,
                       preferred_element_type=jnp.float32) + b_ref[...]

    x = jnp.concatenate([feats_ref[i].reshape(B * T, D) for i in range(nm)], axis=-1)
    fc = mm(x, wfc_ref, bfc_ref)
    h = jnp.maximum(mm(fc, w1_ref, b1_ref), 0.0)
    fc_ref[...] = fc
    mlp_ref[...] = mm(h, w2_ref, b2_ref)


# ----------------------------------------------------------------------------
# pallas_call wrappers
# ----------------------------------------------------------------------------
def project_and_gates(x_stack, p):
    nm, N, d_max = x_stack.shape
    D = p['proj_w'].shape[-1]
    G = p['gru_wx_f'].shape[-1]
    return pl.pallas_call(
        _proj_gates_kernel,
        grid=(nm,),
        out_shape=(jax.ShapeDtypeStruct((nm, N, G), jnp.float32),
                   jax.ShapeDtypeStruct((nm, N, G), jnp.float32)),
        in_specs=[_modal_spec(N, d_max), _modal_spec(d_max, D), _modal_spec(1, D),
                  _modal_spec(D, G), _modal_spec(1, G),
                  _modal_spec(D, G), _modal_spec(1, G)],
        out_specs=(_modal_spec(N, G), _modal_spec(N, G)),
        compiler_params=pltpu.CompilerParams(dimension_semantics=("parallel",)),
    )(x_stack, p['proj_w'], p['proj_b'], p['gru_wx_f'], p['gru_bx_f'],
      p['gru_wx_b'], p['gru_bx_b'])


def bigru_all(pre_f, pre_b, umask_tb1, wh_all):
    T, nm, B, G = pre_f.shape
    De = G // 3
    return pl.pallas_call(
        _bigru_kernel,
        out_shape=(jax.ShapeDtypeStruct((T, nm, B, De), jnp.float32),
                   jax.ShapeDtypeStruct((T, nm, B, De), jnp.float32)),
        in_specs=[VMEM_SPEC] * 4,
        out_specs=(VMEM_SPEC, VMEM_SPEC),
        scratch_shapes=[pltpu.VMEM((2 * nm, B, De), jnp.float32)],
    )(pre_f, pre_b, umask_tb1, wh_all)


def multiattn_layer(feats, lp, num_heads):
    nm, B, T, D = feats.shape
    Dff = lp['w1'].shape[-1]
    in_specs = [
        pl.BlockSpec((nm, B, T, D), lambda m: (0, 0, 0, 0)),   # all modality feats
        _modal_spec(D, D), _modal_spec(1, D),                  # wq, bq
        _modal_spec(D, D), _modal_spec(1, D),                  # wk, bk
        _modal_spec(D, D), _modal_spec(1, D),                  # wv, bv
        _modal_spec(D, D), _modal_spec(1, D),                  # wo, bo
        _modal_spec(1, D), _modal_spec(1, D),                  # g1, be1
        _modal_spec(D, Dff), _modal_spec(1, Dff),              # w1, b1
        _modal_spec(Dff, D), _modal_spec(1, D),                # w2, b2
        _modal_spec(1, D), _modal_spec(1, D),                  # g2, be2
    ]
    return pl.pallas_call(
        functools.partial(_fused_attn_kernel, num_heads=num_heads),
        grid=(nm,),
        out_shape=jax.ShapeDtypeStruct((nm, B, T, D), jnp.float32),
        in_specs=in_specs,
        out_specs=pl.BlockSpec((1, B, T, D), lambda m: (m, 0, 0, 0)),
        compiler_params=pltpu.CompilerParams(dimension_semantics=("parallel",)),
    )(feats, lp['wq'], lp['bq'], lp['wk'], lp['bk'], lp['wv'], lp['bv'],
      lp['wo'], lp['bo'], lp['g1'], lp['be1'], lp['w1'], lp['b1'],
      lp['w2'], lp['b2'], lp['g2'], lp['be2'])


def head(feats, p):
    nm, B, T, D = feats.shape
    C = p['mlp_w2'].shape[-1]
    return pl.pallas_call(
        _head_kernel,
        out_shape=(jax.ShapeDtypeStruct((B * T, D), jnp.float32),
                   jax.ShapeDtypeStruct((B * T, C), jnp.float32)),
        in_specs=[VMEM_SPEC] * 7,
        out_specs=(VMEM_SPEC, VMEM_SPEC),
    )(feats, p['fc_w'], p['fc_b'], p['mlp_w1'], p['mlp_b1'],
      p['mlp_w2'], p['mlp_b2'])


# ----------------------------------------------------------------------------
# MultiEMO forward
# ----------------------------------------------------------------------------
@functools.partial(jax.jit, static_argnames=("num_heads", "multi_attn_flag"))
def multiemo_core(params, texts, audios, visuals, utterance_masks, *,
                  num_heads, multi_attn_flag):
    T, B, _ = texts.shape
    d_max = params['proj_w'].shape[1]
    D = params['proj_w'].shape[-1]
    G = params['gru_wx_f'].shape[-1]

    def pad_last(x):
        return jnp.pad(x, ((0, 0), (0, 0), (0, d_max - x.shape[-1])))

    # stack the 3 modalities (zero-padded along the feature dim) -> one kernel
    x_stack = jnp.stack([pad_last(texts), pad_last(audios), pad_last(visuals)])
    x_stack = x_stack.reshape(3, T * B, d_max).astype(jnp.float32)

    pre_f, pre_b = project_and_gates(x_stack, params)              # [3, T*B, G]
    pre_f = pre_f.reshape(3, T, B, G).transpose(1, 0, 2, 3)         # [T, 3, B, G]
    pre_b = pre_b.reshape(3, T, B, G).transpose(1, 0, 2, 3)

    umask_tb1 = jnp.transpose(utterance_masks, (1, 0))[:, :, None].astype(jnp.float32)

    out_f, out_b = bigru_all(pre_f, pre_b, umask_tb1, params['gru_wh'])
    feats = jnp.concatenate([out_f, out_b], axis=-1)                # [T, 3, B, D]
    feats = jnp.transpose(feats, (1, 2, 0, 3))                      # [3, B, T, D]

    if multi_attn_flag:
        for lp in params['multiattn']:
            feats = multiattn_layer(feats, lp, num_heads)

    fused_t = feats[0].reshape(-1, D)
    fused_a = feats[1].reshape(-1, D)
    fused_v = feats[2].reshape(-1, D)
    fc_all, mlp_all = head(feats, params)
    return fused_t, fused_a, fused_v, fc_all, mlp_all


def multiemo_forward(params, texts, audios, visuals, speaker_masks,
                     utterance_masks, padded_labels, *, num_heads,
                     multi_attn_flag=True):
    # TODO(synk): speaker_masks (DialogueRNN party/global state) not modeled.
    del speaker_masks
    fused_t, fused_a, fused_v, fc_all, mlp_all = multiemo_core(
        params, texts, audios, visuals, utterance_masks,
        num_heads=num_heads, multi_attn_flag=multi_attn_flag)
    # data-dependent gather stays outside jit (row-wise equivalent to reference)
    valid = padded_labels != -1
    return (fused_t[valid], fused_a[valid], fused_v[valid],
            fc_all[valid], mlp_all[valid])


# ----------------------------------------------------------------------------
# Deterministic parameter init (synthetic weights)
# ----------------------------------------------------------------------------
def init_params(key, *, roberta_dim, D_m_audio, D_m_visual, model_dim,
                hidden_dim, n_classes, num_layers, w_dtype=jnp.bfloat16):
    De = model_dim // 2
    keys = iter(jax.random.split(key, 1024))

    def nrm(shape, fan_in, dtype=w_dtype):
        return (jax.random.normal(next(keys), shape, jnp.float32)
                / jnp.sqrt(float(fan_in))).astype(dtype)

    d_in = (roberta_dim, D_m_audio, D_m_visual)
    d_max = max(d_in)
    proj_w = jnp.stack([
        jnp.pad(nrm((din, model_dim), din, jnp.float32), ((0, d_max - din), (0, 0)))
        for din in d_in]).astype(w_dtype)

    params = {
        'proj_w': proj_w,                                        # [3, d_max, D]
        'proj_b': jnp.zeros((3, 1, model_dim), jnp.float32),
        # fused (r|z|n) input-gate weights per modality, per direction
        'gru_wx_f': jnp.stack([nrm((model_dim, 3 * De), model_dim) for _ in range(3)]),
        'gru_bx_f': jnp.zeros((3, 1, 3 * De), jnp.float32),
        'gru_wx_b': jnp.stack([nrm((model_dim, 3 * De), model_dim) for _ in range(3)]),
        'gru_bx_b': jnp.zeros((3, 1, 3 * De), jnp.float32),
        # recurrent weights: [fwd(text,audio,vis), bwd(text,audio,vis)] kept f32
        'gru_wh': jnp.stack([nrm((De, 3 * De), De, jnp.float32) for _ in range(6)]),
    }

    def attn_layer():
        D, Dff = model_dim, hidden_dim
        lp = {}
        for name in ('wq', 'wk', 'wv', 'wo'):
            lp[name] = jnp.stack([nrm((D, D), D) for _ in range(3)])
        for name in ('bq', 'bk', 'bv', 'bo', 'be1', 'be2'):
            lp[name] = jnp.zeros((3, 1, D), jnp.float32)
        lp['g1'] = jnp.ones((3, 1, D), jnp.float32)
        lp['g2'] = jnp.ones((3, 1, D), jnp.float32)
        lp['w1'] = jnp.stack([nrm((D, Dff), D) for _ in range(3)])
        lp['b1'] = jnp.zeros((3, 1, Dff), jnp.float32)
        lp['w2'] = jnp.stack([nrm((Dff, D), Dff) for _ in range(3)])
        lp['b2'] = jnp.zeros((3, 1, D), jnp.float32)
        return lp

    params['multiattn'] = [attn_layer() for _ in range(num_layers)]

    params['fc_w'] = nrm((model_dim * 3, model_dim), model_dim * 3)
    params['fc_b'] = jnp.zeros((1, model_dim), jnp.float32)
    # dataset == 'IEMOCAP': MLP(model_dim, model_dim, n_classes)
    params['mlp_w1'] = nrm((model_dim, model_dim), model_dim)
    params['mlp_b1'] = jnp.zeros((1, model_dim), jnp.float32)
    params['mlp_w2'] = nrm((model_dim, n_classes), model_dim)
    params['mlp_b2'] = jnp.zeros((1, n_classes), jnp.float32)
    return params


# ----------------------------------------------------------------------------
# Driver
# ----------------------------------------------------------------------------
if __name__ == "__main__":
    key = jax.random.PRNGKey(0)

    # small, shape-consistent configuration (dataset='IEMOCAP')
    T, B = 8, 2                      # seq_len, batch
    roberta_dim, D_m_audio, D_m_visual = 48, 40, 24
    model_dim, hidden_dim = 32, 64   # model_dim == 2 * D_e
    num_heads, num_layers = 4, 1
    n_classes, n_speakers = 6, 2

    pkey, dkey = jax.random.split(key)
    params = init_params(pkey, roberta_dim=roberta_dim, D_m_audio=D_m_audio,
                         D_m_visual=D_m_visual, model_dim=model_dim,
                         hidden_dim=hidden_dim, n_classes=n_classes,
                         num_layers=num_layers)

    k1, k2, k3, k4, k5 = jax.random.split(dkey, 5)
    texts = jax.random.normal(k1, (T, B, roberta_dim), jnp.float32)
    audios = jax.random.normal(k2, (T, B, D_m_audio), jnp.float32)
    visuals = jax.random.normal(k3, (T, B, D_m_visual), jnp.float32)
    speaker_masks = jax.nn.one_hot(
        jax.random.randint(k4, (T, B), 0, n_speakers), n_speakers, dtype=jnp.float32)
    utterance_masks = jnp.ones((B, T), jnp.float32).at[1, T - 1].set(0.0)
    labels = jax.random.randint(k5, (B, T), 0, n_classes)
    padded_labels = jnp.where(utterance_masks > 0, labels, -1).reshape(-1)

    outs = multiemo_forward(params, texts, audios, visuals, speaker_masks,
                            utterance_masks, padded_labels,
                            num_heads=num_heads, multi_attn_flag=True)
    jax.block_until_ready(outs)

    ft, fa, fv, fc_out, mlp_out = outs
    n_valid = int((padded_labels != -1).sum())
    assert ft.shape == fa.shape == fv.shape == (n_valid, model_dim)
    assert fc_out.shape == (n_valid, model_dim)
    assert mlp_out.shape == (n_valid, n_classes)
    print("KERNEL_OK")
</pallas_src>

<mosaic_0001>
module attributes {stable_mosaic.version = 11 : i64} {
  func.func @_proj_gates_kernel(%arg0: i32, %arg1: memref<1x16x48xf32, #tpu.memory_space<vmem>>, %arg2: memref<1x48x32xbf16, #tpu.memory_space<vmem>>, %arg3: memref<1x1x32xf32, #tpu.memory_space<vmem>>, %arg4: memref<1x32x48xbf16, #tpu.memory_space<vmem>>, %arg5: memref<1x1x48xf32, #tpu.memory_space<vmem>>, %arg6: memref<1x32x48xbf16, #tpu.memory_space<vmem>>, %arg7: memref<1x1x48xf32, #tpu.memory_space<vmem>>, %arg8: memref<1x16x48xf32, #tpu.memory_space<vmem>>, %arg9: memref<1x16x48xf32, #tpu.memory_space<vmem>>) attributes {dimension_semantics = [#tpu.dimension_semantics<parallel>], iteration_bounds = array<i64: 3>, scalar_prefetch = 0 : i64, scratch_operands = 0 : i64, tpu.core_type = #tpu.core_type<tc>, window_params = [{transform_indices = @transform_0, window_bounds = array<i64: 1, 16, 48>}, {transform_indices = @transform_1, window_bounds = array<i64: 1, 48, 32>}, {transform_indices = @transform_2, window_bounds = array<i64: 1, 1, 32>}, {transform_indices = @transform_3, window_bounds = array<i64: 1, 32, 48>}, {transform_indices = @transform_4, window_bounds = array<i64: 1, 1, 48>}, {transform_indices = @transform_5, window_bounds = array<i64: 1, 32, 48>}, {transform_indices = @transform_6, window_bounds = array<i64: 1, 1, 48>}, {transform_indices = @transform_7, window_bounds = array<i64: 1, 16, 48>}, {transform_indices = @transform_8, window_bounds = array<i64: 1, 16, 48>}]} {
    %c0 = arith.constant 0 : index
    %c0_0 = arith.constant 0 : index
    %c0_1 = arith.constant 0 : index
    %0 = vector.load %arg1[%c0, %c0_0, %c0_1] : memref<1x16x48xf32, #tpu.memory_space<vmem>>, vector<1x16x48xf32>
    %1 = vector.shape_cast %0 : vector<1x16x48xf32> to vector<16x48xf32>
    %c0_2 = arith.constant 0 : index
    %c0_3 = arith.constant 0 : index
    %c0_4 = arith.constant 0 : index
    %2 = vector.load %arg2[%c0_2, %c0_3, %c0_4] : memref<1x48x32xbf16, #tpu.memory_space<vmem>>, vector<1x48x32xbf16>
    %3 = vector.shape_cast %2 : vector<1x48x32xbf16> to vector<48x32xbf16>
    %4 = arith.truncf %1 : vector<16x48xf32> to vector<16x48xbf16>
    %cst = arith.constant dense<0.000000e+00> : vector<16x32xf32>
    %5 = tpu.matmul %4, %3, %cst {dimension_numbers = #tpu.dot_dimension_numbers<[1], [0], [0], [1], [0, 0, 1, 1], [], []>} : vector<16x48xbf16>, vector<48x32xbf16>, vector<16x32xf32> -> vector<16x32xf32>
    %c0_5 = arith.constant 0 : index
    %c0_6 = arith.constant 0 : index
    %c0_7 = arith.constant 0 : index
    %6 = vector.load %arg3[%c0_5, %c0_6, %c0_7] : memref<1x1x32xf32, #tpu.memory_space<vmem>>, vector<1x1x32xf32>
    %7 = vector.shape_cast %6 : vector<1x1x32xf32> to vector<1x32xf32>
    %8 = vector.broadcast %7 : vector<1x32xf32> to vector<16x32xf32>
    %9 = arith.addf %5, %8 : vector<16x32xf32>
    %c0_8 = arith.constant 0 : index
    %c0_9 = arith.constant 0 : index
    %c0_10 = arith.constant 0 : index
    %10 = vector.load %arg4[%c0_8, %c0_9, %c0_10] : memref<1x32x48xbf16, #tpu.memory_space<vmem>>, vector<1x32x48xbf16>
    %11 = vector.shape_cast %10 : vector<1x32x48xbf16> to vector<32x48xbf16>
    %c0_11 = arith.constant 0 : index
    %c0_12 = arith.constant 0 : index
    %c0_13 = arith.constant 0 : index
    %12 = vector.load %arg6[%c0_11, %c0_12, %c0_13] : memref<1x32x48xbf16, #tpu.memory_space<vmem>>, vector<1x32x48xbf16>
    %13 = vector.shape_cast %12 : vector<1x32x48xbf16> to vector<32x48xbf16>
    %14 = arith.truncf %9 : vector<16x32xf32> to vector<16x32xbf16>
    %cst_14 = arith.constant dense<0.000000e+00> : vector<16x48xf32>
    %15 = tpu.matmul %14, %11, %cst_14 {dimension_numbers = #tpu.dot_dimension_numbers<[1], [0], [0], [1], [0, 0, 1, 1], [], []>} : vector<16x32xbf16>, vector<32x48xbf16>, vector<16x48xf32> -> vector<16x48xf32>
    %c0_15 = arith.constant 0 : index
    %c0_16 = arith.constant 0 : index
    %c0_17 = arith.constant 0 : index
    %16 = vector.load %arg5[%c0_15, %c0_16, %c0_17] : memref<1x1x48xf32, #tpu.memory_space<vmem>>, vector<1x1x48xf32>
    %17 = vector.shape_cast %16 : vector<1x1x48xf32> to vector<1x48xf32>
    %18 = vector.broadcast %17 : vector<1x48xf32> to vector<16x48xf32>
    %19 = arith.addf %15, %18 : vector<16x48xf32>
    %c0_18 = arith.constant 0 : index
    %c0_19 = arith.constant 0 : index
    %c0_20 = arith.constant 0 : index
    %20 = vector.load %arg8[%c0_18, %c0_19, %c0_20] : memref<1x16x48xf32, #tpu.memory_space<vmem>>, vector<1x16x48xf32>
    %21 = vector.shape_cast %20 : vector<1x16x48xf32> to vector<16x48xf32>
    %22 = vector.shape_cast %19 : vector<16x48xf32> to vector<1x16x48xf32>
    tpu.vector_store %arg8[%c0_18, %c0_19, %c0_20], %22 {strides = array<i32>} : memref<1x16x48xf32, #tpu.memory_space<vmem>>, vector<1x16x48xf32>,
    %cst_21 = arith.constant dense<0.000000e+00> : vector<16x48xf32>
    %23 = tpu.matmul %14, %13, %cst_21 {dimension_numbers = #tpu.dot_dimension_numbers<[1], [0], [0], [1], [0, 0, 1, 1], [], []>} : vector<16x32xbf16>, vector<32x48xbf16>, vector<16x48xf32> -> vector<16x48xf32>
    %c0_22 = arith.constant 0 : index
    %c0_23 = arith.constant 0 : index
    %c0_24 = arith.constant 0 : index
    %24 = vector.load %arg7[%c0_22, %c0_23, %c0_24] : memref<1x1x48xf32, #tpu.memory_space<vmem>>, vector<1x1x48xf32>
    %25 = vector.shape_cast %24 : vector<1x1x48xf32> to vector<1x48xf32>
    %26 = vector.broadcast %25 : vector<1x48xf32> to vector<16x48xf32>
    %27 = arith.addf %23, %26 : vector<16x48xf32>
    %c0_25 = arith.constant 0 : index
    %c0_26 = arith.constant 0 : index
    %c0_27 = arith.constant 0 : index
    %28 = vector.load %arg9[%c0_25, %c0_26, %c0_27] : memref<1x16x48xf32, #tpu.memory_space<vmem>>, vector<1x16x48xf32>
    %29 = vector.shape_cast %28 : vector<1x16x48xf32> to vector<16x48xf32>
    %30 = vector.shape_cast %27 : vector<16x48xf32> to vector<1x16x48xf32>
    tpu.vector_store %arg9[%c0_25, %c0_26, %c0_27], %30 {strides = array<i32>} : memref<1x16x48xf32, #tpu.memory_space<vmem>>, vector<1x16x48xf32>,
    return
  }
  func.func @transform_0(%arg0: i32) -> (i32, i32, i32) {
    %c0_i32 = arith.constant 0 : i32
    %c0_i32_0 = arith.constant 0 : i32
    %c0_i32_1 = arith.constant 0 : i32
    return %arg0, %c0_i32, %c0_i32_0 : i32, i32, i32
  }
  func.func @transform_1(%arg0: i32) -> (i32, i32, i32) {
    %c0_i32 = arith.constant 0 : i32
    %c0_i32_0 = arith.constant 0 : i32
    %c0_i32_1 = arith.constant 0 : i32
    return %arg0, %c0_i32, %c0_i32_0 : i32, i32, i32
  }
  func.func @transform_2(%arg0: i32) -> (i32, i32, i32) {
    %c0_i32 = arith.constant 0 : i32
    %c0_i32_0 = arith.constant 0 : i32
    %c0_i32_1 = arith.constant 0 : i32
    return %arg0, %c0_i32, %c0_i32_0 : i32, i32, i32
  }
  func.func @transform_3(%arg0: i32) -> (i32, i32, i32) {
    %c0_i32 = arith.constant 0 : i32
    %c0_i32_0 = arith.constant 0 : i32
    %c0_i32_1 = arith.constant 0 : i32
    return %arg0, %c0_i32, %c0_i32_0 : i32, i32, i32
  }
  func.func @transform_4(%arg0: i32) -> (i32, i32, i32) {
    %c0_i32 = arith.constant 0 : i32
    %c0_i32_0 = arith.constant 0 : i32
    %c0_i32_1 = arith.constant 0 : i32
    return %arg0, %c0_i32, %c0_i32_0 : i32, i32, i32
  }
  func.func @transform_5(%arg0: i32) -> (i32, i32, i32) {
    %c0_i32 = arith.constant 0 : i32
    %c0_i32_0 = arith.constant 0 : i32
    %c0_i32_1 = arith.constant 0 : i32
    return %arg0, %c0_i32, %c0_i32_0 : i32, i32, i32
  }
  func.func @transform_6(%arg0: i32) -> (i32, i32, i32) {
    %c0_i32 = arith.constant 0 : i32
    %c0_i32_0 = arith.constant 0 : i32
    %c0_i32_1 = arith.constant 0 : i32
    return %arg0, %c0_i32, %c0_i32_0 : i32, i32, i32
  }
  func.func @transform_7(%arg0: i32) -> (i32, i32, i32) {
    %c0_i32 = arith.constant 0 : i32
    %c0_i32_0 = arith.constant 0 : i32
    %c0_i32_1 = arith.constant 0 : i32
    return %arg0, %c0_i32, %c0_i32_0 : i32, i32, i32
  }
  func.func @transform_8(%arg0: i32) -> (i32, i32, i32) {
    %c0_i32 = arith.constant 0 : i32
    %c0_i32_0 = arith.constant 0 : i32
    %c0_i32_1 = arith.constant 0 : i32
    return %arg0, %c0_i32, %c0_i32_0 : i32, i32, i32
  }
}

module attributes {stable_mosaic.version = 11 : i64} {
  func.func @_bigru_kernel(%arg0: memref<8x3x2x48xf32, #tpu.memory_space<vmem>>, %arg1: memref<8x3x2x48xf32, #tpu.memory_space<vmem>>, %arg2: memref<8x2x1xf32, #tpu.memory_space<vmem>>, %arg3: memref<6x16x48xf32, #tpu.memory_space<vmem>>, %arg4: memref<8x3x2x16xf32, #tpu.memory_space<vmem>>, %arg5: memref<8x3x2x16xf32, #tpu.memory_space<vmem>>, %arg6: memref<6x2x16xf32, #tpu.memory_space<vmem>>) attributes {dimension_semantics = [], scalar_prefetch = 0 : i64, scratch_operands = 1 : i64, tpu.core_type = #tpu.core_type<tc>} {
    %c0 = arith.constant 0 : index
    %c0_0 = arith.constant 0 : index
    %c0_1 = arith.constant 0 : index
    %0 = vector.load %arg3[%c0, %c0_0, %c0_1] : memref<6x16x48xf32, #tpu.memory_space<vmem>>, vector<6x16x48xf32>
    %cst = arith.constant 0.000000e+00 : f32
    %1 = vector.broadcast %cst : f32 to vector<6x2x16xf32>
    %c0_2 = arith.constant 0 : index
    %c0_3 = arith.constant 0 : index
    %c0_4 = arith.constant 0 : index
    %2 = vector.load %arg6[%c0_2, %c0_3, %c0_4] : memref<6x2x16xf32, #tpu.memory_space<vmem>>, vector<6x2x16xf32>
    tpu.vector_store %arg6[%c0_2, %c0_3, %c0_4], %1 {strides = array<i32>} : memref<6x2x16xf32, #tpu.memory_space<vmem>>, vector<6x2x16xf32>,
    %c0_i32 = arith.constant 0 : i32
    %c8_i32 = arith.constant 8 : i32
    %3 = arith.addi %c0_i32, %c8_i32 : i32
    %c1_i32 = arith.constant 1 : i32
    scf.for %arg7 = %c0_i32 to %3 step %c1_i32  : i32 {
      %c7_i32 = arith.constant 7 : i32
      %4 = arith.subi %c7_i32, %arg7 : i32
      %c0_6 = arith.constant 0 : index
      %c0_7 = arith.constant 0 : index
      %c0_8 = arith.constant 0 : index
      %5 = vector.load %arg6[%c0_6, %c0_7, %c0_8] : memref<6x2x16xf32, #tpu.memory_space<vmem>>, vector<6x2x16xf32>
      "tpu.trace_start"() <{level = 10 : i32, message = "cbk,ckg->cbg"}> : () -> ()
      %cst_9 = arith.constant dense<0.000000e+00> : vector<6x2x48xf32>
      %6 = tpu.matmul %5, %0, %cst_9 {dimension_numbers = #tpu.dot_dimension_numbers<[2], [1], [1], [2], [0, 0, 0, 1, 1, 2], [0], [0]>} : vector<6x2x16xf32>, vector<6x16x48xf32>, vector<6x2x48xf32> -> vector<6x2x48xf32>
      "tpu.trace_stop"() : () -> ()
      %7 = arith.index_cast %arg7 : i32 to index
      %c0_10 = arith.constant 0 : index
      %c0_11 = arith.constant 0 : index
      %c0_12 = arith.constant 0 : index
      %8 = vector.load %arg0[%7, %c0_10, %c0_11, %c0_12] : memref<8x3x2x48xf32, #tpu.memory_space<vmem>>, vector<1x3x2x48xf32>
      %9 = vector.shape_cast %8 : vector<1x3x2x48xf32> to vector<3x2x48xf32>
      %10 = arith.index_cast %4 : i32 to index
      %c0_13 = arith.constant 0 : index
      %c0_14 = arith.constant 0 : index
      %c0_15 = arith.constant 0 : index
      %11 = vector.load %arg1[%10, %c0_13, %c0_14, %c0_15] : memref<8x3x2x48xf32, #tpu.memory_space<vmem>>, vector<1x3x2x48xf32>
      %12 = vector.shape_cast %11 : vector<1x3x2x48xf32> to vector<3x2x48xf32>
      %13 = tpu.concatenate %9, %12 in 0 : vector<3x2x48xf32>, vector<3x2x48xf32> -> vector<6x2x48xf32>
      %14 = vector.extract_strided_slice %13 {offsets = [0, 0, 0], sizes = [6, 2, 16], strides = [1, 1, 1]} : vector<6x2x48xf32> to vector<6x2x16xf32>
      %15 = vector.extract_strided_slice %6 {offsets = [0, 0, 0], sizes = [6, 2, 16], strides = [1, 1, 1]} : vector<6x2x48xf32> to vector<6x2x16xf32>
      %16 = arith.addf %14, %15 : vector<6x2x16xf32>
      %17 = arith.negf %16 : vector<6x2x16xf32>
      %18 = math.exp %17 : vector<6x2x16xf32>
      %cst_16 = arith.constant 1.000000e+00 : f32
      %19 = vector.broadcast %cst_16 : f32 to vector<6x2x16xf32>
      %20 = arith.addf %19, %18 : vector<6x2x16xf32>
      %21 = arith.divf %19, %20 : vector<6x2x16xf32>
      %22 = vector.extract_strided_slice %13 {offsets = [0, 0, 16], sizes = [6, 2, 16], strides = [1, 1, 1]} : vector<6x2x48xf32> to vector<6x2x16xf32>
      %23 = vector.extract_strided_slice %6 {offsets = [0, 0, 16], sizes = [6, 2, 16], strides = [1, 1, 1]} : vector<6x2x48xf32> to vector<6x2x16xf32>
      %24 = arith.addf %22, %23 : vector<6x2x16xf32>
      %25 = arith.negf %24 : vector<6x2x16xf32>
      %26 = math.exp %25 : vector<6x2x16xf32>
      %cst_17 = arith.constant 1.000000e+00 : f32
      %27 = vector.broadcast %cst_17 : f32 to vector<6x2x16xf32>
      %28 = arith.addf %27, %26 : vector<6x2x16xf32>
      %29 = arith.divf %27, %28 : vector<6x2x16xf32>
      %30 = vector.extract_strided_slice %13 {offsets = [0, 0, 32], sizes = [6, 2, 16], strides = [1, 1, 1]} : vector<6x2x48xf32> to vector<6x2x16xf32>
      %31 = vector.extract_strided_slice %6 {offsets = [0, 0, 32], sizes = [6, 2, 16], strides = [1, 1, 1]} : vector<6x2x48xf32> to vector<6x2x16xf32>
      %32 = arith.mulf %21, %31 : vector<6x2x16xf32>
      %33 = arith.addf %30, %32 : vector<6x2x16xf32>
      %34 = math.tanh %33 : vector<6x2x16xf32>
      %cst_18 = arith.constant 1.000000e+00 : f32
      %35 = vector.broadcast %cst_18 : f32 to vector<6x2x16xf32>
      %36 = arith.subf %35, %29 : vector<6x2x16xf32>
      %37 = arith.mulf %36, %34 : vector<6x2x16xf32>
      %38 = arith.mulf %29, %5 : vector<6x2x16xf32>
      %39 = arith.addf %37, %38 : vector<6x2x16xf32>
      %40 = arith.index_cast %arg7 : i32 to index
      %c0_19 = arith.constant 0 : index
      %c0_20 = arith.constant 0 : index
      %41 = vector.load %arg2[%40, %c0_19, %c0_20] : memref<8x2x1xf32, #tpu.memory_space<vmem>>, vector<1x2x1xf32>
      %42 = vector.shape_cast %41 : vector<1x2x1xf32> to vector<2x1xf32>
      %43 = arith.index_cast %4 : i32 to index
      %c0_21 = arith.constant 0 : index
      %c0_22 = arith.constant 0 : index
      %44 = vector.load %arg2[%43, %c0_21, %c0_22] : memref<8x2x1xf32, #tpu.memory_space<vmem>>, vector<1x2x1xf32>
      %45 = vector.shape_cast %44 : vector<1x2x1xf32> to vector<2x1xf32>
      %46 = vector.extract_strided_slice %39 {offsets = [0, 0, 0], sizes = [3, 2, 16], strides = [1, 1, 1]} : vector<6x2x16xf32> to vector<3x2x16xf32>
      %47 = vector.shape_cast %42 : vector<2x1xf32> to vector<1x2x1xf32>
      %48 = vector.broadcast %47 : vector<1x2x1xf32> to vector<3x2x16xf32>
      %49 = arith.mulf %48, %46 : vector<3x2x16xf32>
      %cst_23 = arith.constant 1.000000e+00 : f32
      %50 = vector.broadcast %cst_23 : f32 to vector<2x1xf32>
      %51 = arith.subf %50, %42 : vector<2x1xf32>
      %52 = vector.extract_strided_slice %5 {offsets = [0, 0, 0], sizes = [3, 2, 16], strides = [1, 1, 1]} : vector<6x2x16xf32> to vector<3x2x16xf32>
      %53 = vector.shape_cast %51 : vector<2x1xf32> to vector<1x2x1xf32>
      %54 = vector.broadcast %53 : vector<1x2x1xf32> to vector<3x2x16xf32>
      %55 = arith.mulf %54, %52 : vector<3x2x16xf32>
      %56 = arith.addf %49, %55 : vector<3x2x16xf32>
      %57 = vector.extract_strided_slice %39 {offsets = [3, 0, 0], sizes = [3, 2, 16], strides = [1, 1, 1]} : vector<6x2x16xf32> to vector<3x2x16xf32>
      %58 = vector.shape_cast %45 : vector<2x1xf32> to vector<1x2x1xf32>
      %59 = vector.broadcast %58 : vector<1x2x1xf32> to vector<3x2x16xf32>
      %60 = arith.mulf %59, %57 : vector<3x2x16xf32>
      %cst_24 = arith.constant 1.000000e+00 : f32
      %61 = vector.broadcast %cst_24 : f32 to vector<2x1xf32>
      %62 = arith.subf %61, %45 : vector<2x1xf32>
      %63 = vector.extract_strided_slice %5 {offsets = [3, 0, 0], sizes = [3, 2, 16], strides = [1, 1, 1]} : vector<6x2x16xf32> to vector<3x2x16xf32>
      %64 = vector.shape_cast %62 : vector<2x1xf32> to vector<1x2x1xf32>
      %65 = vector.broadcast %64 : vector<1x2x1xf32> to vector<3x2x16xf32>
      %66 = arith.mulf %65, %63 : vector<3x2x16xf32>
      %67 = arith.addf %60, %66 : vector<3x2x16xf32>
      %68 = tpu.concatenate %56, %67 in 0 : vector<3x2x16xf32>, vector<3x2x16xf32> -> vector<6x2x16xf32>
      %c0_25 = arith.constant 0 : index
      %c0_26 = arith.constant 0 : index
      %c0_27 = arith.constant 0 : index
      %69 = vector.load %arg6[%c0_25, %c0_26, %c0_27] : memref<6x2x16xf32, #tpu.memory_space<vmem>>, vector<6x2x16xf32>
      tpu.vector_store %arg6[%c0_25, %c0_26, %c0_27], %68 {strides = array<i32>} : memref<6x2x16xf32, #tpu.memory_space<vmem>>, vector<6x2x16xf32>,
      %70 = arith.index_cast %arg7 : i32 to index
      %c0_28 = arith.constant 0 : index
      %c0_29 = arith.constant 0 : index
      %c0_30 = arith.constant 0 : index
      %71 = vector.load %arg4[%70, %c0_28, %c0_29, %c0_30] : memref<8x3x2x16xf32, #tpu.memory_space<vmem>>, vector<1x3x2x16xf32>
      %72 = vector.shape_cast %71 : vector<1x3x2x16xf32> to vector<3x2x16xf32>
      %73 = vector.shape_cast %56 : vector<3x2x16xf32> to vector<1x3x2x16xf32>
      tpu.vector_store %arg4[%70, %c0_28, %c0_29, %c0_30], %73 {strides = array<i32>} : memref<8x3x2x16xf32, #tpu.memory_space<vmem>>, vector<1x3x2x16xf32>,
      %74 = arith.index_cast %4 : i32 to index
      %c0_31 = arith.constant 0 : index
      %c0_32 = arith.constant 0 : index
      %c0_33 = arith.constant 0 : index
      %75 = vector.load %arg5[%74, %c0_31, %c0_32, %c0_33] : memref<8x3x2x16xf32, #tpu.memory_space<vmem>>, vector<1x3x2x16xf32>
      %76 = vector.shape_cast %75 : vector<1x3x2x16xf32> to vector<3x2x16xf32>
      %77 = vector.shape_cast %67 : vector<3x2x16xf32> to vector<1x3x2x16xf32>
      tpu.vector_store %arg5[%74, %c0_31, %c0_32, %c0_33], %77 {strides = array<i32>} : memref<8x3x2x16xf32, #tpu.memory_space<vmem>>, vector<1x3x2x16xf32>,
    }
    %c8_i32_5 = arith.constant 8 : i32
    return
  }
}

module attributes {stable_mosaic.version = 11 : i64} {
  func.func @_fused_attn_kernel(%arg0: i32, %arg1: memref<3x2x8x32xf32, #tpu.memory_space<vmem>>, %arg2: memref<1x32x32xbf16, #tpu.memory_space<vmem>>, %arg3: memref<1x1x32xf32, #tpu.memory_space<vmem>>, %arg4: memref<1x32x32xbf16, #tpu.memory_space<vmem>>, %arg5: memref<1x1x32xf32, #tpu.memory_space<vmem>>, %arg6: memref<1x32x32xbf16, #tpu.memory_space<vmem>>, %arg7: memref<1x1x32xf32, #tpu.memory_space<vmem>>, %arg8: memref<1x32x32xbf16, #tpu.memory_space<vmem>>, %arg9: memref<1x1x32xf32, #tpu.memory_space<vmem>>, %arg10: memref<1x1x32xf32, #tpu.memory_space<vmem>>, %arg11: memref<1x1x32xf32, #tpu.memory_space<vmem>>, %arg12: memref<1x32x64xbf16, #tpu.memory_space<vmem>>, %arg13: memref<1x1x64xf32, #tpu.memory_space<vmem>>, %arg14: memref<1x64x32xbf16, #tpu.memory_space<vmem>>, %arg15: memref<1x1x32xf32, #tpu.memory_space<vmem>>, %arg16: memref<1x1x32xf32, #tpu.memory_space<vmem>>, %arg17: memref<1x1x32xf32, #tpu.memory_space<vmem>>, %arg18: memref<1x2x8x32xf32, #tpu.memory_space<vmem>>) attributes {dimension_semantics = [#tpu.dimension_semantics<parallel>], iteration_bounds = array<i64: 3>, scalar_prefetch = 0 : i64, scratch_operands = 0 : i64, tpu.core_type = #tpu.core_type<tc>, window_params = [{pipeline_mode = #tpu.pipeline_mode<synchronous>, transform_indices = @transform_0, window_bounds = array<i64: 3, 2, 8, 32>}, {transform_indices = @transform_1, window_bounds = array<i64: 1, 32, 32>}, {transform_indices = @transform_2, window_bounds = array<i64: 1, 1, 32>}, {transform_indices = @transform_3, window_bounds = array<i64: 1, 32, 32>}, {transform_indices = @transform_4, window_bounds = array<i64: 1, 1, 32>}, {transform_indices = @transform_5, window_bounds = array<i64: 1, 32, 32>}, {transform_indices = @transform_6, window_bounds = array<i64: 1, 1, 32>}, {transform_indices = @transform_7, window_bounds = array<i64: 1, 32, 32>}, {transform_indices = @transform_8, window_bounds = array<i64: 1, 1, 32>}, {transform_indices = @transform_9, window_bounds = array<i64: 1, 1, 32>}, {transform_indices = @transform_10, window_bounds = array<i64: 1, 1, 32>}, {transform_indices = @transform_11, window_bounds = array<i64: 1, 32, 64>}, {transform_indices = @transform_12, window_bounds = array<i64: 1, 1, 64>}, {transform_indices = @transform_13, window_bounds = array<i64: 1, 64, 32>}, {transform_indices = @transform_14, window_bounds = array<i64: 1, 1, 32>}, {transform_indices = @transform_15, window_bounds = array<i64: 1, 1, 32>}, {transform_indices = @transform_16, window_bounds = array<i64: 1, 1, 32>}, {transform_indices = @transform_17, window_bounds = array<i64: 1, 2, 8, 32>}]} {
    %0 = arith.index_cast %arg0 : i32 to index
    %c0 = arith.constant 0 : index
    %c0_0 = arith.constant 0 : index
    %c0_1 = arith.constant 0 : index
    %1 = vector.load %arg1[%0, %c0, %c0_0, %c0_1] : memref<3x2x8x32xf32, #tpu.memory_space<vmem>>, vector<1x2x8x32xf32>
    %2 = vector.shape_cast %1 : vector<1x2x8x32xf32> to vector<2x8x32xf32>
    %c1_i32 = arith.constant 1 : i32
    %3 = arith.addi %arg0, %c1_i32 : i32
    %c3_i32 = arith.constant 3 : i32
    %c0_i32 = arith.constant 0 : i32
    %4 = arith.cmpi eq, %c3_i32, %c0_i32 : i32
    %c1_i32_2 = arith.constant 1 : i32
    %5 = arith.select %4, %c1_i32_2, %c3_i32 : i32
    %6 = arith.remsi %3, %5 : i32
    %c0_i32_3 = arith.constant 0 : i32
    %7 = arith.cmpi ne, %6, %c0_i32_3 : i32
    %c0_i32_4 = arith.constant 0 : i32
    %8 = arith.cmpi slt, %6, %c0_i32_4 : i32
    %c0_i32_5 = arith.constant 0 : i32
    %9 = arith.cmpi slt, %5, %c0_i32_5 : i32
    %10 = arith.xori %8, %9 : i1
    %11 = arith.andi %10, %7 : i1
    %12 = arith.addi %6, %5 : i32
    %13 = arith.select %11, %12, %6 : i32
    %14 = arith.index_cast %13 : i32 to index
    %c0_6 = arith.constant 0 : index
    %c0_7 = arith.constant 0 : index
    %c0_8 = arith.constant 0 : index
    %15 = vector.load %arg1[%14, %c0_6, %c0_7, %c0_8] : memref<3x2x8x32xf32, #tpu.memory_space<vmem>>, vector<1x2x8x32xf32>
    %16 = vector.shape_cast %15 : vector<1x2x8x32xf32> to vector<2x8x32xf32>
    %c2_i32 = arith.constant 2 : i32
    %17 = arith.addi %arg0, %c2_i32 : i32
    %c3_i32_9 = arith.constant 3 : i32
    %c0_i32_10 = arith.constant 0 : i32
    %18 = arith.cmpi eq, %c3_i32_9, %c0_i32_10 : i32
    %c1_i32_11 = arith.constant 1 : i32
    %19 = arith.select %18, %c1_i32_11, %c3_i32_9 : i32
    %20 = arith.remsi %17, %19 : i32
    %c0_i32_12 = arith.constant 0 : i32
    %21 = arith.cmpi ne, %20, %c0_i32_12 : i32
    %c0_i32_13 = arith.constant 0 : i32
    %22 = arith.cmpi slt, %20, %c0_i32_13 : i32
    %c0_i32_14 = arith.constant 0 : i32
    %23 = arith.cmpi slt, %19, %c0_i32_14 : i32
    %24 = arith.xori %22, %23 : i1
    %25 = arith.andi %24, %21 : i1
    %26 = arith.addi %20, %19 : i32
    %27 = arith.select %25, %26, %20 : i32
    %28 = arith.index_cast %27 : i32 to index
    %c0_15 = arith.constant 0 : index
    %c0_16 = arith.constant 0 : index
    %c0_17 = arith.constant 0 : index
    %29 = vector.load %arg1[%28, %c0_15, %c0_16, %c0_17] : memref<3x2x8x32xf32, #tpu.memory_space<vmem>>, vector<1x2x8x32xf32>
    %30 = vector.shape_cast %29 : vector<1x2x8x32xf32> to vector<2x8x32xf32>
    %31 = tpu.concatenate %16, %30 in 1 : vector<2x8x32xf32>, vector<2x8x32xf32> -> vector<2x16x32xf32>
    %32 = vector.shape_cast %2 : vector<2x8x32xf32> to vector<16x32xf32>
    %c0_18 = arith.constant 0 : index
    %c0_19 = arith.constant 0 : index
    %c0_20 = arith.constant 0 : index
    %33 = vector.load %arg2[%c0_18, %c0_19, %c0_20] : memref<1x32x32xbf16, #tpu.memory_space<vmem>>, vector<1x32x32xbf16>
    %34 = vector.shape_cast %33 : vector<1x32x32xbf16> to vector<32x32xbf16>
    %35 = arith.truncf %32 : vector<16x32xf32> to vector<16x32xbf16>
    %cst = arith.constant dense<0.000000e+00> : vector<16x32xf32>
    %36 = tpu.matmul %35, %34, %cst {dimension_numbers = #tpu.dot_dimension_numbers<[1], [0], [0], [1], [0, 0, 1, 1], [], []>} : vector<16x32xbf16>, vector<32x32xbf16>, vector<16x32xf32> -> vector<16x32xf32>
    %c0_21 = arith.constant 0 : index
    %c0_22 = arith.constant 0 : index
    %c0_23 = arith.constant 0 : index
    %37 = vector.load %arg3[%c0_21, %c0_22, %c0_23] : memref<1x1x32xf32, #tpu.memory_space<vmem>>, vector<1x1x32xf32>
    %38 = vector.shape_cast %37 : vector<1x1x32xf32> to vector<1x32xf32>
    %39 = vector.broadcast %38 : vector<1x32xf32> to vector<16x32xf32>
    %40 = arith.addf %36, %39 : vector<16x32xf32>
    %41 = vector.shape_cast %40 : vector<16x32xf32> to vector<2x8x32xf32>
    %42 = vector.shape_cast %31 : vector<2x16x32xf32> to vector<32x32xf32>
    %c0_24 = arith.constant 0 : index
    %c0_25 = arith.constant 0 : index
    %c0_26 = arith.constant 0 : index
    %43 = vector.load %arg4[%c0_24, %c0_25, %c0_26] : memref<1x32x32xbf16, #tpu.memory_space<vmem>>, vector<1x32x32xbf16>
    %44 = vector.shape_cast %43 : vector<1x32x32xbf16> to vector<32x32xbf16>
    %45 = arith.truncf %42 : vector<32x32xf32> to vector<32x32xbf16>
    %cst_27 = arith.constant dense<0.000000e+00> : vector<32x32xf32>
    %46 = tpu.matmul %45, %44, %cst_27 {dimension_numbers = #tpu.dot_dimension_numbers<[1], [0], [0], [1], [0, 0, 1, 1], [], []>} : vector<32x32xbf16>, vector<32x32xbf16>, vector<32x32xf32> -> vector<32x32xf32>
    %c0_28 = arith.constant 0 : index
    %c0_29 = arith.constant 0 : index
    %c0_30 = arith.constant 0 : index
    %47 = vector.load %arg5[%c0_28, %c0_29, %c0_30] : memref<1x1x32xf32, #tpu.memory_space<vmem>>, vector<1x1x32xf32>
    %48 = vector.shape_cast %47 : vector<1x1x32xf32> to vector<1x32xf32>
    %49 = vector.broadcast %48 : vector<1x32xf32> to vector<32x32xf32>
    %50 = arith.addf %46, %49 : vector<32x32xf32>
    %51 = vector.shape_cast %50 : vector<32x32xf32> to vector<2x16x32xf32>
    %c0_31 = arith.constant 0 : index
    %c0_32 = arith.constant 0 : index
    %c0_33 = arith.constant 0 : index
    %52 = vector.load %arg6[%c0_31, %c0_32, %c0_33] : memref<1x32x32xbf16, #tpu.memory_space<vmem>>, vector<1x32x32xbf16>
    %53 = vector.shape_cast %52 : vector<1x32x32xbf16> to vector<32x32xbf16>
    %54 = arith.truncf %42 : vector<32x32xf32> to vector<32x32xbf16>
    %cst_34 = arith.constant dense<0.000000e+00> : vector<32x32xf32>
    %55 = tpu.matmul %54, %53, %cst_34 {dimension_numbers = #tpu.dot_dimension_numbers<[1], [0], [0], [1], [0, 0, 1, 1], [], []>} : vector<32x32xbf16>, vector<32x32xbf16>, vector<32x32xf32> -> vector<32x32xf32>
    %c0_35 = arith.constant 0 : index
    %c0_36 = arith.constant 0 : index
    %c0_37 = arith.constant 0 : index
    %56 = vector.load %arg7[%c0_35, %c0_36, %c0_37] : memref<1x1x32xf32, #tpu.memory_space<vmem>>, vector<1x1x32xf32>
    %57 = vector.shape_cast %56 : vector<1x1x32xf32> to vector<1x32xf32>
    %58 = vector.broadcast %57 : vector<1x32xf32> to vector<32x32xf32>
    %59 = arith.addf %55, %58 : vector<32x32xf32>
    %60 = vector.shape_cast %59 : vector<32x32xf32> to vector<2x16x32xf32>
    %61 = vector.extract_strided_slice %41 {offsets = [0, 0, 0], sizes = [2, 8, 8], strides = [1, 1, 1]} : vector<2x8x32xf32> to vector<2x8x8xf32>
    %62 = vector.extract_strided_slice %51 {offsets = [0, 0, 0], sizes = [2, 16, 8], strides = [1, 1, 1]} : vector<2x16x32xf32> to vector<2x16x8xf32>
    "tpu.trace_start"() <{level = 10 : i32, message = "bqd,bkd->bqk"}> : () -> ()
    %cst_38 = arith.constant dense<0.000000e+00> : vector<2x8x16xf32>
    %63 = tpu.matmul %61, %62, %cst_38 {dimension_numbers = #tpu.dot_dimension_numbers<[2], [2], [1], [1], [0, 0, 0, 1, 1, 1], [0], [0]>} : vector<2x8x8xf32>, vector<2x16x8xf32>, vector<2x8x16xf32> -> vector<2x8x16xf32>
    "tpu.trace_stop"() : () -> ()
    %cst_39 = arith.constant 0.353553385 : f32
    %64 = vector.broadcast %cst_39 : f32 to vector<2x8x16xf32>
    %65 = arith.mulf %63, %64 : vector<2x8x16xf32>
    %cst_40 = arith.constant dense<0xFF800000> : vector<2x8xf32>
    %66 = vector.multi_reduction <maximumf>, %65, %cst_40 [2] : vector<2x8x16xf32> to vector<2x8xf32>
    %67 = vector.shape_cast %66 : vector<2x8xf32> to vector<2x8x1xf32>
    %68 = vector.broadcast %67 : vector<2x8x1xf32> to vector<2x8x16xf32>
    %69 = arith.subf %65, %68 : vector<2x8x16xf32>
    %70 = math.exp %69 : vector<2x8x16xf32>
    %cst_41 = arith.constant dense<0.000000e+00> : vector<2x8xf32>
    %71 = vector.multi_reduction <add>, %70, %cst_41 [2] : vector<2x8x16xf32> to vector<2x8xf32>
    %72 = vector.shape_cast %71 : vector<2x8xf32> to vector<2x8x1xf32>
    %73 = tpu.reciprocal %72 {approx = true} : vector<2x8x1xf32> -> vector<2x8x1xf32>
    %74 = vector.broadcast %73 : vector<2x8x1xf32> to vector<2x8x16xf32>
    %75 = arith.mulf %70, %74 : vector<2x8x16xf32>
    %76 = vector.extract_strided_slice %60 {offsets = [0, 0, 0], sizes = [2, 16, 8], strides = [1, 1, 1]} : vector<2x16x32xf32> to vector<2x16x8xf32>
    "tpu.trace_start"() <{level = 10 : i32, message = "bqk,bkd->bqd"}> : () -> ()
    %cst_42 = arith.constant dense<0.000000e+00> : vector<2x8x8xf32>
    %77 = tpu.matmul %75, %76, %cst_42 {dimension_numbers = #tpu.dot_dimension_numbers<[2], [1], [1], [2], [0, 0, 0, 1, 1, 2], [0], [0]>} : vector<2x8x16xf32>, vector<2x16x8xf32>, vector<2x8x8xf32> -> vector<2x8x8xf32>
    "tpu.trace_stop"() : () -> ()
    %78 = vector.extract_strided_slice %41 {offsets = [0, 0, 8], sizes = [2, 8, 8], strides = [1, 1, 1]} : vector<2x8x32xf32> to vector<2x8x8xf32>
    %79 = vector.extract_strided_slice %51 {offsets = [0, 0, 8], sizes = [2, 16, 8], strides = [1, 1, 1]} : vector<2x16x32xf32> to vector<2x16x8xf32>
    "tpu.trace_start"() <{level = 10 : i32, message = "bqd,bkd->bqk"}> : () -> ()
    %cst_43 = arith.constant dense<0.000000e+00> : vector<2x8x16xf32>
    %80 = tpu.matmul %78, %79, %cst_43 {dimension_numbers = #tpu.dot_dimension_numbers<[2], [2], [1], [1], [0, 0, 0, 1, 1, 1], [0], [0]>} : vector<2x8x8xf32>, vector<2x16x8xf32>, vector<2x8x16xf32> -> vector<2x8x16xf32>
    "tpu.trace_stop"() : () -> ()
    %cst_44 = arith.constant 0.353553385 : f32
    %81 = vector.broadcast %cst_44 : f32 to vector<2x8x16xf32>
    %82 = arith.mulf %80, %81 : vector<2x8x16xf32>
    %cst_45 = arith.constant dense<0xFF800000> : vector<2x8xf32>
    %83 = vector.multi_reduction <maximumf>, %82, %cst_45 [2] : vector<2x8x16xf32> to vector<2x8xf32>
    %84 = vector.shape_cast %83 : vector<2x8xf32> to vector<2x8x1xf32>
    %85 = vector.broadcast %84 : vector<2x8x1xf32> to vector<2x8x16xf32>
    %86 = arith.subf %82, %85 : vector<2x8x16xf32>
    %87 = math.exp %86 : vector<2x8x16xf32>
    %cst_46 = arith.constant dense<0.000000e+00> : vector<2x8xf32>
    %88 = vector.multi_reduction <add>, %87, %cst_46 [2] : vector<2x8x16xf32> to vector<2x8xf32>
    %89 = vector.shape_cast %88 : vector<2x8xf32> to vector<2x8x1xf32>
    %90 = tpu.reciprocal %89 {approx = true} : vector<2x8x1xf32> -> vector<2x8x1xf32>
    %91 = vector.broadcast %90 : vector<2x8x1xf32> to vector<2x8x16xf32>
    %92 = arith.mulf %87, %91 : vector<2x8x16xf32>
    %93 = vector.extract_strided_slice %60 {offsets = [0, 0, 8], sizes = [2, 16, 8], strides = [1, 1, 1]} : vector<2x16x32xf32> to vector<2x16x8xf32>
    "tpu.trace_start"() <{level = 10 : i32, message = "bqk,bkd->bqd"}> : () -> ()
    %cst_47 = arith.constant dense<0.000000e+00> : vector<2x8x8xf32>
    %94 = tpu.matmul %92, %93, %cst_47 {dimension_numbers = #tpu.dot_dimension_numbers<[2], [1], [1], [2], [0, 0, 0, 1, 1, 2], [0], [0]>} : vector<2x8x16xf32>, vector<2x16x8xf32>, vector<2x8x8xf32> -> vector<2x8x8xf32>
    "tpu.trace_stop"() : () -> ()
    %95 = vector.extract_strided_slice %41 {offsets = [0, 0, 16], sizes = [2, 8, 8], strides = [1, 1, 1]} : vector<2x8x32xf32> to vector<2x8x8xf32>
    %96 = vector.extract_strided_slice %51 {offsets = [0, 0, 16], sizes = [2, 16, 8], strides = [1, 1, 1]} : vector<2x16x32xf32> to vector<2x16x8xf32>
    "tpu.trace_start"() <{level = 10 : i32, message = "bqd,bkd->bqk"}> : () -> ()
    %cst_48 = arith.constant dense<0.000000e+00> : vector<2x8x16xf32>
    %97 = tpu.matmul %95, %96, %cst_48 {dimension_numbers = #tpu.dot_dimension_numbers<[2], [2], [1], [1], [0, 0, 0, 1, 1, 1], [0], [0]>} : vector<2x8x8xf32>, vector<2x16x8xf32>, vector<2x8x16xf32> -> vector<2x8x16xf32>
    "tpu.trace_stop"() : () -> ()
    %cst_49 = arith.constant 0.353553385 : f32
    %98 = vector.broadcast %cst_49 : f32 to vector<2x8x16xf32>
    %99 = arith.mulf %97, %98 : vector<2x8x16xf32>
    %cst_50 = arith.constant dense<0xFF800000> : vector<2x8xf32>
    %100 = vector.multi_reduction <maximumf>, %99, %cst_50 [2] : vector<2x8x16xf32> to vector<2x8xf32>
    %101 = vector.shape_cast %100 : vector<2x8xf32> to vector<2x8x1xf32>
    %102 = vector.broadcast %101 : vector<2x8x1xf32> to vector<2x8x16xf32>
    %103 = arith.subf %99, %102 : vector<2x8x16xf32>
    %104 = math.exp %103 : vector<2x8x16xf32>
    %cst_51 = arith.constant dense<0.000000e+00> : vector<2x8xf32>
    %105 = vector.multi_reduction <add>, %104, %cst_51 [2] : vector<2x8x16xf32> to vector<2x8xf32>
    %106 = vector.shape_cast %105 : vector<2x8xf32> to vector<2x8x1xf32>
    %107 = tpu.reciprocal %106 {approx = true} : vector<2x8x1xf32> -> vector<2x8x1xf32>
    %108 = vector.broadcast %107 : vector<2x8x1xf32> to vector<2x8x16xf32>
    %109 = arith.mulf %104, %108 : vector<2x8x16xf32>
    %110 = vector.extract_strided_slice %60 {offsets = [0, 0, 16], sizes = [2, 16, 8], strides = [1, 1, 1]} : vector<2x16x32xf32> to vector<2x16x8xf32>
    "tpu.trace_start"() <{level = 10 : i32, message = "bqk,bkd->bqd"}> : () -> ()
    %cst_52 = arith.constant dense<0.000000e+00> : vector<2x8x8xf32>
    %111 = tpu.matmul %109, %110, %cst_52 {dimension_numbers = #tpu.dot_dimension_numbers<[2], [1], [1], [2], [0, 0, 0, 1, 1, 2], [0], [0]>} : vector<2x8x16xf32>, vector<2x16x8xf32>, vector<2x8x8xf32> -> vector<2x8x8xf32>
    "tpu.trace_stop"() : () -> ()
    %112 = vector.extract_strided_slice %41 {offsets = [0, 0, 24], sizes = [2, 8, 8], strides = [1, 1, 1]} : vector<2x8x32xf32> to vector<2x8x8xf32>
    %113 = vector.extract_strided_slice %51 {offsets = [0, 0, 24], sizes = [2, 16, 8], strides = [1, 1, 1]} : vector<2x16x32xf32> to vector<2x16x8xf32>
    "tpu.trace_start"() <{level = 10 : i32, message = "bqd,bkd->bqk"}> : () -> ()
    %cst_53 = arith.constant dense<0.000000e+00> : vector<2x8x16xf32>
    %114 = tpu.matmul %112, %113, %cst_53 {dimension_numbers = #tpu.dot_dimension_numbers<[2], [2], [1], [1], [0, 0, 0, 1, 1, 1], [0], [0]>} : vector<2x8x8xf32>, vector<2x16x8xf32>, vector<2x8x16xf32> -> vector<2x8x16xf32>
    "tpu.trace_stop"() : () -> ()
    %cst_54 = arith.constant 0.353553385 : f32
    %115 = vector.broadcast %cst_54 : f32 to vector<2x8x16xf32>
    %116 = arith.mulf %114, %115 : vector<2x8x16xf32>
    %cst_55 = arith.constant dense<0xFF800000> : vector<2x8xf32>
    %117 = vector.multi_reduction <maximumf>, %116, %cst_55 [2] : vector<2x8x16xf32> to vector<2x8xf32>
    %118 = vector.shape_cast %117 : vector<2x8xf32> to vector<2x8x1xf32>
    %119 = vector.broadcast %118 : vector<2x8x1xf32> to vector<2x8x16xf32>
    %120 = arith.subf %116, %119 : vector<2x8x16xf32>
    %121 = math.exp %120 : vector<2x8x16xf32>
    %cst_56 = arith.constant dense<0.000000e+00> : vector<2x8xf32>
    %122 = vector.multi_reduction <add>, %121, %cst_56 [2] : vector<2x8x16xf32> to vector<2x8xf32>
    %123 = vector.shape_cast %122 : vector<2x8xf32> to vector<2x8x1xf32>
    %124 = tpu.reciprocal %123 {approx = true} : vector<2x8x1xf32> -> vector<2x8x1xf32>
    %125 = vector.broadcast %124 : vector<2x8x1xf32> to vector<2x8x16xf32>
    %126 = arith.mulf %121, %125 : vector<2x8x16xf32>
    %127 = vector.extract_strided_slice %60 {offsets = [0, 0, 24], sizes = [2, 16, 8], strides = [1, 1, 1]} : vector<2x16x32xf32> to vector<2x16x8xf32>
    "tpu.trace_start"() <{level = 10 : i32, message = "bqk,bkd->bqd"}> : () -> ()
    %cst_57 = arith.constant dense<0.000000e+00> : vector<2x8x8xf32>
    %128 = tpu.matmul %126, %127, %cst_57 {dimension_numbers = #tpu.dot_dimension_numbers<[2], [1], [1], [2], [0, 0, 0, 1, 1, 2], [0], [0]>} : vector<2x8x16xf32>, vector<2x16x8xf32>, vector<2x8x8xf32> -> vector<2x8x8xf32>
    "tpu.trace_stop"() : () -> ()
    %129 = tpu.concatenate %77, %94, %111, %128 in 2 : vector<2x8x8xf32>, vector<2x8x8xf32>, vector<2x8x8xf32>, vector<2x8x8xf32> -> vector<2x8x32xf32>
    %130 = vector.shape_cast %129 : vector<2x8x32xf32> to vector<16x32xf32>
    %c0_58 = arith.constant 0 : index
    %c0_59 = arith.constant 0 : index
    %c0_60 = arith.constant 0 : index
    %131 = vector.load %arg8[%c0_58, %c0_59, %c0_60] : memref<1x32x32xbf16, #tpu.memory_space<vmem>>, vector<1x32x32xbf16>
    %132 = vector.shape_cast %131 : vector<1x32x32xbf16> to vector<32x32xbf16>
    %133 = arith.truncf %130 : vector<16x32xf32> to vector<16x32xbf16>
    %cst_61 = arith.constant dense<0.000000e+00> : vector<16x32xf32>
    %134 = tpu.matmul %133, %132, %cst_61 {dimension_numbers = #tpu.dot_dimension_numbers<[1], [0], [0], [1], [0, 0, 1, 1], [], []>} : vector<16x32xbf16>, vector<32x32xbf16>, vector<16x32xf32> -> vector<16x32xf32>
    %c0_62 = arith.constant 0 : index
    %c0_63 = arith.constant 0 : index
    %c0_64 = arith.constant 0 : index
    %135 = vector.load %arg9[%c0_62, %c0_63, %c0_64] : memref<1x1x32xf32, #tpu.memory_space<vmem>>, vector<1x1x32xf32>
    %136 = vector.shape_cast %135 : vector<1x1x32xf32> to vector<1x32xf32>
    %137 = vector.broadcast %136 : vector<1x32xf32> to vector<16x32xf32>
    %138 = arith.addf %134, %137 : vector<16x32xf32>
    %139 = arith.addf %32, %138 : vector<16x32xf32>
    %cst_65 = arith.constant dense<0.000000e+00> : vector<16xf32>
    %140 = vector.multi_reduction <add>, %139, %cst_65 [1] : vector<16x32xf32> to vector<16xf32>
    %141 = vector.shape_cast %140 : vector<16xf32> to vector<16x1xf32>
    %cst_66 = arith.constant 3.200000e+01 : f32
    %142 = vector.broadcast %cst_66 : f32 to vector<16x1xf32>
    %143 = arith.divf %141, %142 : vector<16x1xf32>
    %144 = vector.broadcast %143 : vector<16x1xf32> to vector<16x32xf32>
    %145 = arith.subf %139, %144 : vector<16x32xf32>
    %146 = arith.mulf %145, %145 : vector<16x32xf32>
    %cst_67 = arith.constant dense<0.000000e+00> : vector<16xf32>
    %147 = vector.multi_reduction <add>, %146, %cst_67 [1] : vector<16x32xf32> to vector<16xf32>
    %148 = vector.shape_cast %147 : vector<16xf32> to vector<16x1xf32>
    %cst_68 = arith.constant 3.200000e+01 : f32
    %149 = vector.broadcast %cst_68 : f32 to vector<16x1xf32>
    %150 = arith.divf %148, %149 : vector<16x1xf32>
    %151 = vector.broadcast %143 : vector<16x1xf32> to vector<16x32xf32>
    %152 = arith.subf %139, %151 : vector<16x32xf32>
    %cst_69 = arith.constant 9.99999974E-6 : f32
    %153 = vector.broadcast %cst_69 : f32 to vector<16x1xf32>
    %154 = arith.addf %150, %153 : vector<16x1xf32>
    %155 = math.rsqrt %154 : vector<16x1xf32>
    %156 = vector.broadcast %155 : vector<16x1xf32> to vector<16x32xf32>
    %157 = arith.mulf %152, %156 : vector<16x32xf32>
    %c0_70 = arith.constant 0 : index
    %c0_71 = arith.constant 0 : index
    %c0_72 = arith.constant 0 : index
    %158 = vector.load %arg10[%c0_70, %c0_71, %c0_72] : memref<1x1x32xf32, #tpu.memory_space<vmem>>, vector<1x1x32xf32>
    %159 = vector.shape_cast %158 : vector<1x1x32xf32> to vector<1x32xf32>
    %160 = vector.broadcast %159 : vector<1x32xf32> to vector<16x32xf32>
    %161 = arith.mulf %157, %160 : vector<16x32xf32>
    %c0_73 = arith.constant 0 : index
    %c0_74 = arith.constant 0 : index
    %c0_75 = arith.constant 0 : index
    %162 = vector.load %arg11[%c0_73, %c0_74, %c0_75] : memref<1x1x32xf32, #tpu.memory_space<vmem>>, vector<1x1x32xf32>
    %163 = vector.shape_cast %162 : vector<1x1x32xf32> to vector<1x32xf32>
    %164 = vector.broadcast %163 : vector<1x32xf32> to vector<16x32xf32>
    %165 = arith.addf %161, %164 : vector<16x32xf32>
    %c0_76 = arith.constant 0 : index
    %c0_77 = arith.constant 0 : index
    %c0_78 = arith.constant 0 : index
    %166 = vector.load %arg12[%c0_76, %c0_77, %c0_78] : memref<1x32x64xbf16, #tpu.memory_space<vmem>>, vector<1x32x64xbf16>
    %167 = vector.shape_cast %166 : vector<1x32x64xbf16> to vector<32x64xbf16>
    %168 = arith.truncf %165 : vector<16x32xf32> to vector<16x32xbf16>
    %cst_79 = arith.constant dense<0.000000e+00> : vector<16x64xf32>
    %169 = tpu.matmul %168, %167, %cst_79 {dimension_numbers = #tpu.dot_dimension_numbers<[1], [0], [0], [1], [0, 0, 1, 1], [], []>} : vector<16x32xbf16>, vector<32x64xbf16>, vector<16x64xf32> -> vector<16x64xf32>
    %c0_80 = arith.constant 0 : index
    %c0_81 = arith.constant 0 : index
    %c0_82 = arith.constant 0 : index
    %170 = vector.load %arg13[%c0_80, %c0_81, %c0_82] : memref<1x1x64xf32, #tpu.memory_space<vmem>>, vector<1x1x64xf32>
    %171 = vector.shape_cast %170 : vector<1x1x64xf32> to vector<1x64xf32>
    %172 = vector.broadcast %171 : vector<1x64xf32> to vector<16x64xf32>
    %173 = arith.addf %169, %172 : vector<16x64xf32>
    %cst_83 = arith.constant 0.000000e+00 : f32
    %174 = vector.broadcast %cst_83 : f32 to vector<16x64xf32>
    %175 = arith.maximumf %173, %174 : vector<16x64xf32>
    %c0_84 = arith.constant 0 : index
    %c0_85 = arith.constant 0 : index
    %c0_86 = arith.constant 0 : index
    %176 = vector.load %arg14[%c0_84, %c0_85, %c0_86] : memref<1x64x32xbf16, #tpu.memory_space<vmem>>, vector<1x64x32xbf16>
    %177 = vector.shape_cast %176 : vector<1x64x32xbf16> to vector<64x32xbf16>
    %178 = arith.truncf %175 : vector<16x64xf32> to vector<16x64xbf16>
    %cst_87 = arith.constant dense<0.000000e+00> : vector<16x32xf32>
    %179 = tpu.matmul %178, %177, %cst_87 {dimension_numbers = #tpu.dot_dimension_numbers<[1], [0], [0], [1], [0, 0, 1, 1], [], []>} : vector<16x64xbf16>, vector<64x32xbf16>, vector<16x32xf32> -> vector<16x32xf32>
    %c0_88 = arith.constant 0 : index
    %c0_89 = arith.constant 0 : index
    %c0_90 = arith.constant 0 : index
    %180 = vector.load %arg15[%c0_88, %c0_89, %c0_90] : memref<1x1x32xf32, #tpu.memory_space<vmem>>, vector<1x1x32xf32>
    %181 = vector.shape_cast %180 : vector<1x1x32xf32> to vector<1x32xf32>
    %182 = vector.broadcast %181 : vector<1x32xf32> to vector<16x32xf32>
    %183 = arith.addf %179, %182 : vector<16x32xf32>
    %184 = arith.addf %165, %183 : vector<16x32xf32>
    %cst_91 = arith.constant dense<0.000000e+00> : vector<16xf32>
    %185 = vector.multi_reduction <add>, %184, %cst_91 [1] : vector<16x32xf32> to vector<16xf32>
    %186 = vector.shape_cast %185 : vector<16xf32> to vector<16x1xf32>
    %cst_92 = arith.constant 3.200000e+01 : f32
    %187 = vector.broadcast %cst_92 : f32 to vector<16x1xf32>
    %188 = arith.divf %186, %187 : vector<16x1xf32>
    %189 = vector.broadcast %188 : vector<16x1xf32> to vector<16x32xf32>
    %190 = arith.subf %184, %189 : vector<16x32xf32>
    %191 = arith.mulf %190, %190 : vector<16x32xf32>
    %cst_93 = arith.constant dense<0.000000e+00> : vector<16xf32>
    %192 = vector.multi_reduction <add>, %191, %cst_93 [1] : vector<16x32xf32> to vector<16xf32>
    %193 = vector.shape_cast %192 : vector<16xf32> to vector<16x1xf32>
    %cst_94 = arith.constant 3.200000e+01 : f32
    %194 = vector.broadcast %cst_94 : f32 to vector<16x1xf32>
    %195 = arith.divf %193, %194 : vector<16x1xf32>
    %196 = vector.broadcast %188 : vector<16x1xf32> to vector<16x32xf32>
    %197 = arith.subf %184, %196 : vector<16x32xf32>
    %cst_95 = arith.constant 9.99999974E-6 : f32
    %198 = vector.broadcast %cst_95 : f32 to vector<16x1xf32>
    %199 = arith.addf %195, %198 : vector<16x1xf32>
    %200 = math.rsqrt %199 : vector<16x1xf32>
    %201 = vector.broadcast %200 : vector<16x1xf32> to vector<16x32xf32>
    %202 = arith.mulf %197, %201 : vector<16x32xf32>
    %c0_96 = arith.constant 0 : index
    %c0_97 = arith.constant 0 : index
    %c0_98 = arith.constant 0 : index
    %203 = vector.load %arg16[%c0_96, %c0_97, %c0_98] : memref<1x1x32xf32, #tpu.memory_space<vmem>>, vector<1x1x32xf32>
    %204 = vector.shape_cast %203 : vector<1x1x32xf32> to vector<1x32xf32>
    %205 = vector.broadcast %204 : vector<1x32xf32> to vector<16x32xf32>
    %206 = arith.mulf %202, %205 : vector<16x32xf32>
    %c0_99 = arith.constant 0 : index
    %c0_100 = arith.constant 0 : index
    %c0_101 = arith.constant 0 : index
    %207 = vector.load %arg17[%c0_99, %c0_100, %c0_101] : memref<1x1x32xf32, #tpu.memory_space<vmem>>, vector<1x1x32xf32>
    %208 = vector.shape_cast %207 : vector<1x1x32xf32> to vector<1x32xf32>
    %209 = vector.broadcast %208 : vector<1x32xf32> to vector<16x32xf32>
    %210 = arith.addf %206, %209 : vector<16x32xf32>
    %211 = vector.shape_cast %210 : vector<16x32xf32> to vector<2x8x32xf32>
    %c0_102 = arith.constant 0 : index
    %c0_103 = arith.constant 0 : index
    %c0_104 = arith.constant 0 : index
    %c0_105 = arith.constant 0 : index
    %212 = vector.load %arg18[%c0_102, %c0_103, %c0_104, %c0_105] : memref<1x2x8x32xf32, #tpu.memory_space<vmem>>, vector<1x2x8x32xf32>
    %213 = vector.shape_cast %212 : vector<1x2x8x32xf32> to vector<2x8x32xf32>
    %214 = vector.shape_cast %211 : vector<2x8x32xf32> to vector<1x2x8x32xf32>
    tpu.vector_store %arg18[%c0_102, %c0_103, %c0_104, %c0_105], %214 {strides = array<i32>} : memref<1x2x8x32xf32, #tpu.memory_space<vmem>>, vector<1x2x8x32xf32>,
    return
  }
  func.func @transform_0(%arg0: i32) -> (i32, i32, i32, i32) {
    %c0_i32 = arith.constant 0 : i32
    %c0_i32_0 = arith.constant 0 : i32
    %c0_i32_1 = arith.constant 0 : i32
    %c0_i32_2 = arith.constant 0 : i32
    %c0_i32_3 = arith.constant 0 : i32
    return %c0_i32, %c0_i32_0, %c0_i32_1, %c0_i32_2 : i32, i32, i32, i32
  }
  func.func @transform_1(%arg0: i32) -> (i32, i32, i32) {
    %c0_i32 = arith.constant 0 : i32
    %c0_i32_0 = arith.constant 0 : i32
    %c0_i32_1 = arith.constant 0 : i32
    return %arg0, %c0_i32, %c0_i32_0 : i32, i32, i32
  }
  func.func @transform_2(%arg0: i32) -> (i32, i32, i32) {
    %c0_i32 = arith.constant 0 : i32
    %c0_i32_0 = arith.constant 0 : i32
    %c0_i32_1 = arith.constant 0 : i32
    return %arg0, %c0_i32, %c0_i32_0 : i32, i32, i32
  }
  func.func @transform_3(%arg0: i32) -> (i32, i32, i32) {
    %c0_i32 = arith.constant 0 : i32
    %c0_i32_0 = arith.constant 0 : i32
    %c0_i32_1 = arith.constant 0 : i32
    return %arg0, %c0_i32, %c0_i32_0 : i32, i32, i32
  }
  func.func @transform_4(%arg0: i32) -> (i32, i32, i32) {
    %c0_i32 = arith.constant 0 : i32
    %c0_i32_0 = arith.constant 0 : i32
    %c0_i32_1 = arith.constant 0 : i32
    return %arg0, %c0_i32, %c0_i32_0 : i32, i32, i32
  }
  func.func @transform_5(%arg0: i32) -> (i32, i32, i32) {
    %c0_i32 = arith.constant 0 : i32
    %c0_i32_0 = arith.constant 0 : i32
    %c0_i32_1 = arith.constant 0 : i32
    return %arg0, %c0_i32, %c0_i32_0 : i32, i32, i32
  }
  func.func @transform_6(%arg0: i32) -> (i32, i32, i32) {
    %c0_i32 = arith.constant 0 : i32
    %c0_i32_0 = arith.constant 0 : i32
    %c0_i32_1 = arith.constant 0 : i32
    return %arg0, %c0_i32, %c0_i32_0 : i32, i32, i32
  }
  func.func @transform_7(%arg0: i32) -> (i32, i32, i32) {
    %c0_i32 = arith.constant 0 : i32
    %c0_i32_0 = arith.constant 0 : i32
    %c0_i32_1 = arith.constant 0 : i32
    return %arg0, %c0_i32, %c0_i32_0 : i32, i32, i32
  }
  func.func @transform_8(%arg0: i32) -> (i32, i32, i32) {
    %c0_i32 = arith.constant 0 : i32
    %c0_i32_0 = arith.constant 0 : i32
    %c0_i32_1 = arith.constant 0 : i32
    return %arg0, %c0_i32, %c0_i32_0 : i32, i32, i32
  }
  func.func @transform_9(%arg0: i32) -> (i32, i32, i32) {
    %c0_i32 = arith.constant 0 : i32
    %c0_i32_0 = arith.constant 0 : i32
    %c0_i32_1 = arith.constant 0 : i32
    return %arg0, %c0_i32, %c0_i32_0 : i32, i32, i32
  }
  func.func @transform_10(%arg0: i32) -> (i32, i32, i32) {
    %c0_i32 = arith.constant 0 : i32
    %c0_i32_0 = arith.constant 0 : i32
    %c0_i32_1 = arith.constant 0 : i32
    return %arg0, %c0_i32, %c0_i32_0 : i32, i32, i32
  }
  func.func @transform_11(%arg0: i32) -> (i32, i32, i32) {
    %c0_i32 = arith.constant 0 : i32
    %c0_i32_0 = arith.constant 0 : i32
    %c0_i32_1 = arith.constant 0 : i32
    return %arg0, %c0_i32, %c0_i32_0 : i32, i32, i32
  }
  func.func @transform_12(%arg0: i32) -> (i32, i32, i32) {
    %c0_i32 = arith.constant 0 : i32
    %c0_i32_0 = arith.constant 0 : i32
    %c0_i32_1 = arith.constant 0 : i32
    return %arg0, %c0_i32, %c0_i32_0 : i32, i32, i32
  }
  func.func @transform_13(%arg0: i32) -> (i32, i32, i32) {
    %c0_i32 = arith.constant 0 : i32
    %c0_i32_0 = arith.constant 0 : i32
    %c0_i32_1 = arith.constant 0 : i32
    return %arg0, %c0_i32, %c0_i32_0 : i32, i32, i32
  }
  func.func @transform_14(%arg0: i32) -> (i32, i32, i32) {
    %c0_i32 = arith.constant 0 : i32
    %c0_i32_0 = arith.constant 0 : i32
    %c0_i32_1 = arith.constant 0 : i32
    return %arg0, %c0_i32, %c0_i32_0 : i32, i32, i32
  }
  func.func @transform_15(%arg0: i32) -> (i32, i32, i32) {
    %c0_i32 = arith.constant 0 : i32
    %c0_i32_0 = arith.constant 0 : i32
    %c0_i32_1 = arith.constant 0 : i32
    return %arg0, %c0_i32, %c0_i32_0 : i32, i32, i32
  }
  func.func @transform_16(%arg0: i32) -> (i32, i32, i32) {
    %c0_i32 = arith.constant 0 : i32
    %c0_i32_0 = arith.constant 0 : i32
    %c0_i32_1 = arith.constant 0 : i32
    return %arg0, %c0_i32, %c0_i32_0 : i32, i32, i32
  }
  func.func @transform_17(%arg0: i32) -> (i32, i32, i32, i32) {
    %c0_i32 = arith.constant 0 : i32
    %c0_i32_0 = arith.constant 0 : i32
    %c0_i32_1 = arith.constant 0 : i32
    %c0_i32_2 = arith.constant 0 : i32
    return %arg0, %c0_i32, %c0_i32_0, %c0_i32_1 : i32, i32, i32, i32
  }
}

module attributes {stable_mosaic.version = 11 : i64} {
  func.func @_head_kernel(%arg0: memref<3x2x8x32xf32, #tpu.memory_space<vmem>>, %arg1: memref<96x32xbf16, #tpu.memory_space<vmem>>, %arg2: memref<1x32xf32, #tpu.memory_space<vmem>>, %arg3: memref<32x32xbf16, #tpu.memory_space<vmem>>, %arg4: memref<1x32xf32, #tpu.memory_space<vmem>>, %arg5: memref<32x6xbf16, #tpu.memory_space<vmem>>, %arg6: memref<1x6xf32, #tpu.memory_space<vmem>>, %arg7: memref<16x32xf32, #tpu.memory_space<vmem>>, %arg8: memref<16x6xf32, #tpu.memory_space<vmem>>) attributes {dimension_semantics = [], scalar_prefetch = 0 : i64, scratch_operands = 0 : i64, tpu.core_type = #tpu.core_type<tc>} {
    %c0 = arith.constant 0 : index
    %c0_0 = arith.constant 0 : index
    %c0_1 = arith.constant 0 : index
    %c0_2 = arith.constant 0 : index
    %0 = vector.load %arg0[%c0, %c0_0, %c0_1, %c0_2] : memref<3x2x8x32xf32, #tpu.memory_space<vmem>>, vector<1x2x8x32xf32>
    %1 = vector.shape_cast %0 : vector<1x2x8x32xf32> to vector<2x8x32xf32>
    %2 = vector.shape_cast %1 : vector<2x8x32xf32> to vector<16x32xf32>
    %c1 = arith.constant 1 : index
    %c0_3 = arith.constant 0 : index
    %c0_4 = arith.constant 0 : index
    %c0_5 = arith.constant 0 : index
    %3 = vector.load %arg0[%c1, %c0_3, %c0_4, %c0_5] : memref<3x2x8x32xf32, #tpu.memory_space<vmem>>, vector<1x2x8x32xf32>
    %4 = vector.shape_cast %3 : vector<1x2x8x32xf32> to vector<2x8x32xf32>
    %5 = vector.shape_cast %4 : vector<2x8x32xf32> to vector<16x32xf32>
    %c2 = arith.constant 2 : index
    %c0_6 = arith.constant 0 : index
    %c0_7 = arith.constant 0 : index
    %c0_8 = arith.constant 0 : index
    %6 = vector.load %arg0[%c2, %c0_6, %c0_7, %c0_8] : memref<3x2x8x32xf32, #tpu.memory_space<vmem>>, vector<1x2x8x32xf32>
    %7 = vector.shape_cast %6 : vector<1x2x8x32xf32> to vector<2x8x32xf32>
    %8 = vector.shape_cast %7 : vector<2x8x32xf32> to vector<16x32xf32>
    %9 = tpu.concatenate %2, %5, %8 in 1 : vector<16x32xf32>, vector<16x32xf32>, vector<16x32xf32> -> vector<16x96xf32>
    %c0_9 = arith.constant 0 : index
    %c0_10 = arith.constant 0 : index
    %10 = vector.load %arg1[%c0_9, %c0_10] : memref<96x32xbf16, #tpu.memory_space<vmem>>, vector<96x32xbf16>
    %11 = arith.truncf %9 : vector<16x96xf32> to vector<16x96xbf16>
    %cst = arith.constant dense<0.000000e+00> : vector<16x32xf32>
    %12 = tpu.matmul %11, %10, %cst {dimension_numbers = #tpu.dot_dimension_numbers<[1], [0], [0], [1], [0, 0, 1, 1], [], []>} : vector<16x96xbf16>, vector<96x32xbf16>, vector<16x32xf32> -> vector<16x32xf32>
    %c0_11 = arith.constant 0 : index
    %c0_12 = arith.constant 0 : index
    %13 = vector.load %arg2[%c0_11, %c0_12] : memref<1x32xf32, #tpu.memory_space<vmem>>, vector<1x32xf32>
    %14 = vector.broadcast %13 : vector<1x32xf32> to vector<16x32xf32>
    %15 = arith.addf %12, %14 : vector<16x32xf32>
    %c0_13 = arith.constant 0 : index
    %c0_14 = arith.constant 0 : index
    %16 = vector.load %arg3[%c0_13, %c0_14] : memref<32x32xbf16, #tpu.memory_space<vmem>>, vector<32x32xbf16>
    %17 = arith.truncf %15 : vector<16x32xf32> to vector<16x32xbf16>
    %cst_15 = arith.constant dense<0.000000e+00> : vector<16x32xf32>
    %18 = tpu.matmul %17, %16, %cst_15 {dimension_numbers = #tpu.dot_dimension_numbers<[1], [0], [0], [1], [0, 0, 1, 1], [], []>} : vector<16x32xbf16>, vector<32x32xbf16>, vector<16x32xf32> -> vector<16x32xf32>
    %c0_16 = arith.constant 0 : index
    %c0_17 = arith.constant 0 : index
    %19 = vector.load %arg4[%c0_16, %c0_17] : memref<1x32xf32, #tpu.memory_space<vmem>>, vector<1x32xf32>
    %20 = vector.broadcast %19 : vector<1x32xf32> to vector<16x32xf32>
    %21 = arith.addf %18, %20 : vector<16x32xf32>
    %cst_18 = arith.constant 0.000000e+00 : f32
    %22 = vector.broadcast %cst_18 : f32 to vector<16x32xf32>
    %23 = arith.maximumf %21, %22 : vector<16x32xf32>
    %c0_19 = arith.constant 0 : index
    %c0_20 = arith.constant 0 : index
    %24 = vector.load %arg7[%c0_19, %c0_20] : memref<16x32xf32, #tpu.memory_space<vmem>>, vector<16x32xf32>
    tpu.vector_store %arg7[%c0_19, %c0_20], %15 {strides = array<i32>} : memref<16x32xf32, #tpu.memory_space<vmem>>, vector<16x32xf32>,
    %c0_21 = arith.constant 0 : index
    %c0_22 = arith.constant 0 : index
    %25 = vector.load %arg5[%c0_21, %c0_22] : memref<32x6xbf16, #tpu.memory_space<vmem>>, vector<32x6xbf16>
    %26 = arith.truncf %23 : vector<16x32xf32> to vector<16x32xbf16>
    %cst_23 = arith.constant dense<0.000000e+00> : vector<16x6xf32>
    %27 = tpu.matmul %26, %25, %cst_23 {dimension_numbers = #tpu.dot_dimension_numbers<[1], [0], [0], [1], [0, 0, 1, 1], [], []>} : vector<16x32xbf16>, vector<32x6xbf16>, vector<16x6xf32> -> vector<16x6xf32>
    %c0_24 = arith.constant 0 : index
    %c0_25 = arith.constant 0 : index
    %28 = vector.load %arg6[%c0_24, %c0_25] : memref<1x6xf32, #tpu.memory_space<vmem>>, vector<1x6xf32>
    %29 = vector.broadcast %28 : vector<1x6xf32> to vector<16x6xf32>
    %30 = arith.addf %27, %29 : vector<16x6xf32>
    %c0_26 = arith.constant 0 : index
    %c0_27 = arith.constant 0 : index
    %31 = vector.load %arg8[%c0_26, %c0_27] : memref<16x6xf32, #tpu.memory_space<vmem>>, vector<16x6xf32>
    tpu.vector_store %arg8[%c0_26, %c0_27], %30 {strides = array<i32>} : memref<16x6xf32, #tpu.memory_space<vmem>>, vector<16x6xf32>,
    return
  }
}

</mosaic_0001>

<llo_original>
// kernel: multiemo_core.4
$region0: #{multiemo_core.4}
  #allocation0 [shape = 'u32[]', space=smem, size = 0x4, offset = 0x4, fixed_abs, tag = 'smem constant byte address 0x4 - core index']
  #allocation1 [shape = 'u32[144,128]{1,0:T(1,128)}', space=vmem, size = 0x12000, scoped, tag = 'internal scratch']
  %s0 = inlined_call_operand.vmem [shape: f32[3,16,48], index: 0, kind: input, shape index: {}]
  %s1 = inlined_call_operand.vmem [shape: bf16[3,48,32], index: 1, kind: input, shape index: {}]
  %s2 = inlined_call_operand.vmem [shape: f32[3,1,32], index: 2, kind: input, shape index: {}]
  %s3 = inlined_call_operand.vmem [shape: bf16[3,32,48], index: 3, kind: input, shape index: {}]
  %s4 = inlined_call_operand.vmem [shape: f32[3,1,48], index: 4, kind: input, shape index: {}]
  %s5 = inlined_call_operand.vmem [shape: bf16[3,32,48], index: 5, kind: input, shape index: {}]
  %s6 = inlined_call_operand.vmem [shape: f32[3,1,48], index: 6, kind: input, shape index: {}]
  %s7 = inlined_call_operand.vmem [shape: f32[3,16,48], index: 7, kind: output, shape index: {0}]
  %s8 = inlined_call_operand.vmem [shape: f32[3,16,48], index: 8, kind: output, shape index: {1}]
  %9 = xla_tuple %s7, %s8
  %s10 = sld [smem:[#allocation0]]
  $region69: #{multiemo_core.4} parent=0
    _
  %s12 = ssub.s32 1, %s10
  %s13 = scalar_select 0, %s12, %s10
  loop: start=0, step=1, limit=5
  $region2: #{multiemo_core.4} parent=0 // loop_pre_header
    _
  $region3: #{multiemo_core.4} parent=0 // loop_header
    %s15 = sphi 0, %s19
    %p16 = scmp.ge.s32.totalorder %s15, 5
    %s25 = sphi 0, %s27
    %s28 = sphi 0, %s25
    %s29 = sphi 0, %s28
    %s45 = sphi 0, %s29
    %s51 = sphi 0, %s53
    %s54 = sphi 0, %s51
    %s55 = sphi 0, %s54
    %s71 = sphi 0, %s55
    %s77 = sphi 0, %s79
    %s80 = sphi 0, %s77
    %s81 = sphi 0, %s80
    %s97 = sphi 0, %s81
    %s103 = sphi 0, %s105
    %s106 = sphi 0, %s103
    %s107 = sphi 0, %s106
    %s123 = sphi 0, %s107
    %s129 = sphi 0, %s131
    %s132 = sphi 0, %s129
    %s133 = sphi 0, %s132
    %s149 = sphi 0, %s133
    %s155 = sphi 0, %s157
    %s158 = sphi 0, %s155
    %s159 = sphi 0, %s158
    %s175 = sphi 0, %s159
    %s181 = sphi 0, %s183
    %s184 = sphi 0, %s181
    %s185 = sphi 0, %s184
    %s201 = sphi 0, %s185
    %s207 = sphi 0, %s209
    %s210 = sphi 0, %s207
    %s211 = sphi 0, %s210
    %s227 = sphi 0, %s211
    %s233 = sphi 0, %s235
    %s236 = sphi 0, %s233
    %s237 = sphi 0, %s236
    %s253 = sphi 0, %s237
  $region4: #{multiemo_core.4} parent=0 // loop_header_branch
    %18 = sbr.rel (%p16) target = $region8
  $region5: #{multiemo_core.4} parent=0 // loop_body
    %s20 = ssub.s32 %s15, 1
    %s21 = ssub.s32 %s15, 2
    %s22 = sadd.s32 %s15, 1
    %s23 = ssub.s32 %s15, %s22
    %p24 = scmp.eq.s32.totalorder %s23, 0
    %s26 = sadd.s32 %s25, 1
    %s27 = scalar_select %p24, %s25, %s26
    %p30 = pneg %p24
    %p31 = scmp.eq.s32.totalorder %s15, 2
    %p32 = por %p30, %p31
    %p33 = scmp.ne.s32.totalorder %s25, %s28
    %p34 = scmp.eq.s32.totalorder %s15, 0
    %p35 = por %p33, %p34
    %p36 = scmp.ne.s32.totalorder %s25, %s28
    %p37 = scmp.eq.s32.totalorder %s20, 2
    %p38 = por %p36, %p37
    %p39 = scmp.ne.s32.totalorder %s28, %s29
    %p40 = scmp.eq.s32.totalorder %s20, 0
    %p41 = por %p39, %p40
    %p42 = scmp.ne.s32.totalorder %s28, %s29
    %p43 = scmp.eq.s32.totalorder %s21, 2
    %p44 = por %p42, %p43
    %p46 = scmp.ne.s32.totalorder %s29, %s45
    %p47 = scmp.eq.s32.totalorder %s21, 0
    %p48 = por %p46, %p47
    %s49 = ssub.s32 %s15, %s22
    %p50 = scmp.eq.s32.totalorder %s49, 0
    %s52 = sadd.s32 %s51, 1
    %s53 = scalar_select %p50, %s51, %s52
    %p56 = pneg %p50
    %p57 = scmp.eq.s32.totalorder %s15, 2
    %p58 = por %p56, %p57
    %p59 = scmp.ne.s32.totalorder %s51, %s54
    %p60 = scmp.eq.s32.totalorder %s15, 0
    %p61 = por %p59, %p60
    %p62 = scmp.ne.s32.totalorder %s51, %s54
    %p63 = scmp.eq.s32.totalorder %s20, 2
    %p64 = por %p62, %p63
    %p65 = scmp.ne.s32.totalorder %s54, %s55
    %p66 = scmp.eq.s32.totalorder %s20, 0
    %p67 = por %p65, %p66
    %p68 = scmp.ne.s32.totalorder %s54, %s55
    %p69 = scmp.eq.s32.totalorder %s21, 2
    %p70 = por %p68, %p69
    %p72 = scmp.ne.s32.totalorder %s55, %s71
    %p73 = scmp.eq.s32.totalorder %s21, 0
    %p74 = por %p72, %p73
    %s75 = ssub.s32 %s15, %s22
    %p76 = scmp.eq.s32.totalorder %s75, 0
    %s78 = sadd.s32 %s77, 1
    %s79 = scalar_select %p76, %s77, %s78
    %p82 = pneg %p76
    %p83 = scmp.eq.s32.totalorder %s15, 2
    %p84 = por %p82, %p83
    %p85 = scmp.ne.s32.totalorder %s77, %s80
    %p86 = scmp.eq.s32.totalorder %s15, 0
    %p87 = por %p85, %p86
    %p88 = scmp.ne.s32.totalorder %s77, %s80
    %p89 = scmp.eq.s32.totalorder %s20, 2
    %p90 = por %p88, %p89
    %p91 = scmp.ne.s32.totalorder %s80, %s81
    %p92 = scmp.eq.s32.totalorder %s20, 0
    %p93 = por %p91, %p92
    %p94 = scmp.ne.s32.totalorder %s80, %s81
    %p95 = scmp.eq.s32.totalorder %s21, 2
    %p96 = por %p94, %p95
    %p98 = scmp.ne.s32.totalorder %s81, %s97
    %p99 = scmp.eq.s32.totalorder %s21, 0
    %p100 = por %p98, %p99
    %s101 = ssub.s32 %s15, %s22
    %p102 = scmp.eq.s32.totalorder %s101, 0
    %s104 = sadd.s32 %s103, 1
    %s105 = scalar_select %p102, %s103, %s104
    %p108 = pneg %p102
    %p109 = scmp.eq.s32.totalorder %s15, 2
    %p110 = por %p108, %p109
    %p111 = scmp.ne.s32.totalorder %s103, %s106
    %p112 = scmp.eq.s32.totalorder %s15, 0
    %p113 = por %p111, %p112
    %p114 = scmp.ne.s32.totalorder %s103, %s106
    %p115 = scmp.eq.s32.totalorder %s20, 2
    %p116 = por %p114, %p115
    %p117 = scmp.ne.s32.totalorder %s106, %s107
    %p118 = scmp.eq.s32.totalorder %s20, 0
    %p119 = por %p117, %p118
    %p120 = scmp.ne.s32.totalorder %s106, %s107
    %p121 = scmp.eq.s32.totalorder %s21, 2
    %p122 = por %p120, %p121
    %p124 = scmp.ne.s32.totalorder %s107, %s123
    %p125 = scmp.eq.s32.totalorder %s21, 0
    %p126 = por %p124, %p125
    %s127 = ssub.s32 %s15, %s22
    %p128 = scmp.eq.s32.totalorder %s127, 0
    %s130 = sadd.s32 %s129, 1
    %s131 = scalar_select %p128, %s129, %s130
    %p134 = pneg %p128
    %p135 = scmp.eq.s32.totalorder %s15, 2
    %p136 = por %p134, %p135
    %p137 = scmp.ne.s32.totalorder %s129, %s132
    %p138 = scmp.eq.s32.totalorder %s15, 0
    %p139 = por %p137, %p138
    %p140 = scmp.ne.s32.totalorder %s129, %s132
    %p141 = scmp.eq.s32.totalorder %s20, 2
    %p142 = por %p140, %p141
    %p143 = scmp.ne.s32.totalorder %s132, %s133
    %p144 = scmp.eq.s32.totalorder %s20, 0
    %p145 = por %p143, %p144
    %p146 = scmp.ne.s32.totalorder %s132, %s133
    %p147 = scmp.eq.s32.totalorder %s21, 2
    %p148 = por %p146, %p147
    %p150 = scmp.ne.s32.totalorder %s133, %s149
    %p151 = scmp.eq.s32.totalorder %s21, 0
    %p152 = por %p150, %p151
    %s153 = ssub.s32 %s15, %s22
    %p154 = scmp.eq.s32.totalorder %s153, 0
    %s156 = sadd.s32 %s155, 1
    %s157 = scalar_select %p154, %s155, %s156
    %p160 = pneg %p154
    %p161 = scmp.eq.s32.totalorder %s15, 2
    %p162 = por %p160, %p161
    %p163 = scmp.ne.s32.totalorder %s155, %s158
    %p164 = scmp.eq.s32.totalorder %s15, 0
    %p165 = por %p163, %p164
    %p166 = scmp.ne.s32.totalorder %s155, %s158
    %p167 = scmp.eq.s32.totalorder %s20, 2
    %p168 = por %p166, %p167
    %p169 = scmp.ne.s32.totalorder %s158, %s159
    %p170 = scmp.eq.s32.totalorder %s20, 0
    %p171 = por %p169, %p170
    %p172 = scmp.ne.s32.totalorder %s158, %s159
    %p173 = scmp.eq.s32.totalorder %s21, 2
    %p174 = por %p172, %p173
    %p176 = scmp.ne.s32.totalorder %s159, %s175
    %p177 = scmp.eq.s32.totalorder %s21, 0
    %p178 = por %p176, %p177
    %s179 = ssub.s32 %s15, %s22
    %p180 = scmp.eq.s32.totalorder %s179, 0
    %s182 = sadd.s32 %s181, 1
    %s183 = scalar_select %p180, %s181, %s182
    %p186 = pneg %p180
    %p187 = scmp.eq.s32.totalorder %s15, 2
    %p188 = por %p186, %p187
    %p189 = scmp.ne.s32.totalorder %s181, %s184
    %p190 = scmp.eq.s32.totalorder %s15, 0
    %p191 = por %p189, %p190
    %p192 = scmp.ne.s32.totalorder %s181, %s184
    %p193 = scmp.eq.s32.totalorder %s20, 2
    %p194 = por %p192, %p193
    %p195 = scmp.ne.s32.totalorder %s184, %s185
    %p196 = scmp.eq.s32.totalorder %s20, 0
    %p197 = por %p195, %p196
    %p198 = scmp.ne.s32.totalorder %s184, %s185
    %p199 = scmp.eq.s32.totalorder %s21, 2
    %p200 = por %p198, %p199
    %p202 = scmp.ne.s32.totalorder %s185, %s201
    %p203 = scmp.eq.s32.totalorder %s21, 0
    %p204 = por %p202, %p203
    %s205 = ssub.s32 %s15, %s22
    %p206 = scmp.eq.s32.totalorder %s205, 0
    %s208 = sadd.s32 %s207, 1
    %s209 = scalar_select %p206, %s207, %s208
    %p212 = pneg %p206
    %p213 = scmp.eq.s32.totalorder %s15, 2
    %p214 = por %p212, %p213
    %p215 = scmp.ne.s32.totalorder %s207, %s210
    %p216 = scmp.eq.s32.totalorder %s15, 0
    %p217 = por %p215, %p216
    %p218 = scmp.ne.s32.totalorder %s207, %s210
    %p219 = scmp.eq.s32.totalorder %s20, 2
    %p220 = por %p218, %p219
    %p221 = scmp.ne.s32.totalorder %s210, %s211
    %p222 = scmp.eq.s32.totalorder %s20, 0
    %p223 = por %p221, %p222
    %p224 = scmp.ne.s32.totalorder %s210, %s211
    %p225 = scmp.eq.s32.totalorder %s21, 2
    %p226 = por %p224, %p225
    %p228 = scmp.ne.s32.totalorder %s211, %s227
    %p229 = scmp.eq.s32.totalorder %s21, 0
    %p230 = por %p228, %p229
    %s231 = ssub.s32 %s15, %s22
    %p232 = scmp.eq.s32.totalorder %s231, 0
    %s234 = sadd.s32 %s233, 1
    %s235 = scalar_select %p232, %s233, %s234
    %p238 = pneg %p232
    %p239 = scmp.eq.s32.totalorder %s15, 2
    %p240 = por %p238, %p239
    %p241 = scmp.ne.s32.totalorder %s233, %s236
    %p242 = scmp.eq.s32.totalorder %s15, 0
    %p243 = por %p241, %p242
    %p244 = scmp.ne.s32.totalorder %s233, %s236
    %p245 = scmp.eq.s32.totalorder %s20, 2
    %p246 = por %p244, %p245
    %p247 = scmp.ne.s32.totalorder %s236, %s237
    %p248 = scmp.eq.s32.totalorder %s20, 0
    %p249 = por %p247, %p248
    %p250 = scmp.ne.s32.totalorder %s236, %s237
    %p251 = scmp.eq.s32.totalorder %s21, 2
    %p252 = por %p250, %p251
    %p254 = scmp.ne.s32.totalorder %s237, %s253
    %p255 = scmp.eq.s32.totalorder %s21, 0
    %p256 = por %p254, %p255
    %p257 = scmp.le.s32.totalorder 1, %s15
    %p258 = scmp.lt.s32.totalorder %s15, 4
    %p259 = pnand %p257, %p258
    %p260 = pneg %p259
    // Predicated region
    $region9: #{multiemo_core.4} parent=5 // pred_check
      _
    $region10: #{multiemo_core.4} parent=5 // pred_check_branch
      %262 = sbr.rel (%p259) target = $region12
    $region11: #{multiemo_core.4} parent=5 // pred_region
      %s263 = ssub.s32 %s15, 1
    $region12: #{multiemo_core.4} parent=5 // pred_fallthru
      _
    %p264 = scmp.lt.s32.totalorder %s15, 3
    // Predicated region
    $region13: #{multiemo_core.4} parent=5 // pred_check
      %p265 = pneg %p264
    $region14: #{multiemo_core.4} parent=5 // pred_check_branch
      %267 = sbr.rel (%p265) target = $region16
    $region15: #{multiemo_core.4} parent=5 // pred_region
      // Predicated region
      $region17: #{multiemo_core.4} parent=15 // pred_check
        %p268 = pneg %p35
      $region18: #{multiemo_core.4} parent=15 // pred_check_branch
        %270 = sbr.rel (%p268) target = $region20
      $region19: #{multiemo_core.4} parent=15 // pred_region
        %p271 = scmp.lt.s32.totalorder %s15, 2
        %s272 = scalar_select %p271, %s15, 2
        %s273 = smul.addr %s272, 2
        %s274 = smul.addr %s273, 8
        %s275 = scalar_lea.vmem %s0, %s274
      $region20: #{multiemo_core.4} parent=15 // pred_fallthru
        _
      // Predicated region
      $region21: #{multiemo_core.4} parent=15 // pred_check
        %p276 = pneg %p61
      $region22: #{multiemo_core.4} parent=15 // pred_check_branch
        %278 = sbr.rel (%p276) target = $region24
      $region23: #{multiemo_core.4} parent=15 // pred_region
        %p279 = scmp.lt.s32.totalorder %s15, 2
        %s280 = scalar_select %p279, %s15, 2
        %s281 = smul.addr %s280, 6
        %s282 = smul.addr %s281, 4
        %s283 = scalar_lea.vmem %s1, %s282
      $region24: #{multiemo_core.4} parent=15 // pred_fallthru
        _
      // Predicated region
      $region25: #{multiemo_core.4} parent=15 // pred_check
        %p284 = pneg %p87
      $region26: #{multiemo_core.4} parent=15 // pred_check_branch
        %286 = sbr.rel (%p284) target = $region28
      $region27: #{multiemo_core.4} parent=15 // pred_region
        %p287 = scmp.lt.s32.totalorder %s15, 2
        %s288 = scalar_select %p287, %s15, 2
        %s289 = scalar_lea.vmem %s2, %s288
      $region28: #{multiemo_core.4} parent=15 // pred_fallthru
        _
      // Predicated region
      $region29: #{multiemo_core.4} parent=15 // pred_check
        %p290 = pneg %p113
      $region30: #{multiemo_core.4} parent=15 // pred_check_branch
        %292 = sbr.rel (%p290) target = $region32
      $region31: #{multiemo_core.4} parent=15 // pred_region
        %p293 = scmp.lt.s32.totalorder %s15, 2
        %s294 = scalar_select %p293, %s15, 2
        %s295 = smul.addr %s294, 4
        %s296 = smul.addr %s295, 4
        %s297 = scalar_lea.vmem %s3, %s296
      $region32: #{multiemo_core.4} parent=15 // pred_fallthru
        _
      // Predicated region
      $region33: #{multiemo_core.4} parent=15 // pred_check
        %p298 = pneg %p139
      $region34: #{multiemo_core.4} parent=15 // pred_check_branch
        %300 = sbr.rel (%p298) target = $region36
      $region35: #{multiemo_core.4} parent=15 // pred_region
        %p301 = scmp.lt.s32.totalorder %s15, 2
        %s302 = scalar_select %p301, %s15, 2
        %s303 = scalar_lea.vmem %s4, %s302
      $region36: #{multiemo_core.4} parent=15 // pred_fallthru
        _
      // Predicated region
      $region37: #{multiemo_core.4} parent=15 // pred_check
        %p304 = pneg %p165
      $region38: #{multiemo_core.4} parent=15 // pred_check_branch
        %306 = sbr.rel (%p304) target = $region40
      $region39: #{multiemo_core.4} parent=15 // pred_region
        %p307 = scmp.lt.s32.totalorder %s15, 2
        %s308 = scalar_select %p307, %s15, 2
        %s309 = smul.addr %s308, 4
        %s310 = smul.addr %s309, 4
        %s311 = scalar_lea.vmem %s5, %s310
      $region40: #{multiemo_core.4} parent=15 // pred_fallthru
        _
      // Predicated region
      $region41: #{multiemo_core.4} parent=15 // pred_check
        %p312 = pneg %p191
      $region42: #{multiemo_core.4} parent=15 // pred_check_branch
        %314 = sbr.rel (%p312) target = $region44
      $region43: #{multiemo_core.4} parent=15 // pred_region
        %p315 = scmp.lt.s32.totalorder %s15, 2
        %s316 = scalar_select %p315, %s15, 2
        %s317 = scalar_lea.vmem %s6, %s316
      $region44: #{multiemo_core.4} parent=15 // pred_fallthru
        _
    $region16: #{multiemo_core.4} parent=5 // pred_fallthru
      _
    %p318 = scmp.le.s32.totalorder 1, %s15
    %p319 = scmp.lt.s32.totalorder %s15, 4
    %p320 = pnand %p318, %p319
    %p321 = pneg %p320
    // Predicated region
    $region45: #{multiemo_core.4} parent=5 // pred_check
      _
    $region46: #{multiemo_core.4} parent=5 // pred_check_branch
      %323 = sbr.rel (%p320) target = $region48
    $region47: #{multiemo_core.4} parent=5 // pred_region
      %s324 = ssub.s32 %s15, 1
      %p325 = scmp.lt.s32.totalorder %s20, 2
      %s326 = scalar_select %p325, %s20, 2
      %s327 = smul.addr %s326, 2
      %s328 = smul.addr %s327, 8
      %s329 = scalar_lea.vmem %s0, %s328
      %p330 = pneg %p41
      %p331 = pneg %p38
      %p332 = scmp.lt.s32.totalorder %s20, 2
      %s333 = scalar_select %p332, %s20, 2
      %s334 = smul.addr %s333, 6
      %s335 = smul.addr %s334, 4
      %s336 = scalar_lea.vmem %s1, %s335
      %p337 = pneg %p67
      %p338 = pneg %p64
      %p339 = scmp.lt.s32.totalorder %s20, 2
      %s340 = scalar_select %p339, %s20, 2
      %s341 = scalar_lea.vmem %s2, %s340
      %p342 = pneg %p93
      %p343 = pneg %p90
      %p344 = scmp.lt.s32.totalorder %s20, 2
      %s345 = scalar_select %p344, %s20, 2
      %s346 = smul.addr %s345, 4
      %s347 = smul.addr %s346, 4
      %s348 = scalar_lea.vmem %s3, %s347
      %p349 = pneg %p119
      %p350 = pneg %p116
      %p351 = scmp.lt.s32.totalorder %s20, 2
      %s352 = scalar_select %p351, %s20, 2
      %s353 = scalar_lea.vmem %s4, %s352
      %p354 = pneg %p145
      %p355 = pneg %p142
      %p356 = scmp.lt.s32.totalorder %s20, 2
      %s357 = scalar_select %p356, %s20, 2
      %s358 = smul.addr %s357, 4
      %s359 = smul.addr %s358, 4
      %s360 = scalar_lea.vmem %s5, %s359
      %p361 = pneg %p171
      %p362 = pneg %p168
      %p363 = scmp.lt.s32.totalorder %s20, 2
      %s364 = scalar_select %p363, %s20, 2
      %s365 = scalar_lea.vmem %s6, %s364
      %p366 = pneg %p197
      %p367 = pneg %p194
      %p368 = pneg %p223
      %p369 = pneg %p220
      %p370 = scmp.lt.s32.totalorder %s20, 2
      %s371 = scalar_select %p370, %s20, 2
      %s372 = smul.addr %s371, 2
      %s373 = smul.addr %s372, 8
      %s374 = scalar_lea.vmem %s7, %s373
      %p375 = pneg %p249
      %p376 = pneg %p246
      %p377 = scmp.lt.s32.totalorder %s20, 2
      %s378 = scalar_select %p377, %s20, 2
      %s379 = smul.addr %s378, 2
      %s380 = smul.addr %s379, 8
      %s381 = scalar_lea.vmem %s8, %s380
      %p382 = scmp.lt.s32.totalorder %s20, 2
      %s383 = scalar_select %p382, %s20, 2
      %s384 = smul.addr %s383, 2
      %s385 = smul.addr %s384, 8
      %s386 = scalar_lea.vmem %s0, %s385
      %p387 = scmp.lt.s32.totalorder %s20, 2
      %s388 = scalar_select %p387, %s20, 2
      %s389 = smul.addr %s388, 6
      %s390 = smul.addr %s389, 4
      %s391 = scalar_lea.vmem %s1, %s390
      %p392 = scmp.lt.s32.totalorder %s20, 2
      %s393 = scalar_select %p392, %s20, 2
      %s394 = scalar_lea.vmem %s2, %s393
      %p395 = scmp.lt.s32.totalorder %s20, 2
      %s396 = scalar_select %p395, %s20, 2
      %s397 = smul.addr %s396, 4
      %s398 = smul.addr %s397, 4
      %s399 = scalar_lea.vmem %s3, %s398
      %p400 = scmp.lt.s32.totalorder %s20, 2
      %s401 = scalar_select %p400, %s20, 2
      %s402 = scalar_lea.vmem %s4, %s401
      %p403 = scmp.lt.s32.totalorder %s20, 2
      %s404 = scalar_select %p403, %s20, 2
      %s405 = smul.addr %s404, 4
      %s406 = smul.addr %s405, 4
      %s407 = scalar_lea.vmem %s5, %s406
      %p408 = scmp.lt.s32.totalorder %s20, 2
      %s409 = scalar_select %p408, %s20, 2
      %s410 = scalar_lea.vmem %s6, %s409
      %p411 = scmp.lt.s32.totalorder %s20, 2
      %s412 = scalar_select %p411, %s20, 2
      %s413 = smul.addr %s412, 2
      %s414 = smul.addr %s413, 8
      %s415 = scalar_lea.vmem %s7, %s414
      %p416 = scmp.lt.s32.totalorder %s20, 2
      %s417 = scalar_select %p416, %s20, 2
      %s418 = smul.addr %s417, 2
      %s419 = smul.addr %s418, 8
      %s420 = scalar_lea.vmem %s8, %s419
      %v422 = vld [vmem:[%s386] sm:$0xff]
      %v423 = vld [vmem:[%s386 + $0x8] sm:$0xff]
      %v424 = vld [vmem:[%s391] sm:$0xf]
      %v425 = vld [vmem:[%s391 + $0x4] sm:$0xf]
      %v426 = vld [vmem:[%s391 + $0x8] sm:$0xf]
      %v427 = vld [vmem:[%s391 + $0xc] sm:$0xf]
      %v428 = vld [vmem:[%s391 + $0x10] sm:$0xf]
      %v429 = vld [vmem:[%s391 + $0x14] sm:$0xf]
      %v430 = vpack.c.bf16 %v423, %v422
      %v431 = vld [vmem:[%s394] sm:$0x1]
      %v433 = vlaneseq
      %v434 = vshrl.u32 %v433, 7
      %v435 = vsub.s32 0, %v434
      %v436 = vrot.slane %v431, %v435
      %v444 = vunpack.c.l.b16 %v424
      %v445 = vunpack.c.l.b16 %v425
      %v446 = vunpack.c.l.b16 %v426
      %v447 = vunpack.c.l.b16 %v427
      %v448 = vunpack.c.l.b16 %v428
      %v449 = vunpack.c.l.b16 %v429
      %v450 = vpack.c.b16 %v445, %v444
      %v451 = vpack.c.b16 %v447, %v446
      %v452 = vpack.c.b16 %v449, %v448
      %vm456 = vcmask 392192
      %v458 = vsel %vm456, %v430, 0
      %460 = vmatprep.subr.bf16.mxu0 0
      %461 = vmatpush1.bf16.msra.mxu0 %v450
      %462 = vmatprep.subr.bf16.mxu0 0
      %463 = vmatpush1.bf16.msra.mxu0 %v451
      %464 = vmatprep.subr.bf16.mxu0 0
      %465 = vmatpush1.bf16.msra.mxu0 %v452
      %466 = vmatprep.subr.bf16.mxu0 0
      %467 = vmatpush1.bf16.msra.mxu0 0
      %468 = vmatprep.subr.bf16.mxu0 0
      %469 = vmatpush1.bf16.msra.mxu0 0
      %470 = vmatprep.subr.bf16.mxu0 0
      %471 = vmatpush1.bf16.msra.mxu0 0
      %472 = vmatprep.subr.bf16.mxu0 0
      %473 = vmatpush1.bf16.msra.mxu0 0
      %474 = vmatprep.subr.bf16.mxu0 0
      %475 = vmatpush1.bf16.msra.mxu0 0
      %476 = vmatprep.subr.bf16.mxu0 0
      %477 = vmatpush1.bf16.msra.mxu0 0
      %478 = vmatprep.subr.bf16.mxu0 0
      %479 = vmatpush1.bf16.msra.mxu0 0
      %480 = vmatprep.subr.bf16.mxu0 0
      %481 = vmatpush1.bf16.msra.mxu0 0
      %482 = vmatprep.subr.bf16.mxu0 0
      %483 = vmatpush1.bf16.msra.mxu0 0
      %484 = vmatprep.subr.bf16.mxu0 0
      %485 = vmatpush1.bf16.msra.mxu0 0
      %486 = vmatprep.subr.bf16.mxu0 0
      %487 = vmatpush1.bf16.msra.mxu0 0
      %488 = vmatprep.subr.bf16.mxu0 0
      %489 = vmatpush1.bf16.msra.mxu0 0
      %490 = vmatprep.subr.bf16.mxu0 0
      %491 = vmatpush1.bf16.msra.mxu0 0
      %492 = vmatprep.mubr.bf16.mxu0 0
      %493 = vmatmul.mubr.bf16.gmra.mrb[0].mxu0 %v458
      %v494 = vpop.f32.mrb[0].mxu0
      %v495 = vadd.f32 %v436, %v494
      %v496 = vpop.f32.mrb[0].mxu0
      %v497 = vpop.f32.mrb[0].mxu0
      %v498 = vadd.f32 %v436, %v497
      %v499 = vpop.f32.mrb[0].mxu0
      %500 = vdwg.mxu0
      %v501 = vld [vmem:[%s399] sm:$0xf]
      %v502 = vld [vmem:[%s399 + $0x4] sm:$0xf]
      %v503 = vld [vmem:[%s399 + $0x8] sm:$0xf]
      %v504 = vld [vmem:[%s399 + $0xc] sm:$0xf]
      %v505 = vld [vmem:[%s407] sm:$0xf]
      %v506 = vld [vmem:[%s407 + $0x4] sm:$0xf]
      %v507 = vld [vmem:[%s407 + $0x8] sm:$0xf]
      %v508 = vld [vmem:[%s407 + $0xc] sm:$0xf]
      %v509 = vpack.c.bf16 %v498, %v495
      %v510 = vld [vmem:[%s402] sm:$0x1]
      %v512 = vlaneseq
      %v513 = vshrl.u32 %v512, 7
      %v514 = vsub.s32 0, %v513
      %v515 = vrot.slane %v510, %v514
      %v521 = vunpack.c.l.b16 %v501
      %v522 = vunpack.c.l.b16 %v502
      %v523 = vunpack.c.l.b16 %v503
      %v524 = vunpack.c.l.b16 %v504
      %v525 = vpack.c.b16 %v522, %v521
      %v526 = vpack.c.b16 %v524, %v523
      %vm529 = vcmask 261120
      %v531 = vsel %vm529, %v509, 0
      %533 = vmatprep.subr.bf16.mxu0 0
      %534 = vmatpush1.bf16.msra.mxu0 %v525
      %535 = vmatprep.subr.bf16.mxu0 0
      %536 = vmatpush1.bf16.msra.mxu0 %v526
      %537 = vmatprep.subr.bf16.mxu0 0
      %538 = vmatpush1.bf16.msra.mxu0 0
      %539 = vmatprep.subr.bf16.mxu0 0
      %540 = vmatpush1.bf16.msra.mxu0 0
      %541 = vmatprep.subr.bf16.mxu0 0
      %542 = vmatpush1.bf16.msra.mxu0 0
      %543 = vmatprep.subr.bf16.mxu0 0
      %544 = vmatpush1.bf16.msra.mxu0 0
      %545 = vmatprep.subr.bf16.mxu0 0
      %546 = vmatpush1.bf16.msra.mxu0 0
      %547 = vmatprep.subr.bf16.mxu0 0
      %548 = vmatpush1.bf16.msra.mxu0 0
      %549 = vmatprep.subr.bf16.mxu0 0
      %550 = vmatpush1.bf16.msra.mxu0 0
      %551 = vmatprep.subr.bf16.mxu0 0
      %552 = vmatpush1.bf16.msra.mxu0 0
      %553 = vmatprep.subr.bf16.mxu0 0
      %554 = vmatpush1.bf16.msra.mxu0 0
      %555 = vmatprep.subr.bf16.mxu0 0
      %556 = vmatpush1.bf16.msra.mxu0 0
      %557 = vmatprep.subr.bf16.mxu0 0
      %558 = vmatpush1.bf16.msra.mxu0 0
      %559 = vmatprep.subr.bf16.mxu0 0
      %560 = vmatpush1.bf16.msra.mxu0 0
      %561 = vmatprep.subr.bf16.mxu0 0
      %562 = vmatpush1.bf16.msra.mxu0 0
      %563 = vmatprep.subr.bf16.mxu0 0
      %564 = vmatpush1.bf16.msra.mxu0 0
      %565 = vmatprep.mubr.bf16.mxu0 0
      %566 = vmatmul.mubr.bf16.gmra.mrb[0].mxu0 %v531
      %v567 = vpop.f32.mrb[0].mxu0
      %v568 = vadd.f32 %v515, %v567
      %v569 = vpop.f32.mrb[0].mxu0
      %v570 = vpop.f32.mrb[0].mxu0
      %v571 = vadd.f32 %v515, %v570
      %v572 = vpop.f32.mrb[0].mxu0
      %573 = vdwg.mxu0
      %574 = vst.msk [vmem:[%s415] sm:$0xff] %vm456, %v568
      %575 = vst.msk [vmem:[%s415 + $0x8] sm:$0xff] %vm456, %v571
      %v576 = vld [vmem:[%s410] sm:$0x1]
      %v578 = vlaneseq
      %v579 = vshrl.u32 %v578, 7
      %v580 = vsub.s32 0, %v579
      %v581 = vrot.slane %v576, %v580
      %v587 = vunpack.c.l.b16 %v505
      %v588 = vunpack.c.l.b16 %v506
      %v589 = vunpack.c.l.b16 %v507
      %v590 = vunpack.c.l.b16 %v508
      %v591 = vpack.c.b16 %v588, %v587
      %v592 = vpack.c.b16 %v590, %v589
      %595 = vmatprep.subr.bf16.mxu0 0
      %596 = vmatpush1.bf16.msra.mxu0 %v591
      %597 = vmatprep.subr.bf16.mxu0 0
      %598 = vmatpush1.bf16.msra.mxu0 %v592
      %599 = vmatprep.subr.bf16.mxu0 0
      %600 = vmatpush1.bf16.msra.mxu0 0
      %601 = vmatprep.subr.bf16.mxu0 0
      %602 = vmatpush1.bf16.msra.mxu0 0
      %603 = vmatprep.subr.bf16.mxu0 0
      %604 = vmatpush1.bf16.msra.mxu0 0
      %605 = vmatprep.subr.bf16.mxu0 0
      %606 = vmatpush1.bf16.msra.mxu0 0
      %607 = vmatprep.subr.bf16.mxu0 0
      %608 = vmatpush1.bf16.msra.mxu0 0
      %609 = vmatprep.subr.bf16.mxu0 0
      %610 = vmatpush1.bf16.msra.mxu0 0
      %611 = vmatprep.subr.bf16.mxu0 0
      %612 = vmatpush1.bf16.msra.mxu0 0
      %613 = vmatprep.subr.bf16.mxu0 0
      %614 = vmatpush1.bf16.msra.mxu0 0
      %615 = vmatprep.subr.bf16.mxu0 0
      %616 = vmatpush1.bf16.msra.mxu0 0
      %617 = vmatprep.subr.bf16.mxu0 0
      %618 = vmatpush1.bf16.msra.mxu0 0
      %619 = vmatprep.subr.bf16.mxu0 0
      %620 = vmatpush1.bf16.msra.mxu0 0
      %621 = vmatprep.subr.bf16.mxu0 0
      %622 = vmatpush1.bf16.msra.mxu0 0
      %623 = vmatprep.subr.bf16.mxu0 0
      %624 = vmatpush1.bf16.msra.mxu0 0
      %625 = vmatprep.subr.bf16.mxu0 0
      %626 = vmatpush1.bf16.msra.mxu0 0
      %627 = vmatprep.mubr.bf16.mxu0 0
      %628 = vmatmul.mubr.bf16.gmra.mrb[0].mxu0 %v531
      %v629 = vpop.f32.mrb[0].mxu0
      %v630 = vadd.f32 %v581, %v629
      %v631 = vpop.f32.mrb[0].mxu0
      %v632 = vpop.f32.mrb[0].mxu0
      %v633 = vadd.f32 %v581, %v632
      %v634 = vpop.f32.mrb[0].mxu0
      %635 = vdwg.mxu0
      %636 = vst.msk [vmem:[%s420] sm:$0xff] %vm456, %v630
      %637 = vst.msk [vmem:[%s420 + $0x8] sm:$0xff] %vm456, %v633
      %p638 = scmp.lt.s32.totalorder %s20, 2
      %s639 = scalar_select %p638, %s20, 2
      %s640 = smul.addr %s639, 2
      %s641 = smul.addr %s640, 8
      %s642 = scalar_lea.vmem %s7, %s641
      %p643 = scmp.lt.s32.totalorder %s20, 2
      %s644 = scalar_select %p643, %s20, 2
      %s645 = smul.addr %s644, 2
      %s646 = smul.addr %s645, 8
      %s647 = scalar_lea.vmem %s8, %s646
      // Predicated region
      $region49: #{multiemo_core.4} parent=47 // pred_check
        %p648 = pneg %p220
      $region50: #{multiemo_core.4} parent=47 // pred_check_branch
        %650 = sbr.rel (%p648) target = $region52
      $region51: #{multiemo_core.4} parent=47 // pred_region
        _
      $region52: #{multiemo_core.4} parent=47 // pred_fallthru
        _
      // Predicated region
      $region53: #{multiemo_core.4} parent=47 // pred_check
        %p651 = pneg %p246
      $region54: #{multiemo_core.4} parent=47 // pred_check_branch
        %653 = sbr.rel (%p651) target = $region56
      $region55: #{multiemo_core.4} parent=47 // pred_region
        _
      $region56: #{multiemo_core.4} parent=47 // pred_fallthru
        _
    $region48: #{multiemo_core.4} parent=5 // pred_fallthru
      _
    %p654 = scmp.le.s32.totalorder 2, %s15
    // Predicated region
    $region57: #{multiemo_core.4} parent=5 // pred_check
      %p655 = pneg %p654
    $region58: #{multiemo_core.4} parent=5 // pred_check_branch
      %657 = sbr.rel (%p655) target = $region60
    $region59: #{multiemo_core.4} parent=5 // pred_region
      %s658 = ssub.s32 %s15, 2
      // Predicated region
      $region61: #{multiemo_core.4} parent=59 // pred_check
        %p659 = pneg %p226
      $region62: #{multiemo_core.4} parent=59 // pred_check_branch
        %661 = sbr.rel (%p659) target = $region64
      $region63: #{multiemo_core.4} parent=59 // pred_region
        %p662 = scmp.lt.s32.totalorder %s21, 2
        %s663 = scalar_select %p662, %s21, 2
        %s664 = smul.addr %s663, 2
        %s665 = smul.addr %s664, 8
        %s666 = scalar_lea.vmem %s7, %s665
      $region64: #{multiemo_core.4} parent=59 // pred_fallthru
        _
      // Predicated region
      $region65: #{multiemo_core.4} parent=59 // pred_check
        %p667 = pneg %p252
      $region66: #{multiemo_core.4} parent=59 // pred_check_branch
        %669 = sbr.rel (%p667) target = $region68
      $region67: #{multiemo_core.4} parent=59 // pred_region
        %p670 = scmp.lt.s32.totalorder %s21, 2
        %s671 = scalar_select %p670, %s21, 2
        %s672 = smul.addr %s671, 2
        %s673 = smul.addr %s672, 8
        %s674 = scalar_lea.vmem %s8, %s673
      $region68: #{multiemo_core.4} parent=59 // pred_fallthru
        _
    $region60: #{multiemo_core.4} parent=5 // pred_fallthru
      _
  $region6: #{multiemo_core.4} parent=0 // loop_footer
    %s19 = sadd.s32 1, %s15
  $region7: #{multiemo_core.4} parent=0 // loop_footer_branch
    %14 = sbr.rel target = $region3
  $region8: #{multiemo_core.4} parent=0 // loop_exit
    _

// kernel: multiemo_core.5
$region0: #{multiemo_core.5}
  #allocation0 [shape = 'u32[]', space=smem, size = 0x4, offset = 0x4, fixed_abs, tag = 'smem constant byte address 0x4 - core index']
  #allocation1 [shape = 'u32[144,128]{1,0:T(1,128)}', space=vmem, size = 0x12000, scoped, tag = 'internal scratch']
  #allocation2 [shape = 'f32[6,2,16]{2,1,0:T(2,128)}', space=vmem, size = 0x1800, scoped, tag = 'scratch operand']
  %s0 = inlined_call_operand.vmem [shape: f32[8,3,2,48], index: 0, kind: input, shape index: {}]
  %s1 = inlined_call_operand.vmem [shape: f32[8,3,2,48], index: 1, kind: input, shape index: {}]
  %s2 = inlined_call_operand.vmem [shape: f32[8,2,1], index: 2, kind: input, shape index: {}]
  %s3 = inlined_call_operand.vmem [shape: f32[6,16,48], index: 3, kind: input, shape index: {}]
  %s4 = inlined_call_operand.vmem [shape: f32[8,3,2,16], index: 4, kind: output, shape index: {0}]
  %s5 = inlined_call_operand.vmem [shape: f32[8,3,2,16], index: 5, kind: output, shape index: {1}]
  %6 = xla_tuple %s4, %s5
  %s7 = sld [smem:[#allocation0]]
  $region41: #{multiemo_core.5} parent=0
    _
  %s9 = ssub.s32 1, %s7
  %s10 = scalar_select 0, %s9, %s7
  // Predicated region
  $region2: #{multiemo_core.5} parent=0 // pred_check
    _
  $region3: #{multiemo_core.5} parent=0 // pred_check_branch
    %12 = sbr.rel (0) target = $region5
  $region4: #{multiemo_core.5} parent=0 // pred_region
    _
  $region5: #{multiemo_core.5} parent=0 // pred_fallthru
    _
  // Predicated region
  $region6: #{multiemo_core.5} parent=0 // pred_check
    _
  $region7: #{multiemo_core.5} parent=0 // pred_check_branch
    %14 = sbr.rel (0) target = $region9
  $region8: #{multiemo_core.5} parent=0 // pred_region
    _
  $region9: #{multiemo_core.5} parent=0 // pred_fallthru
    _
  // Predicated region
  $region10: #{multiemo_core.5} parent=0 // pred_check
    _
  $region11: #{multiemo_core.5} parent=0 // pred_check_branch
    %16 = sbr.rel (0) target = $region13
  $region12: #{multiemo_core.5} parent=0 // pred_region
    _
  $region13: #{multiemo_core.5} parent=0 // pred_fallthru
    _
  // Predicated region
  $region14: #{multiemo_core.5} parent=0 // pred_check
    _
  $region15: #{multiemo_core.5} parent=0 // pred_check_branch
    %18 = sbr.rel (0) target = $region17
  $region16: #{multiemo_core.5} parent=0 // pred_region
    _
  $region17: #{multiemo_core.5} parent=0 // pred_fallthru
    _
  %v19 = vld [vmem:[%s3] sm:$0xff]
  %v20 = vld [vmem:[%s3 + $0x8] sm:$0xff]
  %v21 = vld [vmem:[%s3 + $0x10] sm:$0xff]
  %v22 = vld [vmem:[%s3 + $0x18] sm:$0xff]
  %v23 = vld [vmem:[%s3 + $0x20] sm:$0xff]
  %v24 = vld [vmem:[%s3 + $0x28] sm:$0xff]
  %v25 = vld [vmem:[%s3 + $0x30] sm:$0xff]
  %v26 = vld [vmem:[%s3 + $0x38] sm:$0xff]
  %v27 = vld [vmem:[%s3 + $0x40] sm:$0xff]
  %v28 = vld [vmem:[%s3 + $0x48] sm:$0xff]
  %v29 = vld [vmem:[%s3 + $0x50] sm:$0xff]
  %v30 = vld [vmem:[%s3 + $0x58] sm:$0xff]
  %vm31 = vcmask 123904
  %32 = vst.msk [vmem:[#allocation2] sm:$0x3] %vm31, 0.0
  %33 = vst.msk [vmem:[#allocation2 + $0x2] sm:$0x3] %vm31, 0.0
  %34 = vst.msk [vmem:[#allocation2 + $0x4] sm:$0x3] %vm31, 0.0
  %35 = vst.msk [vmem:[#allocation2 + $0x6] sm:$0x3] %vm31, 0.0
  %36 = vst.msk [vmem:[#allocation2 + $0x8] sm:$0x3] %vm31, 0.0
  %37 = vst.msk [vmem:[#allocation2 + $0xa] sm:$0x3] %vm31, 0.0
  loop: start=0, step=1, limit=8
  $region18: #{multiemo_core.5} parent=0 // loop_pre_header
    _
  $region19: #{multiemo_core.5} parent=0 // loop_header
    %s39 = sphi 0, %s43
    %p40 = scmp.ge.s32.totalorder %s39, 8
  $region20: #{multiemo_core.5} parent=0 // loop_header_branch
    %42 = sbr.rel (%p40) target = $region24
  $region21: #{multiemo_core.5} parent=0 // loop_body
    %s44 = ssub.s32 7, %s39
    %v45 = vld [vmem:[#allocation2] sm:$0x3]
    %v46 = vld [vmem:[#allocation2 + $0x2] sm:$0x3]
    %v47 = vld [vmem:[#allocation2 + $0x4] sm:$0x3]
    %v48 = vld [vmem:[#allocation2 + $0x6] sm:$0x3]
    %v49 = vld [vmem:[#allocation2 + $0x8] sm:$0x3]
    %v50 = vld [vmem:[#allocation2 + $0xa] sm:$0x3]
    %vm51 = vcmask 130048
    %v53 = vsel %vm51, %v45, 0
    %55 = vmatprep.subr.mxu0 0.0
    %56 = vmatpush1.msra.mxu0 %v19
    %57 = vmatprep.subr.mxu0 0.0
    %58 = vmatpush1.msra.mxu0 %v20
    %59 = vmatprep.subr.mxu0 0.0
    %60 = vmatpush1.msra.mxu0 0.0
    %61 = vmatprep.subr.mxu0 0.0
    %62 = vmatpush1.msra.mxu0 0.0
    %63 = vmatprep.subr.mxu0 0.0
    %64 = vmatpush1.msra.mxu0 0.0
    %65 = vmatprep.subr.mxu0 0.0
    %66 = vmatpush1.msra.mxu0 0.0
    %67 = vmatprep.subr.mxu0 0.0
    %68 = vmatpush1.msra.mxu0 0.0
    %69 = vmatprep.subr.mxu0 0.0
    %70 = vmatpush1.msra.mxu0 0.0
    %71 = vmatprep.subr.mxu0 0.0
    %72 = vmatpush1.msra.mxu0 0.0
    %73 = vmatprep.subr.mxu0 0.0
    %74 = vmatpush1.msra.mxu0 0.0
    %75 = vmatprep.subr.mxu0 0.0
    %76 = vmatpush1.msra.mxu0 0.0
    %77 = vmatprep.subr.mxu0 0.0
    %78 = vmatpush1.msra.mxu0 0.0
    %79 = vmatprep.subr.mxu0 0.0
    %80 = vmatpush1.msra.mxu0 0.0
    %81 = vmatprep.subr.mxu0 0.0
    %82 = vmatpush1.msra.mxu0 0.0
    %83 = vmatprep.subr.mxu0 0.0
    %84 = vmatpush1.msra.mxu0 0.0
    %85 = vmatprep.subr.mxu0 0.0
    %86 = vmatpush1.msra.mxu0 0.0
    %87 = vmatprep.subr.mxu0 0.0
    %88 = vmatpush1.msra.mxu0 0.0
    %89 = vmatprep.subr.mxu0 0.0
    %90 = vmatpush1.msra.mxu0 0.0
    %91 = vmatprep.subr.mxu0 0.0
    %92 = vmatpush1.msra.mxu0 0.0
    %93 = vmatprep.subr.mxu0 0.0
    %94 = vmatpush1.msra.mxu0 0.0
    %95 = vmatprep.subr.mxu0 0.0
    %96 = vmatpush1.msra.mxu0 0.0
    %97 = vmatprep.subr.mxu0 0.0
    %98 = vmatpush1.msra.mxu0 0.0
    %99 = vmatprep.subr.mxu0 0.0
    %100 = vmatpush1.msra.mxu0 0.0
    %101 = vmatprep.subr.mxu0 0.0
    %102 = vmatpush1.msra.mxu0 0.0
    %103 = vmatprep.subr.mxu0 0.0
    %104 = vmatpush1.msra.mxu0 0.0
    %105 = vmatprep.subr.mxu0 0.0
    %106 = vmatpush1.msra.mxu0 0.0
    %107 = vmatprep.subr.mxu0 0.0
    %108 = vmatpush1.msra.mxu0 0.0
    %109 = vmatprep.subr.mxu0 0.0
    %110 = vmatpush1.msra.mxu0 0.0
    %111 = vmatprep.subr.mxu0 0.0
    %112 = vmatpush1.msra.mxu0 0.0
    %113 = vmatprep.subr.mxu0 0.0
    %114 = vmatpush1.msra.mxu0 0.0
    %115 = vmatprep.subr.mxu0 0.0
    %116 = vmatpush1.msra.mxu0 0.0
    %117 = vmatprep.subr.mxu0 0.0
    %118 = vmatpush1.msra.mxu0 0.0
    %119 = vmatprep.mubr.f32.mxu0 0.0
    %120 = vmatmul.mubr.f32.gmra.mrb[0].mxu0 %v53
    %v121 = vpop.f32.mrb[0].mxu0
    %v122 = vadd.f32 0.0, %v121
    %v123 = vpop.f32.mrb[0].mxu0
    %124 = vdwg.mxu0
    %v126 = vsel %vm51, %v46, 0
    %128 = vmatprep.subr.mxu0 0.0
    %129 = vmatpush1.msra.mxu0 %v21
    %130 = vmatprep.subr.mxu0 0.0
    %131 = vmatpush1.msra.mxu0 %v22
    %132 = vmatprep.subr.mxu0 0.0
    %133 = vmatpush1.msra.mxu0 0.0
    %134 = vmatprep.subr.mxu0 0.0
    %135 = vmatpush1.msra.mxu0 0.0
    %136 = vmatprep.subr.mxu0 0.0
    %137 = vmatpush1.msra.mxu0 0.0
    %138 = vmatprep.subr.mxu0 0.0
    %139 = vmatpush1.msra.mxu0 0.0
    %140 = vmatprep.subr.mxu0 0.0
    %141 = vmatpush1.msra.mxu0 0.0
    %142 = vmatprep.subr.mxu0 0.0
    %143 = vmatpush1.msra.mxu0 0.0
    %144 = vmatprep.subr.mxu0 0.0
    %145 = vmatpush1.msra.mxu0 0.0
    %146 = vmatprep.subr.mxu0 0.0
    %147 = vmatpush1.msra.mxu0 0.0
    %148 = vmatprep.subr.mxu0 0.0
    %149 = vmatpush1.msra.mxu0 0.0
    %150 = vmatprep.subr.mxu0 0.0
    %151 = vmatpush1.msra.mxu0 0.0
    %152 = vmatprep.subr.mxu0 0.0
    %153 = vmatpush1.msra.mxu0 0.0
    %154 = vmatprep.subr.mxu0 0.0
    %155 = vmatpush1.msra.mxu0 0.0
    %156 = vmatprep.subr.mxu0 0.0
    %157 = vmatpush1.msra.mxu0 0.0
    %158 = vmatprep.subr.mxu0 0.0
    %159 = vmatpush1.msra.mxu0 0.0
    %160 = vmatprep.subr.mxu0 0.0
    %161 = vmatpush1.msra.mxu0 0.0
    %162 = vmatprep.subr.mxu0 0.0
    %163 = vmatpush1.msra.mxu0 0.0
    %164 = vmatprep.subr.mxu0 0.0
    %165 = vmatpush1.msra.mxu0 0.0
    %166 = vmatprep.subr.mxu0 0.0
    %167 = vmatpush1.msra.mxu0 0.0
    %168 = vmatprep.subr.mxu0 0.0
    %169 = vmatpush1.msra.mxu0 0.0
    %170 = vmatprep.subr.mxu0 0.0
    %171 = vmatpush1.msra.mxu0 0.0
    %172 = vmatprep.subr.mxu0 0.0
    %173 = vmatpush1.msra.mxu0 0.0
    %174 = vmatprep.subr.mxu0 0.0
    %175 = vmatpush1.msra.mxu0 0.0
    %176 = vmatprep.subr.mxu0 0.0
    %177 = vmatpush1.msra.mxu0 0.0
    %178 = vmatprep.subr.mxu0 0.0
    %179 = vmatpush1.msra.mxu0 0.0
    %180 = vmatprep.subr.mxu0 0.0
    %181 = vmatpush1.msra.mxu0 0.0
    %182 = vmatprep.subr.mxu0 0.0
    %183 = vmatpush1.msra.mxu0 0.0
    %184 = vmatprep.subr.mxu0 0.0
    %185 = vmatpush1.msra.mxu0 0.0
    %186 = vmatprep.subr.mxu0 0.0
    %187 = vmatpush1.msra.mxu0 0.0
    %188 = vmatprep.subr.mxu0 0.0
    %189 = vmatpush1.msra.mxu0 0.0
    %190 = vmatprep.subr.mxu0 0.0
    %191 = vmatpush1.msra.mxu0 0.0
    %192 = vmatprep.mubr.f32.mxu0 0.0
    %193 = vmatmul.mubr.f32.gmra.mrb[0].mxu0 %v126
    %v194 = vpop.f32.mrb[0].mxu0
    %v195 = vadd.f32 0.0, %v194
    %v196 = vpop.f32.mrb[0].mxu0
    %197 = vdwg.mxu0
    %v199 = vsel %vm51, %v47, 0
    %201 = vmatprep.subr.mxu0 0.0
    %202 = vmatpush1.msra.mxu0 %v23
    %203 = vmatprep.subr.mxu0 0.0
    %204 = vmatpush1.msra.mxu0 %v24
    %205 = vmatprep.subr.mxu0 0.0
    %206 = vmatpush1.msra.mxu0 0.0
    %207 = vmatprep.subr.mxu0 0.0
    %208 = vmatpush1.msra.mxu0 0.0
    %209 = vmatprep.subr.mxu0 0.0
    %210 = vmatpush1.msra.mxu0 0.0
    %211 = vmatprep.subr.mxu0 0.0
    %212 = vmatpush1.msra.mxu0 0.0
    %213 = vmatprep.subr.mxu0 0.0
    %214 = vmatpush1.msra.mxu0 0.0
    %215 = vmatprep.subr.mxu0 0.0
    %216 = vmatpush1.msra.mxu0 0.0
    %217 = vmatprep.subr.mxu0 0.0
    %218 = vmatpush1.msra.mxu0 0.0
    %219 = vmatprep.subr.mxu0 0.0
    %220 = vmatpush1.msra.mxu0 0.0
    %221 = vmatprep.subr.mxu0 0.0
    %222 = vmatpush1.msra.mxu0 0.0
    %223 = vmatprep.subr.mxu0 0.0
    %224 = vmatpush1.msra.mxu0 0.0
    %225 = vmatprep.subr.mxu0 0.0
    %226 = vmatpush1.msra.mxu0 0.0
    %227 = vmatprep.subr.mxu0 0.0
    %228 = vmatpush1.msra.mxu0 0.0
    %229 = vmatprep.subr.mxu0 0.0
    %230 = vmatpush1.msra.mxu0 0.0
    %231 = vmatprep.subr.mxu0 0.0
    %232 = vmatpush1.msra.mxu0 0.0
    %233 = vmatprep.subr.mxu0 0.0
    %234 = vmatpush1.msra.mxu0 0.0
    %235 = vmatprep.subr.mxu0 0.0
    %236 = vmatpush1.msra.mxu0 0.0
    %237 = vmatprep.subr.mxu0 0.0
    %238 = vmatpush1.msra.mxu0 0.0
    %239 = vmatprep.subr.mxu0 0.0
    %240 = vmatpush1.msra.mxu0 0.0
    %241 = vmatprep.subr.mxu0 0.0
    %242 = vmatpush1.msra.mxu0 0.0
    %243 = vmatprep.subr.mxu0 0.0
    %244 = vmatpush1.msra.mxu0 0.0
    %245 = vmatprep.subr.mxu0 0.0
    %246 = vmatpush1.msra.mxu0 0.0
    %247 = vmatprep.subr.mxu0 0.0
    %248 = vmatpush1.msra.mxu0 0.0
    %249 = vmatprep.subr.mxu0 0.0
    %250 = vmatpush1.msra.mxu0 0.0
    %251 = vmatprep.subr.mxu0 0.0
    %252 = vmatpush1.msra.mxu0 0.0
    %253 = vmatprep.subr.mxu0 0.0
    %254 = vmatpush1.msra.mxu0 0.0
    %255 = vmatprep.subr.mxu0 0.0
    %256 = vmatpush1.msra.mxu0 0.0
    %257 = vmatprep.subr.mxu0 0.0
    %258 = vmatpush1.msra.mxu0 0.0
    %259 = vmatprep.subr.mxu0 0.0
    %260 = vmatpush1.msra.mxu0 0.0
    %261 = vmatprep.subr.mxu0 0.0
    %262 = vmatpush1.msra.mxu0 0.0
    %263 = vmatprep.subr.mxu0 0.0
    %264 = vmatpush1.msra.mxu0 0.0
    %265 = vmatprep.mubr.f32.mxu0 0.0
    %266 = vmatmul.mubr.f32.gmra.mrb[0].mxu0 %v199
    %v267 = vpop.f32.mrb[0].mxu0
    %v268 = vadd.f32 0.0, %v267
    %v269 = vpop.f32.mrb[0].mxu0
    %270 = vdwg.mxu0
    %v272 = vsel %vm51, %v48, 0
    %274 = vmatprep.subr.mxu0 0.0
    %275 = vmatpush1.msra.mxu0 %v25
    %276 = vmatprep.subr.mxu0 0.0
    %277 = vmatpush1.msra.mxu0 %v26
    %278 = vmatprep.subr.mxu0 0.0
    %279 = vmatpush1.msra.mxu0 0.0
    %280 = vmatprep.subr.mxu0 0.0
    %281 = vmatpush1.msra.mxu0 0.0
    %282 = vmatprep.subr.mxu0 0.0
    %283 = vmatpush1.msra.mxu0 0.0
    %284 = vmatprep.subr.mxu0 0.0
    %285 = vmatpush1.msra.mxu0 0.0
    %286 = vmatprep.subr.mxu0 0.0
    %287 = vmatpush1.msra.mxu0 0.0
    %288 = vmatprep.subr.mxu0 0.0
    %289 = vmatpush1.msra.mxu0 0.0
    %290 = vmatprep.subr.mxu0 0.0
    %291 = vmatpush1.msra.mxu0 0.0
    %292 = vmatprep.subr.mxu0 0.0
    %293 = vmatpush1.msra.mxu0 0.0
    %294 = vmatprep.subr.mxu0 0.0
    %295 = vmatpush1.msra.mxu0 0.0
    %296 = vmatprep.subr.mxu0 0.0
    %297 = vmatpush1.msra.mxu0 0.0
    %298 = vmatprep.subr.mxu0 0.0
    %299 = vmatpush1.msra.mxu0 0.0
    %300 = vmatprep.subr.mxu0 0.0
    %301 = vmatpush1.msra.mxu0 0.0
    %302 = vmatprep.subr.mxu0 0.0
    %303 = vmatpush1.msra.mxu0 0.0
    %304 = vmatprep.subr.mxu0 0.0
    %305 = vmatpush1.msra.mxu0 0.0
    %306 = vmatprep.subr.mxu0 0.0
    %307 = vmatpush1.msra.mxu0 0.0
    %308 = vmatprep.subr.mxu0 0.0
    %309 = vmatpush1.msra.mxu0 0.0
    %310 = vmatprep.subr.mxu0 0.0
    %311 = vmatpush1.msra.mxu0 0.0
    %312 = vmatprep.subr.mxu0 0.0
    %313 = vmatpush1.msra.mxu0 0.0
    %314 = vmatprep.subr.mxu0 0.0
    %315 = vmatpush1.msra.mxu0 0.0
    %316 = vmatprep.subr.mxu0 0.0
    %317 = vmatpush1.msra.mxu0 0.0
    %318 = vmatprep.subr.mxu0 0.0
    %319 = vmatpush1.msra.mxu0 0.0
    %320 = vmatprep.subr.mxu0 0.0
    %321 = vmatpush1.msra.mxu0 0.0
    %322 = vmatprep.subr.mxu0 0.0
    %323 = vmatpush1.msra.mxu0 0.0
    %324 = vmatprep.subr.mxu0 0.0
    %325 = vmatpush1.msra.mxu0 0.0
    %326 = vmatprep.subr.mxu0 0.0
    %327 = vmatpush1.msra.mxu0 0.0
    %328 = vmatprep.subr.mxu0 0.0
    %329 = vmatpush1.msra.mxu0 0.0
    %330 = vmatprep.subr.mxu0 0.0
    %331 = vmatpush1.msra.mxu0 0.0
    %332 = vmatprep.subr.mxu0 0.0
    %333 = vmatpush1.msra.mxu0 0.0
    %334 = vmatprep.subr.mxu0 0.0
    %335 = vmatpush1.msra.mxu0 0.0
    %336 = vmatprep.subr.mxu0 0.0
    %337 = vmatpush1.msra.mxu0 0.0
    %338 = vmatprep.mubr.f32.mxu0 0.0
    %339 = vmatmul.mubr.f32.gmra.mrb[0].mxu0 %v272
    %v340 = vpop.f32.mrb[0].mxu0
    %v341 = vadd.f32 0.0, %v340
    %v342 = vpop.f32.mrb[0].mxu0
    %343 = vdwg.mxu0
    %v345 = vsel %vm51, %v49, 0
    %347 = vmatprep.subr.mxu0 0.0
    %348 = vmatpush1.msra.mxu0 %v27
    %349 = vmatprep.subr.mxu0 0.0
    %350 = vmatpush1.msra.mxu0 %v28
    %351 = vmatprep.subr.mxu0 0.0
    %352 = vmatpush1.msra.mxu0 0.0
    %353 = vmatprep.subr.mxu0 0.0
    %354 = vmatpush1.msra.mxu0 0.0
    %355 = vmatprep.subr.mxu0 0.0
    %356 = vmatpush1.msra.mxu0 0.0
    %357 = vmatprep.subr.mxu0 0.0
    %358 = vmatpush1.msra.mxu0 0.0
    %359 = vmatprep.subr.mxu0 0.0
    %360 = vmatpush1.msra.mxu0 0.0
    %361 = vmatprep.subr.mxu0 0.0
    %362 = vmatpush1.msra.mxu0 0.0
    %363 = vmatprep.subr.mxu0 0.0
    %364 = vmatpush1.msra.mxu0 0.0
    %365 = vmatprep.subr.mxu0 0.0
    %366 = vmatpush1.msra.mxu0 0.0
    %367 = vmatprep.subr.mxu0 0.0
    %368 = vmatpush1.msra.mxu0 0.0
    %369 = vmatprep.subr.mxu0 0.0
    %370 = vmatpush1.msra.mxu0 0.0
    %371 = vmatprep.subr.mxu0 0.0
    %372 = vmatpush1.msra.mxu0 0.0
    %373 = vmatprep.subr.mxu0 0.0
    %374 = vmatpush1.msra.mxu0 0.0
    %375 = vmatprep.subr.mxu0 0.0
    %376 = vmatpush1.msra.mxu0 0.0
    %377 = vmatprep.subr.mxu0 0.0
    %378 = vmatpush1.msra.mxu0 0.0
    %379 = vmatprep.subr.mxu0 0.0
    %380 = vmatpush1.msra.mxu0 0.0
    %381 = vmatprep.subr.mxu0 0.0
    %382 = vmatpush1.msra.mxu0 0.0
    %383 = vmatprep.subr.mxu0 0.0
    %384 = vmatpush1.msra.mxu0 0.0
    %385 = vmatprep.subr.mxu0 0.0
    %386 = vmatpush1.msra.mxu0 0.0
    %387 = vmatprep.subr.mxu0 0.0
    %388 = vmatpush1.msra.mxu0 0.0
    %389 = vmatprep.subr.mxu0 0.0
    %390 = vmatpush1.msra.mxu0 0.0
    %391 = vmatprep.subr.mxu0 0.0
    %392 = vmatpush1.msra.mxu0 0.0
    %393 = vmatprep.subr.mxu0 0.0
    %394 = vmatpush1.msra.mxu0 0.0
    %395 = vmatprep.subr.mxu0 0.0
    %396 = vmatpush1.msra.mxu0 0.0
    %397 = vmatprep.subr.mxu0 0.0
    %398 = vmatpush1.msra.mxu0 0.0
    %399 = vmatprep.subr.mxu0 0.0
    %400 = vmatpush1.msra.mxu0 0.0
    %401 = vmatprep.subr.mxu0 0.0
    %402 = vmatpush1.msra.mxu0 0.0
    %403 = vmatprep.subr.mxu0 0.0
    %404 = vmatpush1.msra.mxu0 0.0
    %405 = vmatprep.subr.mxu0 0.0
    %406 = vmatpush1.msra.mxu0 0.0
    %407 = vmatprep.subr.mxu0 0.0
    %408 = vmatpush1.msra.mxu0 0.0
    %409 = vmatprep.subr.mxu0 0.0
    %410 = vmatpush1.msra.mxu0 0.0
    %411 = vmatprep.mubr.f32.mxu0 0.0
    %412 = vmatmul.mubr.f32.gmra.mrb[0].mxu0 %v345
    %v413 = vpop.f32.mrb[0].mxu0
    %v414 = vadd.f32 0.0, %v413
    %v415 = vpop.f32.mrb[0].mxu0
    %416 = vdwg.mxu0
    %v418 = vsel %vm51, %v50, 0
    %420 = vmatprep.subr.mxu0 0.0
    %421 = vmatpush1.msra.mxu0 %v29
    %422 = vmatprep.subr.mxu0 0.0
    %423 = vmatpush1.msra.mxu0 %v30
    %424 = vmatprep.subr.mxu0 0.0
    %425 = vmatpush1.msra.mxu0 0.0
    %426 = vmatprep.subr.mxu0 0.0
    %427 = vmatpush1.msra.mxu0 0.0
    %428 = vmatprep.subr.mxu0 0.0
    %429 = vmatpush1.msra.mxu0 0.0
    %430 = vmatprep.subr.mxu0 0.0
    %431 = vmatpush1.msra.mxu0 0.0
    %432 = vmatprep.subr.mxu0 0.0
    %433 = vmatpush1.msra.mxu0 0.0
    %434 = vmatprep.subr.mxu0 0.0
    %435 = vmatpush1.msra.mxu0 0.0
    %436 = vmatprep.subr.mxu0 0.0
    %437 = vmatpush1.msra.mxu0 0.0
    %438 = vmatprep.subr.mxu0 0.0
    %439 = vmatpush1.msra.mxu0 0.0
    %440 = vmatprep.subr.mxu0 0.0
    %441 = vmatpush1.msra.mxu0 0.0
    %442 = vmatprep.subr.mxu0 0.0
    %443 = vmatpush1.msra.mxu0 0.0
    %444 = vmatprep.subr.mxu0 0.0
    %445 = vmatpush1.msra.mxu0 0.0
    %446 = vmatprep.subr.mxu0 0.0
    %447 = vmatpush1.msra.mxu0 0.0
    %448 = vmatprep.subr.mxu0 0.0
    %449 = vmatpush1.msra.mxu0 0.0
    %450 = vmatprep.subr.mxu0 0.0
    %451 = vmatpush1.msra.mxu0 0.0
    %452 = vmatprep.subr.mxu0 0.0
    %453 = vmatpush1.msra.mxu0 0.0
    %454 = vmatprep.subr.mxu0 0.0
    %455 = vmatpush1.msra.mxu0 0.0
    %456 = vmatprep.subr.mxu0 0.0
    %457 = vmatpush1.msra.mxu0 0.0
    %458 = vmatprep.subr.mxu0 0.0
    %459 = vmatpush1.msra.mxu0 0.0
    %460 = vmatprep.subr.mxu0 0.0
    %461 = vmatpush1.msra.mxu0 0.0
    %462 = vmatprep.subr.mxu0 0.0
    %463 = vmatpush1.msra.mxu0 0.0
    %464 = vmatprep.subr.mxu0 0.0
    %465 = vmatpush1.msra.mxu0 0.0
    %466 = vmatprep.subr.mxu0 0.0
    %467 = vmatpush1.msra.mxu0 0.0
    %468 = vmatprep.subr.mxu0 0.0
    %469 = vmatpush1.msra.mxu0 0.0
    %470 = vmatprep.subr.mxu0 0.0
    %471 = vmatpush1.msra.mxu0 0.0
    %472 = vmatprep.subr.mxu0 0.0
    %473 = vmatpush1.msra.mxu0 0.0
    %474 = vmatprep.subr.mxu0 0.0
    %475 = vmatpush1.msra.mxu0 0.0
    %476 = vmatprep.subr.mxu0 0.0
    %477 = vmatpush1.msra.mxu0 0.0
    %478 = vmatprep.subr.mxu0 0.0
    %479 = vmatpush1.msra.mxu0 0.0
    %480 = vmatprep.subr.mxu0 0.0
    %481 = vmatpush1.msra.mxu0 0.0
    %482 = vmatprep.subr.mxu0 0.0
    %483 = vmatpush1.msra.mxu0 0.0
    %484 = vmatprep.mubr.f32.mxu0 0.0
    %485 = vmatmul.mubr.f32.gmra.mrb[0].mxu0 %v418
    %v486 = vpop.f32.mrb[0].mxu0
    %v487 = vadd.f32 0.0, %v486
    %v488 = vpop.f32.mrb[0].mxu0
    %489 = vdwg.mxu0
    %s490 = smul.u32 %s39, 6
    %s491 = scalar_lea.vmem %s0, %s490
    %v492 = vld [vmem:[%s491] sm:$0x3]
    %v493 = vld [vmem:[%s491 + $0x2] sm:$0x3]
    %v494 = vld [vmem:[%s491 + $0x4] sm:$0x3]
    %s495 = smul.u32 %s44, 6
    %s496 = scalar_lea.vmem %s1, %s495
    %v497 = vld [vmem:[%s496] sm:$0x3]
    %v498 = vld [vmem:[%s496 + $0x2] sm:$0x3]
    %v499 = vld [vmem:[%s496 + $0x4] sm:$0x3]
    %v500 = vadd.f32 %v492, %v122
    %v501 = vadd.f32 %v493, %v195
    %v502 = vadd.f32 %v494, %v268
    %v503 = vadd.f32 %v497, %v341
    %v504 = vadd.f32 %v498, %v414
    %v505 = vadd.f32 %v499, %v487
    %v506 = vxor.u32 %v500, 2147483648
    %v507 = vxor.u32 %v501, 2147483648
    %v508 = vxor.u32 %v502, 2147483648
    %v509 = vxor.u32 %v503, 2147483648
    %v510 = vxor.u32 %v504, 2147483648
    %v511 = vxor.u32 %v505, 2147483648
    %v512 = vmul.f32 %v506, 1.442695
    %v513 = vpow.pop %v512
    %v514 = vmul.f32 %v507, 1.442695
    %v515 = vpow.pop %v514
    %v516 = vmul.f32 %v508, 1.442695
    %v517 = vpow.pop %v516
    %v518 = vmul.f32 %v509, 1.442695
    %v519 = vpow.pop %v518
    %v520 = vmul.f32 %v510, 1.442695
    %v521 = vpow.pop %v520
    %v522 = vmul.f32 %v511, 1.442695
    %v523 = vpow.pop %v522
    %v524 = vadd.f32 %v513, 1.0
    %v525 = vadd.f32 %v515, 1.0
    %v526 = vadd.f32 %v517, 1.0
    %v527 = vadd.f32 %v519, 1.0
    %v528 = vadd.f32 %v521, 1.0
    %v529 = vadd.f32 %v523, 1.0
    %v530 = vrcp.pop %v524
    %v531 = vmul.f32 1.0, %v530
    %v532 = vrcp.pop %v525
    %v533 = vmul.f32 1.0, %v532
    %v534 = vrcp.pop %v526
    %v535 = vmul.f32 1.0, %v534
    %v536 = vrcp.pop %v527
    %v537 = vmul.f32 1.0, %v536
    %v538 = vrcp.pop %v528
    %v539 = vmul.f32 1.0, %v538
    %v540 = vrcp.pop %v529
    %v541 = vmul.f32 1.0, %v540
    %548 = vrot.lane.b32.xlu0 %v122, 96
    %v549 = vpop.permute.xlu0 %548
    %550 = vrot.lane.b32.xlu0 %v195, 96
    %v551 = vpop.permute.xlu0 %550
    %552 = vrot.lane.b32.xlu0 %v268, 96
    %v553 = vpop.permute.xlu0 %552
    %554 = vrot.lane.b32.xlu0 %v341, 96
    %v555 = vpop.permute.xlu0 %554
    %556 = vrot.lane.b32.xlu0 %v414, 96
    %v557 = vpop.permute.xlu0 %556
    %558 = vrot.lane.b32.xlu0 %v487, 96
    %v559 = vpop.permute.xlu0 %558
    %v566 = vmul.f32 %v531, %v549
    %v567 = vmul.f32 %v533, %v551
    %v568 = vmul.f32 %v535, %v553
    %v569 = vmul.f32 %v537, %v555
    %v570 = vmul.f32 %v539, %v557
    %v571 = vmul.f32 %v541, %v559
    %578 = vrot.lane.b32.xlu0 %v566, 32
    %v579 = vpop.permute.xlu0 %578
    %580 = vrot.lane.b32.xlu0 %v567, 32
    %v581 = vpop.permute.xlu0 %580
    %582 = vrot.lane.b32.xlu0 %v568, 32
    %v583 = vpop.permute.xlu0 %582
    %584 = vrot.lane.b32.xlu0 %v569, 32
    %v585 = vpop.permute.xlu0 %584
    %586 = vrot.lane.b32.xlu0 %v570, 32
    %v587 = vpop.permute.xlu0 %586
    %588 = vrot.lane.b32.xlu0 %v571, 32
    %v589 = vpop.permute.xlu0 %588
    %v596 = vadd.f32 %v492, %v579
    %v597 = vadd.f32 %v493, %v581
    %v598 = vadd.f32 %v494, %v583
    %v599 = vadd.f32 %v497, %v585
    %v600 = vadd.f32 %v498, %v587
    %v601 = vadd.f32 %v499, %v589
    %v602 = vtanh.pop %v596
    %v603 = vtanh.pop %v597
    %v604 = vtanh.pop %v598
    %v605 = vtanh.pop %v599
    %v606 = vtanh.pop %v600
    %v607 = vtanh.pop %v601
    %v608 = vsub.f32 1.0, %v531
    %v609 = vsub.f32 1.0, %v533
    %v610 = vsub.f32 1.0, %v535
    %v611 = vsub.f32 1.0, %v537
    %v612 = vsub.f32 1.0, %v539
    %v613 = vsub.f32 1.0, %v541
    %620 = vrot.lane.b32.xlu0 %v602, 112
    %v621 = vpop.permute.xlu0 %620
    %622 = vrot.lane.b32.xlu0 %v603, 112
    %v623 = vpop.permute.xlu0 %622
    %624 = vrot.lane.b32.xlu0 %v604, 112
    %v625 = vpop.permute.xlu0 %624
    %626 = vrot.lane.b32.xlu0 %v605, 112
    %v627 = vpop.permute.xlu0 %626
    %628 = vrot.lane.b32.xlu0 %v606, 112
    %v629 = vpop.permute.xlu0 %628
    %630 = vrot.lane.b32.xlu0 %v607, 112
    %v631 = vpop.permute.xlu0 %630
    %v638 = vmul.f32 %v608, %v621
    %v639 = vmul.f32 %v609, %v623
    %v640 = vmul.f32 %v610, %v625
    %v641 = vmul.f32 %v611, %v627
    %v642 = vmul.f32 %v612, %v629
    %v643 = vmul.f32 %v613, %v631
    %644 = vrot.lane.b32.xlu0 %v45, 16
    %v645 = vpop.permute.xlu0 %644
    %646 = vrot.lane.b32.xlu0 %v46, 16
    %v647 = vpop.permute.xlu0 %646
    %648 = vrot.lane.b32.xlu0 %v47, 16
    %v649 = vpop.permute.xlu0 %648
    %650 = vrot.lane.b32.xlu0 %v48, 16
    %v651 = vpop.permute.xlu0 %650
    %652 = vrot.lane.b32.xlu0 %v49, 16
    %v653 = vpop.permute.xlu0 %652
    %654 = vrot.lane.b32.xlu0 %v50, 16
    %v655 = vpop.permute.xlu0 %654
    %v662 = vmul.f32 %v531, %v645
    %v663 = vmul.f32 %v533, %v647
    %v664 = vmul.f32 %v535, %v649
    %v665 = vmul.f32 %v537, %v651
    %v666 = vmul.f32 %v539, %v653
    %v667 = vmul.f32 %v541, %v655
    %v668 = vadd.f32 %v638, %v662
    %v669 = vadd.f32 %v639, %v663
    %v670 = vadd.f32 %v640, %v664
    %v671 = vadd.f32 %v641, %v665
    %v672 = vadd.f32 %v642, %v666
    %v673 = vadd.f32 %v643, %v667
    %s674 = smul.u32 %s39, 2
    %s675 = scalar_lea.vmem %s2, %s674
    %v676 = vld [vmem:[%s675] sm:$0x3]
    %s677 = smul.u32 %s44, 2
    %s678 = scalar_lea.vmem %s2, %s677
    %v679 = vld [vmem:[%s678] sm:$0x3]
    %681 = vset.pattern.permute.xlu0 0
    %682 = vperm.xlu0 %681, %v676
    %v683 = vpop.permute.xlu0 %682
    %v685 = vmul.f32 %v683, %v668
    %v686 = vmul.f32 %v683, %v669
    %v687 = vmul.f32 %v683, %v670
    %v688 = vsub.f32 1.0, %v676
    %690 = vset.pattern.permute.xlu0 0
    %691 = vperm.xlu0 %690, %v688
    %v692 = vpop.permute.xlu0 %691
    %v694 = vmul.f32 %v692, %v45
    %v695 = vmul.f32 %v692, %v46
    %v696 = vmul.f32 %v692, %v47
    %700 = vrot.lane.b32.xlu0 %v694, 16
    %v701 = vpop.permute.xlu0 %700
    %702 = vrot.lane.b32.xlu0 %v695, 16
    %v703 = vpop.permute.xlu0 %702
    %704 = vrot.lane.b32.xlu0 %v696, 16
    %v705 = vpop.permute.xlu0 %704
    %v709 = vadd.f32 %v685, %v701
    %v710 = vadd.f32 %v686, %v703
    %v711 = vadd.f32 %v687, %v705
    %713 = vset.pattern.permute.xlu0 0
    %714 = vperm.xlu0 %713, %v679
    %v715 = vpop.permute.xlu0 %714
    %v717 = vmul.f32 %v715, %v671
    %v718 = vmul.f32 %v715, %v672
    %v719 = vmul.f32 %v715, %v673
    %v720 = vsub.f32 1.0, %v679
    %722 = vset.pattern.permute.xlu0 0
    %723 = vperm.xlu0 %722, %v720
    %v724 = vpop.permute.xlu0 %723
    %v726 = vmul.f32 %v724, %v48
    %v727 = vmul.f32 %v724, %v49
    %v728 = vmul.f32 %v724, %v50
    %732 = vrot.lane.b32.xlu0 %v726, 16
    %v733 = vpop.permute.xlu0 %732
    %734 = vrot.lane.b32.xlu0 %v727, 16
    %v735 = vpop.permute.xlu0 %734
    %736 = vrot.lane.b32.xlu0 %v728, 16
    %v737 = vpop.permute.xlu0 %736
    %v741 = vadd.f32 %v717, %v733
    %v742 = vadd.f32 %v718, %v735
    %v743 = vadd.f32 %v719, %v737
    %750 = vrot.lane.b32.xlu0 %v709, 112
    %v751 = vpop.permute.xlu0 %750
    %752 = vrot.lane.b32.xlu0 %v710, 112
    %v753 = vpop.permute.xlu0 %752
    %754 = vrot.lane.b32.xlu0 %v711, 112
    %v755 = vpop.permute.xlu0 %754
    %756 = vrot.lane.b32.xlu0 %v741, 112
    %v757 = vpop.permute.xlu0 %756
    %758 = vrot.lane.b32.xlu0 %v742, 112
    %v759 = vpop.permute.xlu0 %758
    %760 = vrot.lane.b32.xlu0 %v743, 112
    %v761 = vpop.permute.xlu0 %760
    %768 = vst.msk [vmem:[#allocation2] sm:$0x3] %vm31, %v751
    %769 = vst.msk [vmem:[#allocation2 + $0x2] sm:$0x3] %vm31, %v753
    %770 = vst.msk [vmem:[#allocation2 + $0x4] sm:$0x3] %vm31, %v755
    %771 = vst.msk [vmem:[#allocation2 + $0x6] sm:$0x3] %vm31, %v757
    %772 = vst.msk [vmem:[#allocation2 + $0x8] sm:$0x3] %vm31, %v759
    %773 = vst.msk [vmem:[#allocation2 + $0xa] sm:$0x3] %vm31, %v761
    %s774 = scalar_lea.vmem %s4, %s490
    %775 = vst.msk [vmem:[%s774] sm:$0x3] %vm31, %v751
    %776 = vst.msk [vmem:[%s774 + $0x2] sm:$0x3] %vm31, %v753
    %777 = vst.msk [vmem:[%s774 + $0x4] sm:$0x3] %vm31, %v755
    %s778 = scalar_lea.vmem %s5, %s495
    %779 = vst.msk [vmem:[%s778] sm:$0x3] %vm31, %v757
    %780 = vst.msk [vmem:[%s778 + $0x2] sm:$0x3] %vm31, %v759
    %781 = vst.msk [vmem:[%s778 + $0x4] sm:$0x3] %vm31, %v761
  $region22: #{multiemo_core.5} parent=0 // loop_footer
    %s43 = sadd.s32 1, %s39
  $region23: #{multiemo_core.5} parent=0 // loop_footer_branch
    %38 = sbr.rel target = $region19
  $region24: #{multiemo_core.5} parent=0 // loop_exit
    _
  // Predicated region
  $region25: #{multiemo_core.5} parent=0 // pred_check
    _
  $region26: #{multiemo_core.5} parent=0 // pred_check_branch
    %783 = sbr.rel (0) target = $region28
  $region27: #{multiemo_core.5} parent=0 // pred_region
    _
  $region28: #{multiemo_core.5} parent=0 // pred_fallthru
    _
  // Predicated region
  $region29: #{multiemo_core.5} parent=0 // pred_check
    _
  $region30: #{multiemo_core.5} parent=0 // pred_check_branch
    %785 = sbr.rel (0) target = $region32
  $region31: #{multiemo_core.5} parent=0 // pred_region
    _
  $region32: #{multiemo_core.5} parent=0 // pred_fallthru
    _
  // Predicated region
  $region33: #{multiemo_core.5} parent=0 // pred_check
    _
  $region34: #{multiemo_core.5} parent=0 // pred_check_branch
    %787 = sbr.rel (0) target = $region36
  $region35: #{multiemo_core.5} parent=0 // pred_region
    _
  $region36: #{multiemo_core.5} parent=0 // pred_fallthru
    _
  // Predicated region
  $region37: #{multiemo_core.5} parent=0 // pred_check
    _
  $region38: #{multiemo_core.5} parent=0 // pred_check_branch
    %789 = sbr.rel (0) target = $region40
  $region39: #{multiemo_core.5} parent=0 // pred_region
    _
  $region40: #{multiemo_core.5} parent=0 // pred_fallthru
    _

// kernel: multiemo_core.7
$region0: #{multiemo_core.7}
  #allocation0 [shape = 'u32[]', space=smem, size = 0x4, offset = 0x4, fixed_abs, tag = 'smem constant byte address 0x4 - core index']
  #allocation1 [shape = 'u32[144,128]{1,0:T(1,128)}', space=vmem, size = 0x12000, scoped, tag = 'internal scratch']
  %s0 = inlined_call_operand.vmem [shape: f32[3,2,8,32], index: 0, kind: input, shape index: {}]
  %s1 = inlined_call_operand.vmem [shape: bf16[96,32], index: 1, kind: input, shape index: {}]
  %s2 = inlined_call_operand.vmem [shape: f32[1,32], index: 2, kind: input, shape index: {}]
  %s3 = inlined_call_operand.vmem [shape: bf16[32,32], index: 3, kind: input, shape index: {}]
  %s4 = inlined_call_operand.vmem [shape: f32[1,32], index: 4, kind: input, shape index: {}]
  %s5 = inlined_call_operand.vmem [shape: bf16[32,6], index: 5, kind: input, shape index: {}]
  %s6 = inlined_call_operand.vmem [shape: f32[1,6], index: 6, kind: input, shape index: {}]
  %s7 = inlined_call_operand.hbm [shape: f32[16,32], index: 7, kind: output, shape index: {0}]
  %s8 = inlined_call_operand.vmem [shape: f32[16,6], index: 8, kind: output, shape index: {1}]
  %9 = xla_tuple %s7, %s8
  %s10 = sld [smem:[#allocation0]]
  $region46: #{multiemo_core.7} parent=0
    _
  %s12 = ssub.s32 1, %s10
  %s13 = scalar_select 0, %s12, %s10
  $region1: #{multiemo_core.7} parent=0
    #allocation2 [shape = 'u8[8192]{0}', space=vmem, size = 0x2000, scoped, tag = 'output window, operand 0, single buffered']
    #allocation3 [shape = 's32[1]{0}', space=sflag, size = 0x4, scoped, tag = 'scoped memory for multiemo_core.7']
    %14 = vsyncpa [#allocation3], 0
    // Predicated region
    $region2: #{multiemo_core.7} parent=1 // pred_check
      _
    $region3: #{multiemo_core.7} parent=1 // pred_check_branch
      %16 = sbr.rel (0) target = $region5
    $region4: #{multiemo_core.7} parent=1 // pred_region
      _
    $region5: #{multiemo_core.7} parent=1 // pred_fallthru
      _
    // Predicated region
    $region6: #{multiemo_core.7} parent=1 // pred_check
      _
    $region7: #{multiemo_core.7} parent=1 // pred_check_branch
      %18 = sbr.rel (0) target = $region9
    $region8: #{multiemo_core.7} parent=1 // pred_region
      _
    $region9: #{multiemo_core.7} parent=1 // pred_fallthru
      _
    // Predicated region
    $region10: #{multiemo_core.7} parent=1 // pred_check
      _
    $region11: #{multiemo_core.7} parent=1 // pred_check_branch
      %20 = sbr.rel (0) target = $region13
    $region12: #{multiemo_core.7} parent=1 // pred_region
      _
    $region13: #{multiemo_core.7} parent=1 // pred_fallthru
      _
    // Predicated region
    $region14: #{multiemo_core.7} parent=1 // pred_check
      _
    $region15: #{multiemo_core.7} parent=1 // pred_check_branch
      %22 = sbr.rel (0) target = $region17
    $region16: #{multiemo_core.7} parent=1 // pred_region
      _
    $region17: #{multiemo_core.7} parent=1 // pred_fallthru
      _
    // Predicated region
    $region18: #{multiemo_core.7} parent=1 // pred_check
      _
    $region19: #{multiemo_core.7} parent=1 // pred_check_branch
      %24 = sbr.rel (0) target = $region21
    $region20: #{multiemo_core.7} parent=1 // pred_region
      _
    $region21: #{multiemo_core.7} parent=1 // pred_fallthru
      _
    // Predicated region
    $region22: #{multiemo_core.7} parent=1 // pred_check
      _
    $region23: #{multiemo_core.7} parent=1 // pred_check_branch
      %26 = sbr.rel (0) target = $region25
    $region24: #{multiemo_core.7} parent=1 // pred_region
      _
    $region25: #{multiemo_core.7} parent=1 // pred_fallthru
      _
    // Predicated region
    $region26: #{multiemo_core.7} parent=1 // pred_check
      _
    $region27: #{multiemo_core.7} parent=1 // pred_check_branch
      %28 = sbr.rel (0) target = $region29
    $region28: #{multiemo_core.7} parent=1 // pred_region
      _
    $region29: #{multiemo_core.7} parent=1 // pred_fallthru
      _
    %v30 = vld [vmem:[%s0] sm:$0xff]
    %v31 = vld [vmem:[%s0 + $0x8] sm:$0xff]
    %s32 = scalar_lea.vmem %s0, 16
    %v33 = vld [vmem:[%s32] sm:$0xff]
    %v34 = vld [vmem:[%s32 + $0x8] sm:$0xff]
    %s35 = scalar_lea.vmem %s0, 32
    %v36 = vld [vmem:[%s35] sm:$0xff]
    %v37 = vld [vmem:[%s35 + $0x8] sm:$0xff]
    %40 = vrot.lane.b32.xlu0 %v33, 32
    %v41 = vpop.permute.xlu0 %40
    %42 = vrot.lane.b32.xlu0 %v34, 32
    %v43 = vpop.permute.xlu0 %42
    %48 = vrot.lane.b32.xlu0 %v36, 64
    %v49 = vpop.permute.xlu0 %48
    %50 = vrot.lane.b32.xlu0 %v37, 64
    %v51 = vpop.permute.xlu0 %50
    %vm54 = vcmask 261120
    %v55 = vsel %vm54, %v30, %v41
    %v56 = vsel %vm54, %v31, %v43
    %vm57 = vcmask 523264
    %v58 = vsel %vm57, %v55, %v49
    %v59 = vsel %vm57, %v56, %v51
    %v60 = vld [vmem:[%s1] sm:$0xf]
    %v61 = vld [vmem:[%s1 + $0x4] sm:$0xf]
    %v62 = vld [vmem:[%s1 + $0x8] sm:$0xf]
    %v63 = vld [vmem:[%s1 + $0xc] sm:$0xf]
    %v64 = vld [vmem:[%s1 + $0x10] sm:$0xf]
    %v65 = vld [vmem:[%s1 + $0x14] sm:$0xf]
    %v66 = vld [vmem:[%s1 + $0x18] sm:$0xf]
    %v67 = vld [vmem:[%s1 + $0x1c] sm:$0xf]
    %v68 = vld [vmem:[%s1 + $0x20] sm:$0xf]
    %v69 = vld [vmem:[%s1 + $0x24] sm:$0xf]
    %v70 = vld [vmem:[%s1 + $0x28] sm:$0xf]
    %v71 = vld [vmem:[%s1 + $0x2c] sm:$0xf]
    %v72 = vpack.c.bf16 %v59, %v58
    %v73 = vld [vmem:[%s2] sm:$0x1]
    %v75 = vlaneseq
    %v76 = vshrl.u32 %v75, 7
    %v77 = vsub.s32 0, %v76
    %v78 = vrot.slane %v73, %v77
    %v92 = vunpack.c.l.b16 %v60
    %v93 = vunpack.c.l.b16 %v61
    %v94 = vunpack.c.l.b16 %v62
    %v95 = vunpack.c.l.b16 %v63
    %v96 = vunpack.c.l.b16 %v64
    %v97 = vunpack.c.l.b16 %v65
    %v98 = vunpack.c.l.b16 %v66
    %v99 = vunpack.c.l.b16 %v67
    %v100 = vunpack.c.l.b16 %v68
    %v101 = vunpack.c.l.b16 %v69
    %v102 = vunpack.c.l.b16 %v70
    %v103 = vunpack.c.l.b16 %v71
    %v104 = vpack.c.b16 %v93, %v92
    %v105 = vpack.c.b16 %v95, %v94
    %v106 = vpack.c.b16 %v97, %v96
    %v107 = vpack.c.b16 %v99, %v98
    %v108 = vpack.c.b16 %v101, %v100
    %v109 = vpack.c.b16 %v103, %v102
    %vm116 = vcmask 785408
    %v118 = vsel %vm116, %v72, 0
    %120 = vmatprep.subr.bf16.mxu0 0
    %121 = vmatpush1.bf16.msra.mxu0 %v104
    %122 = vmatprep.subr.bf16.mxu0 0
    %123 = vmatpush1.bf16.msra.mxu0 %v105
    %124 = vmatprep.subr.bf16.mxu0 0
    %125 = vmatpush1.bf16.msra.mxu0 %v106
    %126 = vmatprep.subr.bf16.mxu0 0
    %127 = vmatpush1.bf16.msra.mxu0 %v107
    %128 = vmatprep.subr.bf16.mxu0 0
    %129 = vmatpush1.bf16.msra.mxu0 %v108
    %130 = vmatprep.subr.bf16.mxu0 0
    %131 = vmatpush1.bf16.msra.mxu0 %v109
    %132 = vmatprep.subr.bf16.mxu0 0
    %133 = vmatpush1.bf16.msra.mxu0 0
    %134 = vmatprep.subr.bf16.mxu0 0
    %135 = vmatpush1.bf16.msra.mxu0 0
    %136 = vmatprep.subr.bf16.mxu0 0
    %137 = vmatpush1.bf16.msra.mxu0 0
    %138 = vmatprep.subr.bf16.mxu0 0
    %139 = vmatpush1.bf16.msra.mxu0 0
    %140 = vmatprep.subr.bf16.mxu0 0
    %141 = vmatpush1.bf16.msra.mxu0 0
    %142 = vmatprep.subr.bf16.mxu0 0
    %143 = vmatpush1.bf16.msra.mxu0 0
    %144 = vmatprep.subr.bf16.mxu0 0
    %145 = vmatpush1.bf16.msra.mxu0 0
    %146 = vmatprep.subr.bf16.mxu0 0
    %147 = vmatpush1.bf16.msra.mxu0 0
    %148 = vmatprep.subr.bf16.mxu0 0
    %149 = vmatpush1.bf16.msra.mxu0 0
    %150 = vmatprep.subr.bf16.mxu0 0
    %151 = vmatpush1.bf16.msra.mxu0 0
    %152 = vmatprep.mubr.bf16.mxu0 0
    %153 = vmatmul.mubr.bf16.gmra.mrb[0].mxu0 %v118
    %v154 = vpop.f32.mrb[0].mxu0
    %v155 = vadd.f32 %v78, %v154
    %v156 = vpop.f32.mrb[0].mxu0
    %v157 = vpop.f32.mrb[0].mxu0
    %v158 = vadd.f32 %v78, %v157
    %v159 = vpop.f32.mrb[0].mxu0
    %160 = vdwg.mxu0
    %v161 = vld [vmem:[%s3] sm:$0xf]
    %v162 = vld [vmem:[%s3 + $0x4] sm:$0xf]
    %v163 = vld [vmem:[%s3 + $0x8] sm:$0xf]
    %v164 = vld [vmem:[%s3 + $0xc] sm:$0xf]
    %v165 = vpack.c.bf16 %v158, %v155
    %v166 = vld [vmem:[%s4] sm:$0x1]
    %v168 = vlaneseq
    %v169 = vshrl.u32 %v168, 7
    %v170 = vsub.s32 0, %v169
    %v171 = vrot.slane %v166, %v170
    %v177 = vunpack.c.l.b16 %v161
    %v178 = vunpack.c.l.b16 %v162
    %v179 = vunpack.c.l.b16 %v163
    %v180 = vunpack.c.l.b16 %v164
    %v181 = vpack.c.b16 %v178, %v177
    %v182 = vpack.c.b16 %v180, %v179
    %v186 = vsel %vm54, %v165, 0
    %188 = vmatprep.subr.bf16.mxu0 0
    %189 = vmatpush1.bf16.msra.mxu0 %v181
    %190 = vmatprep.subr.bf16.mxu0 0
    %191 = vmatpush1.bf16.msra.mxu0 %v182
    %192 = vmatprep.subr.bf16.mxu0 0
    %193 = vmatpush1.bf16.msra.mxu0 0
    %194 = vmatprep.subr.bf16.mxu0 0
    %195 = vmatpush1.bf16.msra.mxu0 0
    %196 = vmatprep.subr.bf16.mxu0 0
    %197 = vmatpush1.bf16.msra.mxu0 0
    %198 = vmatprep.subr.bf16.mxu0 0
    %199 = vmatpush1.bf16.msra.mxu0 0
    %200 = vmatprep.subr.bf16.mxu0 0
    %201 = vmatpush1.bf16.msra.mxu0 0
    %202 = vmatprep.subr.bf16.mxu0 0
    %203 = vmatpush1.bf16.msra.mxu0 0
    %204 = vmatprep.subr.bf16.mxu0 0
    %205 = vmatpush1.bf16.msra.mxu0 0
    %206 = vmatprep.subr.bf16.mxu0 0
    %207 = vmatpush1.bf16.msra.mxu0 0
    %208 = vmatprep.subr.bf16.mxu0 0
    %209 = vmatpush1.bf16.msra.mxu0 0
    %210 = vmatprep.subr.bf16.mxu0 0
    %211 = vmatpush1.bf16.msra.mxu0 0
    %212 = vmatprep.subr.bf16.mxu0 0
    %213 = vmatpush1.bf16.msra.mxu0 0
    %214 = vmatprep.subr.bf16.mxu0 0
    %215 = vmatpush1.bf16.msra.mxu0 0
    %216 = vmatprep.subr.bf16.mxu0 0
    %217 = vmatpush1.bf16.msra.mxu0 0
    %218 = vmatprep.subr.bf16.mxu0 0
    %219 = vmatpush1.bf16.msra.mxu0 0
    %220 = vmatprep.mubr.bf16.mxu0 0
    %221 = vmatmul.mubr.bf16.gmra.mrb[0].mxu0 %v186
    %v222 = vpop.f32.mrb[0].mxu0
    %v223 = vadd.f32 %v171, %v222
    %v224 = vpop.f32.mrb[0].mxu0
    %v225 = vpop.f32.mrb[0].mxu0
    %v226 = vadd.f32 %v171, %v225
    %v227 = vpop.f32.mrb[0].mxu0
    %228 = vdwg.mxu0
    %v229 = vmax.f32 %v223, 0.0
    %v230 = vmax.f32 %v226, 0.0
    %231 = vst.msk [vmem:[#allocation2] sm:$0xff] %vm54, %v155
    %232 = vst.msk [vmem:[#allocation2 + $0x8] sm:$0xff] %vm54, %v158
    %v233 = vld [vmem:[%s5] sm:$0xf]
    %v234 = vld [vmem:[%s5 + $0x4] sm:$0xf]
    %v235 = vld [vmem:[%s5 + $0x8] sm:$0xf]
    %v236 = vld [vmem:[%s5 + $0xc] sm:$0xf]
    %v237 = vpack.c.bf16 %v230, %v229
    %v238 = vld [vmem:[%s6] sm:$0x1]
    %v240 = vlaneseq
    %v241 = vshrl.u32 %v240, 7
    %v242 = vsub.s32 0, %v241
    %v243 = vrot.slane %v238, %v242
    %v249 = vunpack.c.l.b16 %v233
    %v250 = vunpack.c.l.b16 %v234
    %v251 = vunpack.c.l.b16 %v235
    %v252 = vunpack.c.l.b16 %v236
    %v253 = vpack.c.b16 %v250, %v249
    %v254 = vpack.c.b16 %v252, %v251
    %v258 = vsel %vm54, %v237, 0
    %260 = vmatprep.subr.bf16.mxu0 0
    %261 = vmatpush1.bf16.msra.mxu0 %v253
    %262 = vmatprep.subr.bf16.mxu0 0
    %263 = vmatpush1.bf16.msra.mxu0 %v254
    %264 = vmatprep.subr.bf16.mxu0 0
    %265 = vmatpush1.bf16.msra.mxu0 0
    %266 = vmatprep.subr.bf16.mxu0 0
    %267 = vmatpush1.bf16.msra.mxu0 0
    %268 = vmatprep.subr.bf16.mxu0 0
    %269 = vmatpush1.bf16.msra.mxu0 0
    %270 = vmatprep.subr.bf16.mxu0 0
    %271 = vmatpush1.bf16.msra.mxu0 0
    %272 = vmatprep.subr.bf16.mxu0 0
    %273 = vmatpush1.bf16.msra.mxu0 0
    %274 = vmatprep.subr.bf16.mxu0 0
    %275 = vmatpush1.bf16.msra.mxu0 0
    %276 = vmatprep.subr.bf16.mxu0 0
    %277 = vmatpush1.bf16.msra.mxu0 0
    %278 = vmatprep.subr.bf16.mxu0 0
    %279 = vmatpush1.bf16.msra.mxu0 0
    %280 = vmatprep.subr.bf16.mxu0 0
    %281 = vmatpush1.bf16.msra.mxu0 0
    %282 = vmatprep.subr.bf16.mxu0 0
    %283 = vmatpush1.bf16.msra.mxu0 0
    %284 = vmatprep.subr.bf16.mxu0 0
    %285 = vmatpush1.bf16.msra.mxu0 0
    %286 = vmatprep.subr.bf16.mxu0 0
    %287 = vmatpush1.bf16.msra.mxu0 0
    %288 = vmatprep.subr.bf16.mxu0 0
    %289 = vmatpush1.bf16.msra.mxu0 0
    %290 = vmatprep.subr.bf16.mxu0 0
    %291 = vmatpush1.bf16.msra.mxu0 0
    %292 = vmatprep.mubr.bf16.mxu0 0
    %293 = vmatmul.mubr.bf16.gmra.mrb[0].mxu0 %v258
    %v294 = vpop.f32.mrb[0].mxu0
    %v295 = vadd.f32 %v243, %v294
    %v296 = vpop.f32.mrb[0].mxu0
    %v297 = vpop.f32.mrb[0].mxu0
    %v298 = vadd.f32 %v243, %v297
    %v299 = vpop.f32.mrb[0].mxu0
    %300 = vdwg.mxu0
    %vm301 = vcmask 48128
    %302 = vst.msk [vmem:[%s8] sm:$0xff] %vm301, %v295
    %303 = vst.msk [vmem:[%s8 + $0x8] sm:$0xff] %vm301, %v298
    // Predicated region
    $region30: #{multiemo_core.7} parent=1 // pred_check
      _
    $region31: #{multiemo_core.7} parent=1 // pred_check_branch
      %305 = sbr.rel (0) target = $region33
    $region32: #{multiemo_core.7} parent=1 // pred_region
      %s307 = ssub.s32 256, 256
      %308 = vsyncadd [#allocation3], %s307
      %s309 = sshll.u32 [#allocation2], 4
      %s310 = int_to_ptr.vmem [resolvable:$true] %s309
      %315 = dma.vmem_to_hbm [thread:$0]  %s310, 256, %s7, [#allocation3], 128, 128, 8
    $region33: #{multiemo_core.7} parent=1 // pred_fallthru
      _
    // Predicated region
    $region34: #{multiemo_core.7} parent=1 // pred_check
      _
    $region35: #{multiemo_core.7} parent=1 // pred_check_branch
      %317 = sbr.rel (0) target = $region37
    $region36: #{multiemo_core.7} parent=1 // pred_region
      _
    $region37: #{multiemo_core.7} parent=1 // pred_fallthru
      _
    // Predicated region
    $region38: #{multiemo_core.7} parent=1 // pred_check
      _
    $region39: #{multiemo_core.7} parent=1 // pred_check_branch
      %319 = sbr.rel (0) target = $region41
    $region40: #{multiemo_core.7} parent=1 // pred_region
      %320 = dma.done [#allocation3], 256
    $region41: #{multiemo_core.7} parent=1 // pred_fallthru
      _
    // Predicated region
    $region42: #{multiemo_core.7} parent=1 // pred_check
      _
    $region43: #{multiemo_core.7} parent=1 // pred_check_branch
      %322 = sbr.rel (0) target = $region45
    $region44: #{multiemo_core.7} parent=1 // pred_region
      _
    $region45: #{multiemo_core.7} parent=1 // pred_fallthru
      _
    %323 = vsyncpa [#allocation3], 1

// kernel: multiemo_core.6
$region0: #{multiemo_core.6}
  #allocation0 [shape = 'u32[]', space=smem, size = 0x4, offset = 0x4, fixed_abs, tag = 'smem constant byte address 0x4 - core index']
  #allocation1 [shape = 'u32[144,128]{1,0:T(1,128)}', space=vmem, size = 0x12000, scoped, tag = 'internal scratch']
  %s0 = inlined_call_operand.vmem [shape: f32[3,2,8,32], index: 0, kind: input, shape index: {}]
  %s1 = inlined_call_operand.vmem [shape: bf16[3,32,32], index: 1, kind: input, shape index: {}]
  %s2 = inlined_call_operand.vmem [shape: f32[3,1,32], index: 2, kind: input, shape index: {}]
  %s3 = inlined_call_operand.vmem [shape: bf16[3,32,32], index: 3, kind: input, shape index: {}]
  %s4 = inlined_call_operand.vmem [shape: f32[3,1,32], index: 4, kind: input, shape index: {}]
  %s5 = inlined_call_operand.vmem [shape: bf16[3,32,32], index: 5, kind: input, shape index: {}]
  %s6 = inlined_call_operand.vmem [shape: f32[3,1,32], index: 6, kind: input, shape index: {}]
  %s7 = inlined_call_operand.vmem [shape: bf16[3,32,32], index: 7, kind: input, shape index: {}]
  %s8 = inlined_call_operand.vmem [shape: f32[3,1,32], index: 8, kind: input, shape index: {}]
  %s9 = inlined_call_operand.vmem [shape: f32[3,1,32], index: 9, kind: input, shape index: {}]
  %s10 = inlined_call_operand.vmem [shape: f32[3,1,32], index: 10, kind: input, shape index: {}]
  %s11 = inlined_call_operand.vmem [shape: bf16[3,32,64], index: 11, kind: input, shape index: {}]
  %s12 = inlined_call_operand.vmem [shape: f32[3,1,64], index: 12, kind: input, shape index: {}]
  %s13 = inlined_call_operand.vmem [shape: bf16[3,64,32], index: 13, kind: input, shape index: {}]
  %s14 = inlined_call_operand.vmem [shape: f32[3,1,32], index: 14, kind: input, shape index: {}]
  %s15 = inlined_call_operand.vmem [shape: f32[3,1,32], index: 15, kind: input, shape index: {}]
  %s16 = inlined_call_operand.vmem [shape: f32[3,1,32], index: 16, kind: input, shape index: {}]
  %s17 = inlined_call_operand.vmem [shape: f32[3,2,8,32], index: 17, kind: output, shape index: {}]
  %s18 = sld [smem:[#allocation0]]
  $region101: #{multiemo_core.6} parent=0
    _
  %s20 = ssub.s32 1, %s18
  %s21 = scalar_select 0, %s20, %s18
  loop: start=0, step=1, limit=5
  $region2: #{multiemo_core.6} parent=0 // loop_pre_header
    _
  $region3: #{multiemo_core.6} parent=0 // loop_header
    %s23 = sphi 0, %s27
    %p24 = scmp.ge.s32.totalorder %s23, 5
    %s31 = sphi 0, %s31
    %s33 = sphi 0, %s31
    %s34 = sphi 0, %s33
    %s48 = sphi 0, %s34
    %s54 = sphi 0, %s56
    %s57 = sphi 0, %s54
    %s58 = sphi 0, %s57
    %s74 = sphi 0, %s58
    %s80 = sphi 0, %s82
    %s83 = sphi 0, %s80
    %s84 = sphi 0, %s83
    %s100 = sphi 0, %s84
    %s106 = sphi 0, %s108
    %s109 = sphi 0, %s106
    %s110 = sphi 0, %s109
    %s126 = sphi 0, %s110
    %s132 = sphi 0, %s134
    %s135 = sphi 0, %s132
    %s136 = sphi 0, %s135
    %s152 = sphi 0, %s136
    %s158 = sphi 0, %s160
    %s161 = sphi 0, %s158
    %s162 = sphi 0, %s161
    %s178 = sphi 0, %s162
    %s184 = sphi 0, %s186
    %s187 = sphi 0, %s184
    %s188 = sphi 0, %s187
    %s204 = sphi 0, %s188
    %s210 = sphi 0, %s212
    %s213 = sphi 0, %s210
    %s214 = sphi 0, %s213
    %s230 = sphi 0, %s214
    %s236 = sphi 0, %s238
    %s239 = sphi 0, %s236
    %s240 = sphi 0, %s239
    %s256 = sphi 0, %s240
    %s262 = sphi 0, %s264
    %s265 = sphi 0, %s262
    %s266 = sphi 0, %s265
    %s282 = sphi 0, %s266
    %s288 = sphi 0, %s290
    %s291 = sphi 0, %s288
    %s292 = sphi 0, %s291
    %s308 = sphi 0, %s292
    %s314 = sphi 0, %s316
    %s317 = sphi 0, %s314
    %s318 = sphi 0, %s317
    %s334 = sphi 0, %s318
    %s340 = sphi 0, %s342
    %s343 = sphi 0, %s340
    %s344 = sphi 0, %s343
    %s360 = sphi 0, %s344
    %s366 = sphi 0, %s368
    %s369 = sphi 0, %s366
    %s370 = sphi 0, %s369
    %s386 = sphi 0, %s370
    %s392 = sphi 0, %s394
    %s395 = sphi 0, %s392
    %s396 = sphi 0, %s395
    %s412 = sphi 0, %s396
    %s418 = sphi 0, %s420
    %s421 = sphi 0, %s418
    %s422 = sphi 0, %s421
    %s438 = sphi 0, %s422
    %s444 = sphi 0, %s446
    %s447 = sphi 0, %s444
    %s448 = sphi 0, %s447
    %s464 = sphi 0, %s448
    %s470 = sphi 0, %s472
    %s473 = sphi 0, %s470
    %s474 = sphi 0, %s473
    %s490 = sphi 0, %s474
  $region4: #{multiemo_core.6} parent=0 // loop_header_branch
    %26 = sbr.rel (%p24) target = $region8
  $region5: #{multiemo_core.6} parent=0 // loop_body
    %s28 = ssub.s32 %s23, 1
    %s29 = ssub.s32 %s23, 2
    %s30 = sadd.s32 %s23, 1
    %s32 = sadd.s32 %s31, 1
    %p35 = scmp.eq.s32.totalorder %s23, 2
    %p36 = scmp.ne.s32.totalorder %s31, %s33
    %p37 = scmp.eq.s32.totalorder %s23, 0
    %p38 = por %p36, %p37
    %p39 = scmp.ne.s32.totalorder %s31, %s33
    %p40 = scmp.eq.s32.totalorder %s28, 2
    %p41 = por %p39, %p40
    %p42 = scmp.ne.s32.totalorder %s33, %s34
    %p43 = scmp.eq.s32.totalorder %s28, 0
    %p44 = por %p42, %p43
    %p45 = scmp.ne.s32.totalorder %s33, %s34
    %p46 = scmp.eq.s32.totalorder %s29, 2
    %p47 = por %p45, %p46
    %p49 = scmp.ne.s32.totalorder %s34, %s48
    %p50 = scmp.eq.s32.totalorder %s29, 0
    %p51 = por %p49, %p50
    %s52 = ssub.s32 %s23, %s30
    %p53 = scmp.eq.s32.totalorder %s52, 0
    %s55 = sadd.s32 %s54, 1
    %s56 = scalar_select %p53, %s54, %s55
    %p59 = pneg %p53
    %p60 = scmp.eq.s32.totalorder %s23, 2
    %p61 = por %p59, %p60
    %p62 = scmp.ne.s32.totalorder %s54, %s57
    %p63 = scmp.eq.s32.totalorder %s23, 0
    %p64 = por %p62, %p63
    %p65 = scmp.ne.s32.totalorder %s54, %s57
    %p66 = scmp.eq.s32.totalorder %s28, 2
    %p67 = por %p65, %p66
    %p68 = scmp.ne.s32.totalorder %s57, %s58
    %p69 = scmp.eq.s32.totalorder %s28, 0
    %p70 = por %p68, %p69
    %p71 = scmp.ne.s32.totalorder %s57, %s58
    %p72 = scmp.eq.s32.totalorder %s29, 2
    %p73 = por %p71, %p72
    %p75 = scmp.ne.s32.totalorder %s58, %s74
    %p76 = scmp.eq.s32.totalorder %s29, 0
    %p77 = por %p75, %p76
    %s78 = ssub.s32 %s23, %s30
    %p79 = scmp.eq.s32.totalorder %s78, 0
    %s81 = sadd.s32 %s80, 1
    %s82 = scalar_select %p79, %s80, %s81
    %p85 = pneg %p79
    %p86 = scmp.eq.s32.totalorder %s23, 2
    %p87 = por %p85, %p86
    %p88 = scmp.ne.s32.totalorder %s80, %s83
    %p89 = scmp.eq.s32.totalorder %s23, 0
    %p90 = por %p88, %p89
    %p91 = scmp.ne.s32.totalorder %s80, %s83
    %p92 = scmp.eq.s32.totalorder %s28, 2
    %p93 = por %p91, %p92
    %p94 = scmp.ne.s32.totalorder %s83, %s84
    %p95 = scmp.eq.s32.totalorder %s28, 0
    %p96 = por %p94, %p95
    %p97 = scmp.ne.s32.totalorder %s83, %s84
    %p98 = scmp.eq.s32.totalorder %s29, 2
    %p99 = por %p97, %p98
    %p101 = scmp.ne.s32.totalorder %s84, %s100
    %p102 = scmp.eq.s32.totalorder %s29, 0
    %p103 = por %p101, %p102
    %s104 = ssub.s32 %s23, %s30
    %p105 = scmp.eq.s32.totalorder %s104, 0
    %s107 = sadd.s32 %s106, 1
    %s108 = scalar_select %p105, %s106, %s107
    %p111 = pneg %p105
    %p112 = scmp.eq.s32.totalorder %s23, 2
    %p113 = por %p111, %p112
    %p114 = scmp.ne.s32.totalorder %s106, %s109
    %p115 = scmp.eq.s32.totalorder %s23, 0
    %p116 = por %p114, %p115
    %p117 = scmp.ne.s32.totalorder %s106, %s109
    %p118 = scmp.eq.s32.totalorder %s28, 2
    %p119 = por %p117, %p118
    %p120 = scmp.ne.s32.totalorder %s109, %s110
    %p121 = scmp.eq.s32.totalorder %s28, 0
    %p122 = por %p120, %p121
    %p123 = scmp.ne.s32.totalorder %s109, %s110
    %p124 = scmp.eq.s32.totalorder %s29, 2
    %p125 = por %p123, %p124
    %p127 = scmp.ne.s32.totalorder %s110, %s126
    %p128 = scmp.eq.s32.totalorder %s29, 0
    %p129 = por %p127, %p128
    %s130 = ssub.s32 %s23, %s30
    %p131 = scmp.eq.s32.totalorder %s130, 0
    %s133 = sadd.s32 %s132, 1
    %s134 = scalar_select %p131, %s132, %s133
    %p137 = pneg %p131
    %p138 = scmp.eq.s32.totalorder %s23, 2
    %p139 = por %p137, %p138
    %p140 = scmp.ne.s32.totalorder %s132, %s135
    %p141 = scmp.eq.s32.totalorder %s23, 0
    %p142 = por %p140, %p141
    %p143 = scmp.ne.s32.totalorder %s132, %s135
    %p144 = scmp.eq.s32.totalorder %s28, 2
    %p145 = por %p143, %p144
    %p146 = scmp.ne.s32.totalorder %s135, %s136
    %p147 = scmp.eq.s32.totalorder %s28, 0
    %p148 = por %p146, %p147
    %p149 = scmp.ne.s32.totalorder %s135, %s136
    %p150 = scmp.eq.s32.totalorder %s29, 2
    %p151 = por %p149, %p150
    %p153 = scmp.ne.s32.totalorder %s136, %s152
    %p154 = scmp.eq.s32.totalorder %s29, 0
    %p155 = por %p153, %p154
    %s156 = ssub.s32 %s23, %s30
    %p157 = scmp.eq.s32.totalorder %s156, 0
    %s159 = sadd.s32 %s158, 1
    %s160 = scalar_select %p157, %s158, %s159
    %p163 = pneg %p157
    %p164 = scmp.eq.s32.totalorder %s23, 2
    %p165 = por %p163, %p164
    %p166 = scmp.ne.s32.totalorder %s158, %s161
    %p167 = scmp.eq.s32.totalorder %s23, 0
    %p168 = por %p166, %p167
    %p169 = scmp.ne.s32.totalorder %s158, %s161
    %p170 = scmp.eq.s32.totalorder %s28, 2
    %p171 = por %p169, %p170
    %p172 = scmp.ne.s32.totalorder %s161, %s162
    %p173 = scmp.eq.s32.totalorder %s28, 0
    %p174 = por %p172, %p173
    %p175 = scmp.ne.s32.totalorder %s161, %s162
    %p176 = scmp.eq.s32.totalorder %s29, 2
    %p177 = por %p175, %p176
    %p179 = scmp.ne.s32.totalorder %s162, %s178
    %p180 = scmp.eq.s32.totalorder %s29, 0
    %p181 = por %p179, %p180
    %s182 = ssub.s32 %s23, %s30
    %p183 = scmp.eq.s32.totalorder %s182, 0
    %s185 = sadd.s32 %s184, 1
    %s186 = scalar_select %p183, %s184, %s185
    %p189 = pneg %p183
    %p190 = scmp.eq.s32.totalorder %s23, 2
    %p191 = por %p189, %p190
    %p192 = scmp.ne.s32.totalorder %s184, %s187
    %p193 = scmp.eq.s32.totalorder %s23, 0
    %p194 = por %p192, %p193
    %p195 = scmp.ne.s32.totalorder %s184, %s187
    %p196 = scmp.eq.s32.totalorder %s28, 2
    %p197 = por %p195, %p196
    %p198 = scmp.ne.s32.totalorder %s187, %s188
    %p199 = scmp.eq.s32.totalorder %s28, 0
    %p200 = por %p198, %p199
    %p201 = scmp.ne.s32.totalorder %s187, %s188
    %p202 = scmp.eq.s32.totalorder %s29, 2
    %p203 = por %p201, %p202
    %p205 = scmp.ne.s32.totalorder %s188, %s204
    %p206 = scmp.eq.s32.totalorder %s29, 0
    %p207 = por %p205, %p206
    %s208 = ssub.s32 %s23, %s30
    %p209 = scmp.eq.s32.totalorder %s208, 0
    %s211 = sadd.s32 %s210, 1
    %s212 = scalar_select %p209, %s210, %s211
    %p215 = pneg %p209
    %p216 = scmp.eq.s32.totalorder %s23, 2
    %p217 = por %p215, %p216
    %p218 = scmp.ne.s32.totalorder %s210, %s213
    %p219 = scmp.eq.s32.totalorder %s23, 0
    %p220 = por %p218, %p219
    %p221 = scmp.ne.s32.totalorder %s210, %s213
    %p222 = scmp.eq.s32.totalorder %s28, 2
    %p223 = por %p221, %p222
    %p224 = scmp.ne.s32.totalorder %s213, %s214
    %p225 = scmp.eq.s32.totalorder %s28, 0
    %p226 = por %p224, %p225
    %p227 = scmp.ne.s32.totalorder %s213, %s214
    %p228 = scmp.eq.s32.totalorder %s29, 2
    %p229 = por %p227, %p228
    %p231 = scmp.ne.s32.totalorder %s214, %s230
    %p232 = scmp.eq.s32.totalorder %s29, 0
    %p233 = por %p231, %p232
    %s234 = ssub.s32 %s23, %s30
    %p235 = scmp.eq.s32.totalorder %s234, 0
    %s237 = sadd.s32 %s236, 1
    %s238 = scalar_select %p235, %s236, %s237
    %p241 = pneg %p235
    %p242 = scmp.eq.s32.totalorder %s23, 2
    %p243 = por %p241, %p242
    %p244 = scmp.ne.s32.totalorder %s236, %s239
    %p245 = scmp.eq.s32.totalorder %s23, 0
    %p246 = por %p244, %p245
    %p247 = scmp.ne.s32.totalorder %s236, %s239
    %p248 = scmp.eq.s32.totalorder %s28, 2
    %p249 = por %p247, %p248
    %p250 = scmp.ne.s32.totalorder %s239, %s240
    %p251 = scmp.eq.s32.totalorder %s28, 0
    %p252 = por %p250, %p251
    %p253 = scmp.ne.s32.totalorder %s239, %s240
    %p254 = scmp.eq.s32.totalorder %s29, 2
    %p255 = por %p253, %p254
    %p257 = scmp.ne.s32.totalorder %s240, %s256
    %p258 = scmp.eq.s32.totalorder %s29, 0
    %p259 = por %p257, %p258
    %s260 = ssub.s32 %s23, %s30
    %p261 = scmp.eq.s32.totalorder %s260, 0
    %s263 = sadd.s32 %s262, 1
    %s264 = scalar_select %p261, %s262, %s263
    %p267 = pneg %p261
    %p268 = scmp.eq.s32.totalorder %s23, 2
    %p269 = por %p267, %p268
    %p270 = scmp.ne.s32.totalorder %s262, %s265
    %p271 = scmp.eq.s32.totalorder %s23, 0
    %p272 = por %p270, %p271
    %p273 = scmp.ne.s32.totalorder %s262, %s265
    %p274 = scmp.eq.s32.totalorder %s28, 2
    %p275 = por %p273, %p274
    %p276 = scmp.ne.s32.totalorder %s265, %s266
    %p277 = scmp.eq.s32.totalorder %s28, 0
    %p278 = por %p276, %p277
    %p279 = scmp.ne.s32.totalorder %s265, %s266
    %p280 = scmp.eq.s32.totalorder %s29, 2
    %p281 = por %p279, %p280
    %p283 = scmp.ne.s32.totalorder %s266, %s282
    %p284 = scmp.eq.s32.totalorder %s29, 0
    %p285 = por %p283, %p284
    %s286 = ssub.s32 %s23, %s30
    %p287 = scmp.eq.s32.totalorder %s286, 0
    %s289 = sadd.s32 %s288, 1
    %s290 = scalar_select %p287, %s288, %s289
    %p293 = pneg %p287
    %p294 = scmp.eq.s32.totalorder %s23, 2
    %p295 = por %p293, %p294
    %p296 = scmp.ne.s32.totalorder %s288, %s291
    %p297 = scmp.eq.s32.totalorder %s23, 0
    %p298 = por %p296, %p297
    %p299 = scmp.ne.s32.totalorder %s288, %s291
    %p300 = scmp.eq.s32.totalorder %s28, 2
    %p301 = por %p299, %p300
    %p302 = scmp.ne.s32.totalorder %s291, %s292
    %p303 = scmp.eq.s32.totalorder %s28, 0
    %p304 = por %p302, %p303
    %p305 = scmp.ne.s32.totalorder %s291, %s292
    %p306 = scmp.eq.s32.totalorder %s29, 2
    %p307 = por %p305, %p306
    %p309 = scmp.ne.s32.totalorder %s292, %s308
    %p310 = scmp.eq.s32.totalorder %s29, 0
    %p311 = por %p309, %p310
    %s312 = ssub.s32 %s23, %s30
    %p313 = scmp.eq.s32.totalorder %s312, 0
    %s315 = sadd.s32 %s314, 1
    %s316 = scalar_select %p313, %s314, %s315
    %p319 = pneg %p313
    %p320 = scmp.eq.s32.totalorder %s23, 2
    %p321 = por %p319, %p320
    %p322 = scmp.ne.s32.totalorder %s314, %s317
    %p323 = scmp.eq.s32.totalorder %s23, 0
    %p324 = por %p322, %p323
    %p325 = scmp.ne.s32.totalorder %s314, %s317
    %p326 = scmp.eq.s32.totalorder %s28, 2
    %p327 = por %p325, %p326
    %p328 = scmp.ne.s32.totalorder %s317, %s318
    %p329 = scmp.eq.s32.totalorder %s28, 0
    %p330 = por %p328, %p329
    %p331 = scmp.ne.s32.totalorder %s317, %s318
    %p332 = scmp.eq.s32.totalorder %s29, 2
    %p333 = por %p331, %p332
    %p335 = scmp.ne.s32.totalorder %s318, %s334
    %p336 = scmp.eq.s32.totalorder %s29, 0
    %p337 = por %p335, %p336
    %s338 = ssub.s32 %s23, %s30
    %p339 = scmp.eq.s32.totalorder %s338, 0
    %s341 = sadd.s32 %s340, 1
    %s342 = scalar_select %p339, %s340, %s341
    %p345 = pneg %p339
    %p346 = scmp.eq.s32.totalorder %s23, 2
    %p347 = por %p345, %p346
    %p348 = scmp.ne.s32.totalorder %s340, %s343
    %p349 = scmp.eq.s32.totalorder %s23, 0
    %p350 = por %p348, %p349
    %p351 = scmp.ne.s32.totalorder %s340, %s343
    %p352 = scmp.eq.s32.totalorder %s28, 2
    %p353 = por %p351, %p352
    %p354 = scmp.ne.s32.totalorder %s343, %s344
    %p355 = scmp.eq.s32.totalorder %s28, 0
    %p356 = por %p354, %p355
    %p357 = scmp.ne.s32.totalorder %s343, %s344
    %p358 = scmp.eq.s32.totalorder %s29, 2
    %p359 = por %p357, %p358
    %p361 = scmp.ne.s32.totalorder %s344, %s360
    %p362 = scmp.eq.s32.totalorder %s29, 0
    %p363 = por %p361, %p362
    %s364 = ssub.s32 %s23, %s30
    %p365 = scmp.eq.s32.totalorder %s364, 0
    %s367 = sadd.s32 %s366, 1
    %s368 = scalar_select %p365, %s366, %s367
    %p371 = pneg %p365
    %p372 = scmp.eq.s32.totalorder %s23, 2
    %p373 = por %p371, %p372
    %p374 = scmp.ne.s32.totalorder %s366, %s369
    %p375 = scmp.eq.s32.totalorder %s23, 0
    %p376 = por %p374, %p375
    %p377 = scmp.ne.s32.totalorder %s366, %s369
    %p378 = scmp.eq.s32.totalorder %s28, 2
    %p379 = por %p377, %p378
    %p380 = scmp.ne.s32.totalorder %s369, %s370
    %p381 = scmp.eq.s32.totalorder %s28, 0
    %p382 = por %p380, %p381
    %p383 = scmp.ne.s32.totalorder %s369, %s370
    %p384 = scmp.eq.s32.totalorder %s29, 2
    %p385 = por %p383, %p384
    %p387 = scmp.ne.s32.totalorder %s370, %s386
    %p388 = scmp.eq.s32.totalorder %s29, 0
    %p389 = por %p387, %p388
    %s390 = ssub.s32 %s23, %s30
    %p391 = scmp.eq.s32.totalorder %s390, 0
    %s393 = sadd.s32 %s392, 1
    %s394 = scalar_select %p391, %s392, %s393
    %p397 = pneg %p391
    %p398 = scmp.eq.s32.totalorder %s23, 2
    %p399 = por %p397, %p398
    %p400 = scmp.ne.s32.totalorder %s392, %s395
    %p401 = scmp.eq.s32.totalorder %s23, 0
    %p402 = por %p400, %p401
    %p403 = scmp.ne.s32.totalorder %s392, %s395
    %p404 = scmp.eq.s32.totalorder %s28, 2
    %p405 = por %p403, %p404
    %p406 = scmp.ne.s32.totalorder %s395, %s396
    %p407 = scmp.eq.s32.totalorder %s28, 0
    %p408 = por %p406, %p407
    %p409 = scmp.ne.s32.totalorder %s395, %s396
    %p410 = scmp.eq.s32.totalorder %s29, 2
    %p411 = por %p409, %p410
    %p413 = scmp.ne.s32.totalorder %s396, %s412
    %p414 = scmp.eq.s32.totalorder %s29, 0
    %p415 = por %p413, %p414
    %s416 = ssub.s32 %s23, %s30
    %p417 = scmp.eq.s32.totalorder %s416, 0
    %s419 = sadd.s32 %s418, 1
    %s420 = scalar_select %p417, %s418, %s419
    %p423 = pneg %p417
    %p424 = scmp.eq.s32.totalorder %s23, 2
    %p425 = por %p423, %p424
    %p426 = scmp.ne.s32.totalorder %s418, %s421
    %p427 = scmp.eq.s32.totalorder %s23, 0
    %p428 = por %p426, %p427
    %p429 = scmp.ne.s32.totalorder %s418, %s421
    %p430 = scmp.eq.s32.totalorder %s28, 2
    %p431 = por %p429, %p430
    %p432 = scmp.ne.s32.totalorder %s421, %s422
    %p433 = scmp.eq.s32.totalorder %s28, 0
    %p434 = por %p432, %p433
    %p435 = scmp.ne.s32.totalorder %s421, %s422
    %p436 = scmp.eq.s32.totalorder %s29, 2
    %p437 = por %p435, %p436
    %p439 = scmp.ne.s32.totalorder %s422, %s438
    %p440 = scmp.eq.s32.totalorder %s29, 0
    %p441 = por %p439, %p440
    %s442 = ssub.s32 %s23, %s30
    %p443 = scmp.eq.s32.totalorder %s442, 0
    %s445 = sadd.s32 %s444, 1
    %s446 = scalar_select %p443, %s444, %s445
    %p449 = pneg %p443
    %p450 = scmp.eq.s32.totalorder %s23, 2
    %p451 = por %p449, %p450
    %p452 = scmp.ne.s32.totalorder %s444, %s447
    %p453 = scmp.eq.s32.totalorder %s23, 0
    %p454 = por %p452, %p453
    %p455 = scmp.ne.s32.totalorder %s444, %s447
    %p456 = scmp.eq.s32.totalorder %s28, 2
    %p457 = por %p455, %p456
    %p458 = scmp.ne.s32.totalorder %s447, %s448
    %p459 = scmp.eq.s32.totalorder %s28, 0
    %p460 = por %p458, %p459
    %p461 = scmp.ne.s32.totalorder %s447, %s448
    %p462 = scmp.eq.s32.totalorder %s29, 2
    %p463 = por %p461, %p462
    %p465 = scmp.ne.s32.totalorder %s448, %s464
    %p466 = scmp.eq.s32.totalorder %s29, 0
    %p467 = por %p465, %p466
    %s468 = ssub.s32 %s23, %s30
    %p469 = scmp.eq.s32.totalorder %s468, 0
    %s471 = sadd.s32 %s470, 1
    %s472 = scalar_select %p469, %s470, %s471
    %p475 = pneg %p469
    %p476 = scmp.eq.s32.totalorder %s23, 2
    %p477 = por %p475, %p476
    %p478 = scmp.ne.s32.totalorder %s470, %s473
    %p479 = scmp.eq.s32.totalorder %s23, 0
    %p480 = por %p478, %p479
    %p481 = scmp.ne.s32.totalorder %s470, %s473
    %p482 = scmp.eq.s32.totalorder %s28, 2
    %p483 = por %p481, %p482
    %p484 = scmp.ne.s32.totalorder %s473, %s474
    %p485 = scmp.eq.s32.totalorder %s28, 0
    %p486 = por %p484, %p485
    %p487 = scmp.ne.s32.totalorder %s473, %s474
    %p488 = scmp.eq.s32.totalorder %s29, 2
    %p489 = por %p487, %p488
    %p491 = scmp.ne.s32.totalorder %s474, %s490
    %p492 = scmp.eq.s32.totalorder %s29, 0
    %p493 = por %p491, %p492
    %p494 = scmp.le.s32.totalorder 1, %s23
    %p495 = scmp.lt.s32.totalorder %s23, 4
    %p496 = pnand %p494, %p495
    %p497 = pneg %p496
    // Predicated region
    $region9: #{multiemo_core.6} parent=5 // pred_check
      _
    $region10: #{multiemo_core.6} parent=5 // pred_check_branch
      %499 = sbr.rel (%p496) target = $region12
    $region11: #{multiemo_core.6} parent=5 // pred_region
      %s500 = ssub.s32 %s23, 1
      // Predicated region
      $region13: #{multiemo_core.6} parent=11 // pred_check
        %p501 = pneg %p44
      $region14: #{multiemo_core.6} parent=11 // pred_check_branch
        %503 = sbr.rel (%p501) target = $region16
      $region15: #{multiemo_core.6} parent=11 // pred_region
        _
      $region16: #{multiemo_core.6} parent=11 // pred_fallthru
        _
    $region12: #{multiemo_core.6} parent=5 // pred_fallthru
      _
    %p504 = scmp.lt.s32.totalorder %s23, 3
    // Predicated region
    $region17: #{multiemo_core.6} parent=5 // pred_check
      %p505 = pneg %p504
    $region18: #{multiemo_core.6} parent=5 // pred_check_branch
      %507 = sbr.rel (%p505) target = $region20
    $region19: #{multiemo_core.6} parent=5 // pred_region
      // Predicated region
      $region21: #{multiemo_core.6} parent=19 // pred_check
        %p508 = pneg %p64
      $region22: #{multiemo_core.6} parent=19 // pred_check_branch
        %510 = sbr.rel (%p508) target = $region24
      $region23: #{multiemo_core.6} parent=19 // pred_region
        %p511 = scmp.lt.s32.totalorder %s23, 2
        %s512 = scalar_select %p511, %s23, 2
        %s513 = smul.addr %s512, 4
        %s514 = smul.addr %s513, 4
        %s515 = scalar_lea.vmem %s1, %s514
      $region24: #{multiemo_core.6} parent=19 // pred_fallthru
        _
      // Predicated region
      $region25: #{multiemo_core.6} parent=19 // pred_check
        %p516 = pneg %p90
      $region26: #{multiemo_core.6} parent=19 // pred_check_branch
        %518 = sbr.rel (%p516) target = $region28
      $region27: #{multiemo_core.6} parent=19 // pred_region
        %p519 = scmp.lt.s32.totalorder %s23, 2
        %s520 = scalar_select %p519, %s23, 2
        %s521 = scalar_lea.vmem %s2, %s520
      $region28: #{multiemo_core.6} parent=19 // pred_fallthru
        _
      // Predicated region
      $region29: #{multiemo_core.6} parent=19 // pred_check
        %p522 = pneg %p116
      $region30: #{multiemo_core.6} parent=19 // pred_check_branch
        %524 = sbr.rel (%p522) target = $region32
      $region31: #{multiemo_core.6} parent=19 // pred_region
        %p525 = scmp.lt.s32.totalorder %s23, 2
        %s526 = scalar_select %p525, %s23, 2
        %s527 = smul.addr %s526, 4
        %s528 = smul.addr %s527, 4
        %s529 = scalar_lea.vmem %s3, %s528
      $region32: #{multiemo_core.6} parent=19 // pred_fallthru
        _
      // Predicated region
      $region33: #{multiemo_core.6} parent=19 // pred_check
        %p530 = pneg %p142
      $region34: #{multiemo_core.6} parent=19 // pred_check_branch
        %532 = sbr.rel (%p530) target = $region36
      $region35: #{multiemo_core.6} parent=19 // pred_region
        %p533 = scmp.lt.s32.totalorder %s23, 2
        %s534 = scalar_select %p533, %s23, 2
        %s535 = scalar_lea.vmem %s4, %s534
      $region36: #{multiemo_core.6} parent=19 // pred_fallthru
        _
      // Predicated region
      $region37: #{multiemo_core.6} parent=19 // pred_check
        %p536 = pneg %p168
      $region38: #{multiemo_core.6} parent=19 // pred_check_branch
        %538 = sbr.rel (%p536) target = $region40
      $region39: #{multiemo_core.6} parent=19 // pred_region
        %p539 = scmp.lt.s32.totalorder %s23, 2
        %s540 = scalar_select %p539, %s23, 2
        %s541 = smul.addr %s540, 4
        %s542 = smul.addr %s541, 4
        %s543 = scalar_lea.vmem %s5, %s542
      $region40: #{multiemo_core.6} parent=19 // pred_fallthru
        _
      // Predicated region
      $region41: #{multiemo_core.6} parent=19 // pred_check
        %p544 = pneg %p194
      $region42: #{multiemo_core.6} parent=19 // pred_check_branch
        %546 = sbr.rel (%p544) target = $region44
      $region43: #{multiemo_core.6} parent=19 // pred_region
        %p547 = scmp.lt.s32.totalorder %s23, 2
        %s548 = scalar_select %p547, %s23, 2
        %s549 = scalar_lea.vmem %s6, %s548
      $region44: #{multiemo_core.6} parent=19 // pred_fallthru
        _
      // Predicated region
      $region45: #{multiemo_core.6} parent=19 // pred_check
        %p550 = pneg %p220
      $region46: #{multiemo_core.6} parent=19 // pred_check_branch
        %552 = sbr.rel (%p550) target = $region48
      $region47: #{multiemo_core.6} parent=19 // pred_region
        %p553 = scmp.lt.s32.totalorder %s23, 2
        %s554 = scalar_select %p553, %s23, 2
        %s555 = smul.addr %s554, 4
        %s556 = smul.addr %s555, 4
        %s557 = scalar_lea.vmem %s7, %s556
      $region48: #{multiemo_core.6} parent=19 // pred_fallthru
        _
      // Predicated region
      $region49: #{multiemo_core.6} parent=19 // pred_check
        %p558 = pneg %p246
      $region50: #{multiemo_core.6} parent=19 // pred_check_branch
        %560 = sbr.rel (%p558) target = $region52
      $region51: #{multiemo_core.6} parent=19 // pred_region
        %p561 = scmp.lt.s32.totalorder %s23, 2
        %s562 = scalar_select %p561, %s23, 2
        %s563 = scalar_lea.vmem %s8, %s562
      $region52: #{multiemo_core.6} parent=19 // pred_fallthru
        _
      // Predicated region
      $region53: #{multiemo_core.6} parent=19 // pred_check
        %p564 = pneg %p272
      $region54: #{multiemo_core.6} parent=19 // pred_check_branch
        %566 = sbr.rel (%p564) target = $region56
      $region55: #{multiemo_core.6} parent=19 // pred_region
        %p567 = scmp.lt.s32.totalorder %s23, 2
        %s568 = scalar_select %p567, %s23, 2
        %s569 = scalar_lea.vmem %s9, %s568
      $region56: #{multiemo_core.6} parent=19 // pred_fallthru
        _
      // Predicated region
      $region57: #{multiemo_core.6} parent=19 // pred_check
        %p570 = pneg %p298
      $region58: #{multiemo_core.6} parent=19 // pred_check_branch
        %572 = sbr.rel (%p570) target = $region60
      $region59: #{multiemo_core.6} parent=19 // pred_region
        %p573 = scmp.lt.s32.totalorder %s23, 2
        %s574 = scalar_select %p573, %s23, 2
        %s575 = scalar_lea.vmem %s10, %s574
      $region60: #{multiemo_core.6} parent=19 // pred_fallthru
        _
      // Predicated region
      $region61: #{multiemo_core.6} parent=19 // pred_check
        %p576 = pneg %p324
      $region62: #{multiemo_core.6} parent=19 // pred_check_branch
        %578 = sbr.rel (%p576) target = $region64
      $region63: #{multiemo_core.6} parent=19 // pred_region
        %p579 = scmp.lt.s32.totalorder %s23, 2
        %s580 = scalar_select %p579, %s23, 2
        %s581 = smul.addr %s580, 4
        %s582 = smul.addr %s581, 4
        %s583 = scalar_lea.vmem %s11, %s582
      $region64: #{multiemo_core.6} parent=19 // pred_fallthru
        _
      // Predicated region
      $region65: #{multiemo_core.6} parent=19 // pred_check
        %p584 = pneg %p350
      $region66: #{multiemo_core.6} parent=19 // pred_check_branch
        %586 = sbr.rel (%p584) target = $region68
      $region67: #{multiemo_core.6} parent=19 // pred_region
        %p587 = scmp.lt.s32.totalorder %s23, 2
        %s588 = scalar_select %p587, %s23, 2
        %s589 = scalar_lea.vmem %s12, %s588
      $region68: #{multiemo_core.6} parent=19 // pred_fallthru
        _
      // Predicated region
      $region69: #{multiemo_core.6} parent=19 // pred_check
        %p590 = pneg %p376
      $region70: #{multiemo_core.6} parent=19 // pred_check_branch
        %592 = sbr.rel (%p590) target = $region72
      $region71: #{multiemo_core.6} parent=19 // pred_region
        %p593 = scmp.lt.s32.totalorder %s23, 2
        %s594 = scalar_select %p593, %s23, 2
        %s595 = smul.addr %s594, 8
        %s596 = smul.addr %s595, 4
        %s597 = scalar_lea.vmem %s13, %s596
      $region72: #{multiemo_core.6} parent=19 // pred_fallthru
        _
      // Predicated region
      $region73: #{multiemo_core.6} parent=19 // pred_check
        %p598 = pneg %p402
      $region74: #{multiemo_core.6} parent=19 // pred_check_branch
        %600 = sbr.rel (%p598) target = $region76
      $region75: #{multiemo_core.6} parent=19 // pred_region
        %p601 = scmp.lt.s32.totalorder %s23, 2
        %s602 = scalar_select %p601, %s23, 2
        %s603 = scalar_lea.vmem %s14, %s602
      $region76: #{multiemo_core.6} parent=19 // pred_fallthru
        _
      // Predicated region
      $region77: #{multiemo_core.6} parent=19 // pred_check
        %p604 = pneg %p428
      $region78: #{multiemo_core.6} parent=19 // pred_check_branch
        %606 = sbr.rel (%p604) target = $region80
      $region79: #{multiemo_core.6} parent=19 // pred_region
        %p607 = scmp.lt.s32.totalorder %s23, 2
        %s608 = scalar_select %p607, %s23, 2
        %s609 = scalar_lea.vmem %s15, %s608
      $region80: #{multiemo_core.6} parent=19 // pred_fallthru
        _
      // Predicated region
      $region81: #{multiemo_core.6} parent=19 // pred_check
        %p610 = pneg %p454
      $region82: #{multiemo_core.6} parent=19 // pred_check_branch
        %612 = sbr.rel (%p610) target = $region84
      $region83: #{multiemo_core.6} parent=19 // pred_region
        %p613 = scmp.lt.s32.totalorder %s23, 2
        %s614 = scalar_select %p613, %s23, 2
        %s615 = scalar_lea.vmem %s16, %s614
      $region84: #{multiemo_core.6} parent=19 // pred_fallthru
        _
    $region20: #{multiemo_core.6} parent=5 // pred_fallthru
      _
    %p616 = scmp.le.s32.totalorder 1, %s23
    %p617 = scmp.lt.s32.totalorder %s23, 4
    %p618 = pnand %p616, %p617
    %p619 = pneg %p618
    // Predicated region
    $region85: #{multiemo_core.6} parent=5 // pred_check
      _
    $region86: #{multiemo_core.6} parent=5 // pred_check_branch
      %621 = sbr.rel (%p618) target = $region88
    $region87: #{multiemo_core.6} parent=5 // pred_region
      %s622 = ssub.s32 %s23, 1
      %p623 = pneg %p44
      %p624 = pneg %p41
      %p625 = scmp.lt.s32.totalorder %s28, 2
      %s626 = scalar_select %p625, %s28, 2
      %s627 = smul.addr %s626, 4
      %s628 = smul.addr %s627, 4
      %s629 = scalar_lea.vmem %s1, %s628
      %p630 = pneg %p70
      %p631 = pneg %p67
      %p632 = scmp.lt.s32.totalorder %s28, 2
      %s633 = scalar_select %p632, %s28, 2
      %s634 = scalar_lea.vmem %s2, %s633
      %p635 = pneg %p96
      %p636 = pneg %p93
      %p637 = scmp.lt.s32.totalorder %s28, 2
      %s638 = scalar_select %p637, %s28, 2
      %s639 = smul.addr %s638, 4
      %s640 = smul.addr %s639, 4
      %s641 = scalar_lea.vmem %s3, %s640
      %p642 = pneg %p122
      %p643 = pneg %p119
      %p644 = scmp.lt.s32.totalorder %s28, 2
      %s645 = scalar_select %p644, %s28, 2
      %s646 = scalar_lea.vmem %s4, %s645
      %p647 = pneg %p148
      %p648 = pneg %p145
      %p649 = scmp.lt.s32.totalorder %s28, 2
      %s650 = scalar_select %p649, %s28, 2
      %s651 = smul.addr %s650, 4
      %s652 = smul.addr %s651, 4
      %s653 = scalar_lea.vmem %s5, %s652
      %p654 = pneg %p174
      %p655 = pneg %p171
      %p656 = scmp.lt.s32.totalorder %s28, 2
      %s657 = scalar_select %p656, %s28, 2
      %s658 = scalar_lea.vmem %s6, %s657
      %p659 = pneg %p200
      %p660 = pneg %p197
      %p661 = scmp.lt.s32.totalorder %s28, 2
      %s662 = scalar_select %p661, %s28, 2
      %s663 = smul.addr %s662, 4
      %s664 = smul.addr %s663, 4
      %s665 = scalar_lea.vmem %s7, %s664
      %p666 = pneg %p226
      %p667 = pneg %p223
      %p668 = scmp.lt.s32.totalorder %s28, 2
      %s669 = scalar_select %p668, %s28, 2
      %s670 = scalar_lea.vmem %s8, %s669
      %p671 = pneg %p252
      %p672 = pneg %p249
      %p673 = scmp.lt.s32.totalorder %s28, 2
      %s674 = scalar_select %p673, %s28, 2
      %s675 = scalar_lea.vmem %s9, %s674
      %p676 = pneg %p278
      %p677 = pneg %p275
      %p678 = scmp.lt.s32.totalorder %s28, 2
      %s679 = scalar_select %p678, %s28, 2
      %s680 = scalar_lea.vmem %s10, %s679
      %p681 = pneg %p304
      %p682 = pneg %p301
      %p683 = scmp.lt.s32.totalorder %s28, 2
      %s684 = scalar_select %p683, %s28, 2
      %s685 = smul.addr %s684, 4
      %s686 = smul.addr %s685, 4
      %s687 = scalar_lea.vmem %s11, %s686
      %p688 = pneg %p330
      %p689 = pneg %p327
      %p690 = scmp.lt.s32.totalorder %s28, 2
      %s691 = scalar_select %p690, %s28, 2
      %s692 = scalar_lea.vmem %s12, %s691
      %p693 = pneg %p356
      %p694 = pneg %p353
      %p695 = scmp.lt.s32.totalorder %s28, 2
      %s696 = scalar_select %p695, %s28, 2
      %s697 = smul.addr %s696, 8
      %s698 = smul.addr %s697, 4
      %s699 = scalar_lea.vmem %s13, %s698
      %p700 = pneg %p382
      %p701 = pneg %p379
      %p702 = scmp.lt.s32.totalorder %s28, 2
      %s703 = scalar_select %p702, %s28, 2
      %s704 = scalar_lea.vmem %s14, %s703
      %p705 = pneg %p408
      %p706 = pneg %p405
      %p707 = scmp.lt.s32.totalorder %s28, 2
      %s708 = scalar_select %p707, %s28, 2
      %s709 = scalar_lea.vmem %s15, %s708
      %p710 = pneg %p434
      %p711 = pneg %p431
      %p712 = scmp.lt.s32.totalorder %s28, 2
      %s713 = scalar_select %p712, %s28, 2
      %s714 = scalar_lea.vmem %s16, %s713
      %p715 = pneg %p460
      %p716 = pneg %p457
      %p717 = pneg %p486
      %p718 = pneg %p483
      %p719 = scmp.lt.s32.totalorder %s28, 2
      %s720 = scalar_select %p719, %s28, 2
      %s721 = smul.addr %s720, 2
      %s722 = smul.addr %s721, 8
      %s723 = scalar_lea.vmem %s17, %s722
      %p724 = scmp.lt.s32.totalorder %s28, 2
      %s725 = scalar_select %p724, %s28, 2
      %s726 = smul.addr %s725, 4
      %s727 = smul.addr %s726, 4
      %s728 = scalar_lea.vmem %s1, %s727
      %p729 = scmp.lt.s32.totalorder %s28, 2
      %s730 = scalar_select %p729, %s28, 2
      %s731 = scalar_lea.vmem %s2, %s730
      %p732 = scmp.lt.s32.totalorder %s28, 2
      %s733 = scalar_select %p732, %s28, 2
      %s734 = smul.addr %s733, 4
      %s735 = smul.addr %s734, 4
      %s736 = scalar_lea.vmem %s3, %s735
      %p737 = scmp.lt.s32.totalorder %s28, 2
      %s738 = scalar_select %p737, %s28, 2
      %s739 = scalar_lea.vmem %s4, %s738
      %p740 = scmp.lt.s32.totalorder %s28, 2
      %s741 = scalar_select %p740, %s28, 2
      %s742 = smul.addr %s741, 4
      %s743 = smul.addr %s742, 4
      %s744 = scalar_lea.vmem %s5, %s743
      %p745 = scmp.lt.s32.totalorder %s28, 2
      %s746 = scalar_select %p745, %s28, 2
      %s747 = scalar_lea.vmem %s6, %s746
      %p748 = scmp.lt.s32.totalorder %s28, 2
      %s749 = scalar_select %p748, %s28, 2
      %s750 = smul.addr %s749, 4
      %s751 = smul.addr %s750, 4
      %s752 = scalar_lea.vmem %s7, %s751
      %p753 = scmp.lt.s32.totalorder %s28, 2
      %s754 = scalar_select %p753, %s28, 2
      %s755 = scalar_lea.vmem %s8, %s754
      %p756 = scmp.lt.s32.totalorder %s28, 2
      %s757 = scalar_select %p756, %s28, 2
      %s758 = scalar_lea.vmem %s9, %s757
      %p759 = scmp.lt.s32.totalorder %s28, 2
      %s760 = scalar_select %p759, %s28, 2
      %s761 = scalar_lea.vmem %s10, %s760
      %p762 = scmp.lt.s32.totalorder %s28, 2
      %s763 = scalar_select %p762, %s28, 2
      %s764 = smul.addr %s763, 4
      %s765 = smul.addr %s764, 4
      %s766 = scalar_lea.vmem %s11, %s765
      %p767 = scmp.lt.s32.totalorder %s28, 2
      %s768 = scalar_select %p767, %s28, 2
      %s769 = scalar_lea.vmem %s12, %s768
      %p770 = scmp.lt.s32.totalorder %s28, 2
      %s771 = scalar_select %p770, %s28, 2
      %s772 = smul.addr %s771, 8
      %s773 = smul.addr %s772, 4
      %s774 = scalar_lea.vmem %s13, %s773
      %p775 = scmp.lt.s32.totalorder %s28, 2
      %s776 = scalar_select %p775, %s28, 2
      %s777 = scalar_lea.vmem %s14, %s776
      %p778 = scmp.lt.s32.totalorder %s28, 2
      %s779 = scalar_select %p778, %s28, 2
      %s780 = scalar_lea.vmem %s15, %s779
      %p781 = scmp.lt.s32.totalorder %s28, 2
      %s782 = scalar_select %p781, %s28, 2
      %s783 = scalar_lea.vmem %s16, %s782
      %p784 = scmp.lt.s32.totalorder %s28, 2
      %s785 = scalar_select %p784, %s28, 2
      %s786 = smul.addr %s785, 2
      %s787 = smul.addr %s786, 8
      %s788 = scalar_lea.vmem %s17, %s787
      %s790 = smul.u32 %s28, 16
      %s791 = scalar_lea.vmem %s0, %s790
      %v792 = vld [vmem:[%s791] sm:$0xff]
      %v793 = vld [vmem:[%s791 + $0x8] sm:$0xff]
      %s794 = sadd.s32 %s28, 1
      %p795 = scmp.lt.s32.totalorder %s794, 0
      %s796 = ssub.s32 0, %s794
      %s797 = scalar_select %p795, %s796, %s794
      %s798 = sdiv.u32.pop %s797, 3
      %s799 = srem.u32.pop %s797, 3
      %s800 = ssub.s32 0, %s799
      %s801 = scalar_select %p795, %s800, %s799
      %p802 = scmp.ne.s32.totalorder %s801, 0
      %p803 = scmp.lt.s32.totalorder %s801, 0
      %p804 = pnand %p803, %p802
      %p805 = pneg %p804
      %s806 = sadd.s32 %s801, 3
      %s807 = scalar_select %p805, %s806, %s801
      %s808 = smul.u32 %s807, 16
      %s809 = scalar_lea.vmem %s0, %s808
      %v810 = vld [vmem:[%s809] sm:$0xff]
      %v811 = vld [vmem:[%s809 + $0x8] sm:$0xff]
      %s812 = sadd.s32 %s28, 2
      %p813 = scmp.lt.s32.totalorder %s812, 0
      %s814 = ssub.s32 0, %s812
      %s815 = scalar_select %p813, %s814, %s812
      %s816 = sdiv.u32.pop %s815, 3
      %s817 = srem.u32.pop %s815, 3
      %s818 = ssub.s32 0, %s817
      %s819 = scalar_select %p813, %s818, %s817
      %p820 = scmp.ne.s32.totalorder %s819, 0
      %p821 = scmp.lt.s32.totalorder %s819, 0
      %p822 = pnand %p821, %p820
      %p823 = pneg %p822
      %s824 = sadd.s32 %s819, 3
      %s825 = scalar_select %p823, %s824, %s819
      %s826 = smul.u32 %s825, 16
      %s827 = scalar_lea.vmem %s0, %s826
      %v828 = vld [vmem:[%s827] sm:$0xff]
      %v829 = vld [vmem:[%s827 + $0x8] sm:$0xff]
      %v830 = vld [vmem:[%s728] sm:$0xf]
      %v831 = vld [vmem:[%s728 + $0x4] sm:$0xf]
      %v832 = vld [vmem:[%s728 + $0x8] sm:$0xf]
      %v833 = vld [vmem:[%s728 + $0xc] sm:$0xf]
      %v834 = vpack.c.bf16 %v793, %v792
      %v835 = vld [vmem:[%s731] sm:$0x1]
      %v837 = vlaneseq
      %v838 = vshrl.u32 %v837, 7
      %v839 = vsub.s32 0, %v838
      %v840 = vrot.slane %v835, %v839
      %v846 = vunpack.c.l.b16 %v830
      %v847 = vunpack.c.l.b16 %v831
      %v848 = vunpack.c.l.b16 %v832
      %v849 = vunpack.c.l.b16 %v833
      %v850 = vpack.c.b16 %v847, %v846
      %v851 = vpack.c.b16 %v849, %v848
      %vm854 = vcmask 261120
      %v856 = vsel %vm854, %v834, 0
      %858 = vmatprep.subr.bf16.mxu0 0
      %859 = vmatpush1.bf16.msra.mxu0 %v850
      %860 = vmatprep.subr.bf16.mxu0 0
      %861 = vmatpush1.bf16.msra.mxu0 %v851
      %862 = vmatprep.subr.bf16.mxu0 0
      %863 = vmatpush1.bf16.msra.mxu0 0
      %864 = vmatprep.subr.bf16.mxu0 0
      %865 = vmatpush1.bf16.msra.mxu0 0
      %866 = vmatprep.subr.bf16.mxu0 0
      %867 = vmatpush1.bf16.msra.mxu0 0
      %868 = vmatprep.subr.bf16.mxu0 0
      %869 = vmatpush1.bf16.msra.mxu0 0
      %870 = vmatprep.subr.bf16.mxu0 0
      %871 = vmatpush1.bf16.msra.mxu0 0
      %872 = vmatprep.subr.bf16.mxu0 0
      %873 = vmatpush1.bf16.msra.mxu0 0
      %874 = vmatprep.subr.bf16.mxu0 0
      %875 = vmatpush1.bf16.msra.mxu0 0
      %876 = vmatprep.subr.bf16.mxu0 0
      %877 = vmatpush1.bf16.msra.mxu0 0
      %878 = vmatprep.subr.bf16.mxu0 0
      %879 = vmatpush1.bf16.msra.mxu0 0
      %880 = vmatprep.subr.bf16.mxu0 0
      %881 = vmatpush1.bf16.msra.mxu0 0
      %882 = vmatprep.subr.bf16.mxu0 0
      %883 = vmatpush1.bf16.msra.mxu0 0
      %884 = vmatprep.subr.bf16.mxu0 0
      %885 = vmatpush1.bf16.msra.mxu0 0
      %886 = vmatprep.subr.bf16.mxu0 0
      %887 = vmatpush1.bf16.msra.mxu0 0
      %888 = vmatprep.subr.bf16.mxu0 0
      %889 = vmatpush1.bf16.msra.mxu0 0
      %890 = vmatprep.mubr.bf16.mxu0 0
      %891 = vmatmul.mubr.bf16.gmra.mrb[0].mxu0 %v856
      %v892 = vpop.f32.mrb[0].mxu0
      %v893 = vadd.f32 %v840, %v892
      %v894 = vpop.f32.mrb[0].mxu0
      %v895 = vpop.f32.mrb[0].mxu0
      %v896 = vadd.f32 %v840, %v895
      %v897 = vpop.f32.mrb[0].mxu0
      %898 = vdwg.mxu0
      %v899 = vld [vmem:[%s736] sm:$0xf]
      %v900 = vld [vmem:[%s736 + $0x4] sm:$0xf]
      %v901 = vld [vmem:[%s736 + $0x8] sm:$0xf]
      %v902 = vld [vmem:[%s736 + $0xc] sm:$0xf]
      %v903 = vpack.c.bf16 %v828, %v810
      %v904 = vpack.c.bf16 %v829, %v811
      %v905 = vld [vmem:[%s739] sm:$0x1]
      %v907 = vlaneseq
      %v908 = vshrl.u32 %v907, 7
      %v909 = vsub.s32 0, %v908
      %v910 = vrot.slane %v905, %v909
      %v916 = vunpack.c.l.b16 %v899
      %v917 = vunpack.c.l.b16 %v900
      %v918 = vunpack.c.l.b16 %v901
      %v919 = vunpack.c.l.b16 %v902
      %v920 = vpack.c.b16 %v917, %v916
      %v921 = vpack.c.b16 %v919, %v918
      %v925 = vsel %vm854, %v903, 0
      %v928 = vsel %vm854, %v904, 0
      %930 = vmatprep.subr.bf16.mxu0 0
      %931 = vmatpush1.bf16.msra.mxu0 %v920
      %932 = vmatprep.subr.bf16.mxu0 0
      %933 = vmatpush1.bf16.msra.mxu0 %v921
      %934 = vmatprep.subr.bf16.mxu0 0
      %935 = vmatpush1.bf16.msra.mxu0 0
      %936 = vmatprep.subr.bf16.mxu0 0
      %937 = vmatpush1.bf16.msra.mxu0 0
      %938 = vmatprep.subr.bf16.mxu0 0
      %939 = vmatpush1.bf16.msra.mxu0 0
      %940 = vmatprep.subr.bf16.mxu0 0
      %941 = vmatpush1.bf16.msra.mxu0 0
      %942 = vmatprep.subr.bf16.mxu0 0
      %943 = vmatpush1.bf16.msra.mxu0 0
      %944 = vmatprep.subr.bf16.mxu0 0
      %945 = vmatpush1.bf16.msra.mxu0 0
      %946 = vmatprep.subr.bf16.mxu0 0
      %947 = vmatpush1.bf16.msra.mxu0 0
      %948 = vmatprep.subr.bf16.mxu0 0
      %949 = vmatpush1.bf16.msra.mxu0 0
      %950 = vmatprep.subr.bf16.mxu0 0
      %951 = vmatpush1.bf16.msra.mxu0 0
      %952 = vmatprep.subr.bf16.mxu0 0
      %953 = vmatpush1.bf16.msra.mxu0 0
      %954 = vmatprep.subr.bf16.mxu0 0
      %955 = vmatpush1.bf16.msra.mxu0 0
      %956 = vmatprep.subr.bf16.mxu0 0
      %957 = vmatpush1.bf16.msra.mxu0 0
      %958 = vmatprep.subr.bf16.mxu0 0
      %959 = vmatpush1.bf16.msra.mxu0 0
      %960 = vmatprep.subr.bf16.mxu0 0
      %961 = vmatpush1.bf16.msra.mxu0 0
      %962 = vmatprep.mubr.bf16.mxu0 0
      %963 = vmatmul.mubr.bf16.gmra.mrb[0].mxu0 %v925
      %v964 = vpop.f32.mrb[0].mxu0
      %v965 = vadd.f32 %v910, %v964
      %v966 = vpop.f32.mrb[0].mxu0
      %v967 = vpop.f32.mrb[0].mxu0
      %v968 = vadd.f32 %v910, %v967
      %v969 = vpop.f32.mrb[0].mxu0
      %970 = vmatprep.mubr.bf16.mxu0 0
      %971 = vmatmul.mubr.bf16.gmra.mrb[0].mxu0 %v928
      %v972 = vpop.f32.mrb[0].mxu0
      %v973 = vadd.f32 %v910, %v972
      %v974 = vpop.f32.mrb[0].mxu0
      %v975 = vpop.f32.mrb[0].mxu0
      %v976 = vadd.f32 %v910, %v975
      %v977 = vpop.f32.mrb[0].mxu0
      %978 = vdwg.mxu0
      %v979 = vld [vmem:[%s744] sm:$0xf]
      %v980 = vld [vmem:[%s744 + $0x4] sm:$0xf]
      %v981 = vld [vmem:[%s744 + $0x8] sm:$0xf]
      %v982 = vld [vmem:[%s744 + $0xc] sm:$0xf]
      %v983 = vld [vmem:[%s747] sm:$0x1]
      %v985 = vlaneseq
      %v986 = vshrl.u32 %v985, 7
      %v987 = vsub.s32 0, %v986
      %v988 = vrot.slane %v983, %v987
      %v994 = vunpack.c.l.b16 %v979
      %v995 = vunpack.c.l.b16 %v980
      %v996 = vunpack.c.l.b16 %v981
      %v997 = vunpack.c.l.b16 %v982
      %v998 = vpack.c.b16 %v995, %v994
      %v999 = vpack.c.b16 %v997, %v996
      %1002 = vmatprep.subr.bf16.mxu0 0
      %1003 = vmatpush1.bf16.msra.mxu0 %v998
      %1004 = vmatprep.subr.bf16.mxu0 0
      %1005 = vmatpush1.bf16.msra.mxu0 %v999
      %1006 = vmatprep.subr.bf16.mxu0 0
      %1007 = vmatpush1.bf16.msra.mxu0 0
      %1008 = vmatprep.subr.bf16.mxu0 0
      %1009 = vmatpush1.bf16.msra.mxu0 0
      %1010 = vmatprep.subr.bf16.mxu0 0
      %1011 = vmatpush1.bf16.msra.mxu0 0
      %1012 = vmatprep.subr.bf16.mxu0 0
      %1013 = vmatpush1.bf16.msra.mxu0 0
      %1014 = vmatprep.subr.bf16.mxu0 0
      %1015 = vmatpush1.bf16.msra.mxu0 0
      %1016 = vmatprep.subr.bf16.mxu0 0
      %1017 = vmatpush1.bf16.msra.mxu0 0
      %1018 = vmatprep.subr.bf16.mxu0 0
      %1019 = vmatpush1.bf16.msra.mxu0 0
      %1020 = vmatprep.subr.bf16.mxu0 0
      %1021 = vmatpush1.bf16.msra.mxu0 0
      %1022 = vmatprep.subr.bf16.mxu0 0
      %1023 = vmatpush1.bf16.msra.mxu0 0
      %1024 = vmatprep.subr.bf16.mxu0 0
      %1025 = vmatpush1.bf16.msra.mxu0 0
      %1026 = vmatprep.subr.bf16.mxu0 0
      %1027 = vmatpush1.bf16.msra.mxu0 0
      %1028 = vmatprep.subr.bf16.mxu0 0
      %1029 = vmatpush1.bf16.msra.mxu0 0
      %1030 = vmatprep.subr.bf16.mxu0 0
      %1031 = vmatpush1.bf16.msra.mxu0 0
      %1032 = vmatprep.subr.bf16.mxu0 0
      %1033 = vmatpush1.bf16.msra.mxu0 0
      %1034 = vmatprep.mubr.bf16.mxu0 0
      %1035 = vmatmul.mubr.bf16.gmra.mrb[0].mxu0 %v925
      %v1036 = vpop.f32.mrb[0].mxu0
      %v1037 = vadd.f32 %v988, %v1036
      %v1038 = vpop.f32.mrb[0].mxu0
      %v1039 = vpop.f32.mrb[0].mxu0
      %v1040 = vadd.f32 %v988, %v1039
      %v1041 = vpop.f32.mrb[0].mxu0
      %1042 = vmatprep.mubr.bf16.mxu0 0
      %1043 = vmatmul.mubr.bf16.gmra.mrb[0].mxu0 %v928
      %v1044 = vpop.f32.mrb[0].mxu0
      %v1045 = vadd.f32 %v988, %v1044
      %v1046 = vpop.f32.mrb[0].mxu0
      %v1047 = vpop.f32.mrb[0].mxu0
      %v1048 = vadd.f32 %v988, %v1047
      %v1049 = vpop.f32.mrb[0].mxu0
      %1050 = vdwg.mxu0
      %vm1051 = vcmask 64512
      %v1053 = vsel %vm1051, %v893, 0
      %v1056 = vsel %vm1051, %v965, 0
      %v1059 = vsel %vm1051, %v968, 0
      %1061 = vmatprep.subr.mxu0 0.0
      %1062 = vmatpush1.xpose.msra.mxu0 %v1056
      %1063 = vmatprep.subr.mxu0 0.0
      %1064 = vmatpush1.xpose.msra.mxu0 %v1059
      %1065 = vmatprep.subr.mxu0 0.0
      %1066 = vmatpush1.xpose.msra.mxu0 0.0
      %1067 = vmatprep.subr.mxu0 0.0
      %1068 = vmatpush1.xpose.msra.mxu0 0.0
      %1069 = vmatprep.subr.mxu0 0.0
      %1070 = vmatpush1.xpose.msra.mxu0 0.0
      %1071 = vmatprep.subr.mxu0 0.0
      %1072 = vmatpush1.xpose.msra.mxu0 0.0
      %1073 = vmatprep.subr.mxu0 0.0
      %1074 = vmatpush1.xpose.msra.mxu0 0.0
      %1075 = vmatprep.subr.mxu0 0.0
      %1076 = vmatpush1.xpose.msra.mxu0 0.0
      %1077 = vmatprep.subr.mxu0 0.0
      %1078 = vmatpush1.xpose.msra.mxu0 0.0
      %1079 = vmatprep.subr.mxu0 0.0
      %1080 = vmatpush1.xpose.msra.mxu0 0.0
      %1081 = vmatprep.subr.mxu0 0.0
      %1082 = vmatpush1.xpose.msra.mxu0 0.0
      %1083 = vmatprep.subr.mxu0 0.0
      %1084 = vmatpush1.xpose.msra.mxu0 0.0
      %1085 = vmatprep.subr.mxu0 0.0
      %1086 = vmatpush1.xpose.msra.mxu0 0.0
      %1087 = vmatprep.subr.mxu0 0.0
      %1088 = vmatpush1.xpose.msra.mxu0 0.0
      %1089 = vmatprep.subr.mxu0 0.0
      %1090 = vmatpush1.xpose.msra.mxu0 0.0
      %1091 = vmatprep.subr.mxu0 0.0
      %1092 = vmatpush1.xpose.msra.mxu0 0.0
      %1093 = vmatprep.subr.mxu0 0.0
      %1094 = vmatpush1.xpose.msra.mxu0 0.0
      %1095 = vmatprep.subr.mxu0 0.0
      %1096 = vmatpush1.xpose.msra.mxu0 0.0
      %1097 = vmatprep.subr.mxu0 0.0
      %1098 = vmatpush1.xpose.msra.mxu0 0.0
      %1099 = vmatprep.subr.mxu0 0.0
      %1100 = vmatpush1.xpose.msra.mxu0 0.0
      %1101 = vmatprep.subr.mxu0 0.0
      %1102 = vmatpush1.xpose.msra.mxu0 0.0
      %1103 = vmatprep.subr.mxu0 0.0
      %1104 = vmatpush1.xpose.msra.mxu0 0.0
      %1105 = vmatprep.subr.mxu0 0.0
      %1106 = vmatpush1.xpose.msra.mxu0 0.0
      %1107 = vmatprep.subr.mxu0 0.0
      %1108 = vmatpush1.xpose.msra.mxu0 0.0
      %1109 = vmatprep.subr.mxu0 0.0
      %1110 = vmatpush1.xpose.msra.mxu0 0.0
      %1111 = vmatprep.subr.mxu0 0.0
      %1112 = vmatpush1.xpose.msra.mxu0 0.0
      %1113 = vmatprep.subr.mxu0 0.0
      %1114 = vmatpush1.xpose.msra.mxu0 0.0
      %1115 = vmatprep.subr.mxu0 0.0
      %1116 = vmatpush1.xpose.msra.mxu0 0.0
      %1117 = vmatprep.subr.mxu0 0.0
      %1118 = vmatpush1.xpose.msra.mxu0 0.0
      %1119 = vmatprep.subr.mxu0 0.0
      %1120 = vmatpush1.xpose.msra.mxu0 0.0
      %1121 = vmatprep.subr.mxu0 0.0
      %1122 = vmatpush1.xpose.msra.mxu0 0.0
      %1123 = vmatprep.subr.mxu0 0.0
      %1124 = vmatpush1.xpose.msra.mxu0 0.0
      %1125 = vmatprep.mubr.f32.mxu0 0.0
      %1126 = vmatmul.mubr.f32.gmra.mrb[0].mxu0 %v1053
      %v1127 = vpop.f32.mrb[0].mxu0
      %v1128 = vadd.f32 0.0, %v1127
      %v1129 = vpop.f32.mrb[0].mxu0
      %1130 = vdwg.mxu0
      %v1132 = vsel %vm1051, %v896, 0
      %v1135 = vsel %vm1051, %v973, 0
      %v1138 = vsel %vm1051, %v976, 0
      %1140 = vmatprep.subr.mxu0 0.0
      %1141 = vmatpush1.xpose.msra.mxu0 %v1135
      %1142 = vmatprep.subr.mxu0 0.0
      %1143 = vmatpush1.xpose.msra.mxu0 %v1138
      %1144 = vmatprep.subr.mxu0 0.0
      %1145 = vmatpush1.xpose.msra.mxu0 0.0
      %1146 = vmatprep.subr.mxu0 0.0
      %1147 = vmatpush1.xpose.msra.mxu0 0.0
      %1148 = vmatprep.subr.mxu0 0.0
      %1149 = vmatpush1.xpose.msra.mxu0 0.0
      %1150 = vmatprep.subr.mxu0 0.0
      %1151 = vmatpush1.xpose.msra.mxu0 0.0
      %1152 = vmatprep.subr.mxu0 0.0
      %1153 = vmatpush1.xpose.msra.mxu0 0.0
      %1154 = vmatprep.subr.mxu0 0.0
      %1155 = vmatpush1.xpose.msra.mxu0 0.0
      %1156 = vmatprep.subr.mxu0 0.0
      %1157 = vmatpush1.xpose.msra.mxu0 0.0
      %1158 = vmatprep.subr.mxu0 0.0
      %1159 = vmatpush1.xpose.msra.mxu0 0.0
      %1160 = vmatprep.subr.mxu0 0.0
      %1161 = vmatpush1.xpose.msra.mxu0 0.0
      %1162 = vmatprep.subr.mxu0 0.0
      %1163 = vmatpush1.xpose.msra.mxu0 0.0
      %1164 = vmatprep.subr.mxu0 0.0
      %1165 = vmatpush1.xpose.msra.mxu0 0.0
      %1166 = vmatprep.subr.mxu0 0.0
      %1167 = vmatpush1.xpose.msra.mxu0 0.0
      %1168 = vmatprep.subr.mxu0 0.0
      %1169 = vmatpush1.xpose.msra.mxu0 0.0
      %1170 = vmatprep.subr.mxu0 0.0
      %1171 = vmatpush1.xpose.msra.mxu0 0.0
      %1172 = vmatprep.subr.mxu0 0.0
      %1173 = vmatpush1.xpose.msra.mxu0 0.0
      %1174 = vmatprep.subr.mxu0 0.0
      %1175 = vmatpush1.xpose.msra.mxu0 0.0
      %1176 = vmatprep.subr.mxu0 0.0
      %1177 = vmatpush1.xpose.msra.mxu0 0.0
      %1178 = vmatprep.subr.mxu0 0.0
      %1179 = vmatpush1.xpose.msra.mxu0 0.0
      %1180 = vmatprep.subr.mxu0 0.0
      %1181 = vmatpush1.xpose.msra.mxu0 0.0
      %1182 = vmatprep.subr.mxu0 0.0
      %1183 = vmatpush1.xpose.msra.mxu0 0.0
      %1184 = vmatprep.subr.mxu0 0.0
      %1185 = vmatpush1.xpose.msra.mxu0 0.0
      %1186 = vmatprep.subr.mxu0 0.0
      %1187 = vmatpush1.xpose.msra.mxu0 0.0
      %1188 = vmatprep.subr.mxu0 0.0
      %1189 = vmatpush1.xpose.msra.mxu0 0.0
      %1190 = vmatprep.subr.mxu0 0.0
      %1191 = vmatpush1.xpose.msra.mxu0 0.0
      %1192 = vmatprep.subr.mxu0 0.0
      %1193 = vmatpush1.xpose.msra.mxu0 0.0
      %1194 = vmatprep.subr.mxu0 0.0
      %1195 = vmatpush1.xpose.msra.mxu0 0.0
      %1196 = vmatprep.subr.mxu0 0.0
      %1197 = vmatpush1.xpose.msra.mxu0 0.0
      %1198 = vmatprep.subr.mxu0 0.0
      %1199 = vmatpush1.xpose.msra.mxu0 0.0
      %1200 = vmatprep.subr.mxu0 0.0
      %1201 = vmatpush1.xpose.msra.mxu0 0.0
      %1202 = vmatprep.subr.mxu0 0.0
      %1203 = vmatpush1.xpose.msra.mxu0 0.0
      %1204 = vmatprep.mubr.f32.mxu0 0.0
      %1205 = vmatmul.mubr.f32.gmra.mrb[0].mxu0 %v1132
      %v1206 = vpop.f32.mrb[0].mxu0
      %v1207 = vadd.f32 0.0, %v1206
      %v1208 = vpop.f32.mrb[0].mxu0
      %1209 = vdwg.mxu0
      %v1210 = vmul.f32 %v1128, 0.35355338
      %v1211 = vmul.f32 %v1207, 0.35355338
      %vm1212 = vcmask 130048
      %v1213 = vsel %vm1212, %v1210, -inf
      %1214 = vmax.xlane.f32.xlu0 %v1213
      %v1215 = vpop.xlane.xlu0 %1214
      %v1216 = vsel %vm1212, %v1211, -inf
      %1217 = vmax.xlane.f32.xlu0 %v1216
      %v1218 = vpop.xlane.xlu0 %1217
      %v1219 = vsub.f32 %v1210, %v1215
      %v1220 = vsub.f32 %v1211, %v1218
      %v1221 = vmul.f32 %v1219, 1.442695
      %v1222 = vpow.pop %v1221
      %v1223 = vmul.f32 %v1220, 1.442695
      %v1224 = vpow.pop %v1223
      %v1225 = vsel %vm1212, %v1222, 0.0
      %1226 = vadd.xlane.f32.xlu0 %v1225
      %v1227 = vpop.xlane.xlu0 %1226
      %v1228 = vsel %vm1212, %v1224, 0.0
      %1229 = vadd.xlane.f32.xlu0 %v1228
      %v1230 = vpop.xlane.xlu0 %1229
      %v1231 = vrcp.pop %v1227
      %v1232 = vrcp.pop %v1230
      %v1233 = vmul.f32 %v1222, %v1231
      %v1234 = vmul.f32 %v1224, %v1232
      %v1236 = vsel %vm1212, %v1233, 0
      %1238 = vmatprep.subr.mxu0 0.0
      %1239 = vmatpush1.msra.mxu0 %v1037
      %1240 = vmatprep.subr.mxu0 0.0
      %1241 = vmatpush1.msra.mxu0 %v1040
      %1242 = vmatprep.subr.mxu0 0.0
      %1243 = vmatpush1.msra.mxu0 0.0
      %1244 = vmatprep.subr.mxu0 0.0
      %1245 = vmatpush1.msra.mxu0 0.0
      %1246 = vmatprep.subr.mxu0 0.0
      %1247 = vmatpush1.msra.mxu0 0.0
      %1248 = vmatprep.subr.mxu0 0.0
      %1249 = vmatpush1.msra.mxu0 0.0
      %1250 = vmatprep.subr.mxu0 0.0
      %1251 = vmatpush1.msra.mxu0 0.0
      %1252 = vmatprep.subr.mxu0 0.0
      %1253 = vmatpush1.msra.mxu0 0.0
      %1254 = vmatprep.subr.mxu0 0.0
      %1255 = vmatpush1.msra.mxu0 0.0
      %1256 = vmatprep.subr.mxu0 0.0
      %1257 = vmatpush1.msra.mxu0 0.0
      %1258 = vmatprep.subr.mxu0 0.0
      %1259 = vmatpush1.msra.mxu0 0.0
      %1260 = vmatprep.subr.mxu0 0.0
      %1261 = vmatpush1.msra.mxu0 0.0
      %1262 = vmatprep.subr.mxu0 0.0
      %1263 = vmatpush1.msra.mxu0 0.0
      %1264 = vmatprep.subr.mxu0 0.0
      %1265 = vmatpush1.msra.mxu0 0.0
      %1266 = vmatprep.subr.mxu0 0.0
      %1267 = vmatpush1.msra.mxu0 0.0
      %1268 = vmatprep.subr.mxu0 0.0
      %1269 = vmatpush1.msra.mxu0 0.0
      %1270 = vmatprep.subr.mxu0 0.0
      %1271 = vmatpush1.msra.mxu0 0.0
      %1272 = vmatprep.subr.mxu0 0.0
      %1273 = vmatpush1.msra.mxu0 0.0
      %1274 = vmatprep.subr.mxu0 0.0
      %1275 = vmatpush1.msra.mxu0 0.0
      %1276 = vmatprep.subr.mxu0 0.0
      %1277 = vmatpush1.msra.mxu0 0.0
      %1278 = vmatprep.subr.mxu0 0.0
      %1279 = vmatpush1.msra.mxu0 0.0
      %1280 = vmatprep.subr.mxu0 0.0
      %1281 = vmatpush1.msra.mxu0 0.0
      %1282 = vmatprep.subr.mxu0 0.0
      %1283 = vmatpush1.msra.mxu0 0.0
      %1284 = vmatprep.subr.mxu0 0.0
      %1285 = vmatpush1.msra.mxu0 0.0
      %1286 = vmatprep.subr.mxu0 0.0
      %1287 = vmatpush1.msra.mxu0 0.0
      %1288 = vmatprep.subr.mxu0 0.0
      %1289 = vmatpush1.msra.mxu0 0.0
      %1290 = vmatprep.subr.mxu0 0.0
      %1291 = vmatpush1.msra.mxu0 0.0
      %1292 = vmatprep.subr.mxu0 0.0
      %1293 = vmatpush1.msra.mxu0 0.0
      %1294 = vmatprep.subr.mxu0 0.0
      %1295 = vmatpush1.msra.mxu0 0.0
      %1296 = vmatprep.subr.mxu0 0.0
      %1297 = vmatpush1.msra.mxu0 0.0
      %1298 = vmatprep.subr.mxu0 0.0
      %1299 = vmatpush1.msra.mxu0 0.0
      %1300 = vmatprep.subr.mxu0 0.0
      %1301 = vmatpush1.msra.mxu0 0.0
      %1302 = vmatprep.mubr.f32.mxu0 0.0
      %1303 = vmatmul.mubr.f32.gmra.mrb[0].mxu0 %v1236
      %v1304 = vpop.f32.mrb[0].mxu0
      %v1305 = vadd.f32 0.0, %v1304
      %v1306 = vpop.f32.mrb[0].mxu0
      %1307 = vdwg.mxu0
      %v1309 = vsel %vm1212, %v1234, 0
      %1311 = vmatprep.subr.mxu0 0.0
      %1312 = vmatpush1.msra.mxu0 %v1045
      %1313 = vmatprep.subr.mxu0 0.0
      %1314 = vmatpush1.msra.mxu0 %v1048
      %1315 = vmatprep.subr.mxu0 0.0
      %1316 = vmatpush1.msra.mxu0 0.0
      %1317 = vmatprep.subr.mxu0 0.0
      %1318 = vmatpush1.msra.mxu0 0.0
      %1319 = vmatprep.subr.mxu0 0.0
      %1320 = vmatpush1.msra.mxu0 0.0
      %1321 = vmatprep.subr.mxu0 0.0
      %1322 = vmatpush1.msra.mxu0 0.0
      %1323 = vmatprep.subr.mxu0 0.0
      %1324 = vmatpush1.msra.mxu0 0.0
      %1325 = vmatprep.subr.mxu0 0.0
      %1326 = vmatpush1.msra.mxu0 0.0
      %1327 = vmatprep.subr.mxu0 0.0
      %1328 = vmatpush1.msra.mxu0 0.0
      %1329 = vmatprep.subr.mxu0 0.0
      %1330 = vmatpush1.msra.mxu0 0.0
      %1331 = vmatprep.subr.mxu0 0.0
      %1332 = vmatpush1.msra.mxu0 0.0
      %1333 = vmatprep.subr.mxu0 0.0
      %1334 = vmatpush1.msra.mxu0 0.0
      %1335 = vmatprep.subr.mxu0 0.0
      %1336 = vmatpush1.msra.mxu0 0.0
      %1337 = vmatprep.subr.mxu0 0.0
      %1338 = vmatpush1.msra.mxu0 0.0
      %1339 = vmatprep.subr.mxu0 0.0
      %1340 = vmatpush1.msra.mxu0 0.0
      %1341 = vmatprep.subr.mxu0 0.0
      %1342 = vmatpush1.msra.mxu0 0.0
      %1343 = vmatprep.subr.mxu0 0.0
      %1344 = vmatpush1.msra.mxu0 0.0
      %1345 = vmatprep.subr.mxu0 0.0
      %1346 = vmatpush1.msra.mxu0 0.0
      %1347 = vmatprep.subr.mxu0 0.0
      %1348 = vmatpush1.msra.mxu0 0.0
      %1349 = vmatprep.subr.mxu0 0.0
      %1350 = vmatpush1.msra.mxu0 0.0
      %1351 = vmatprep.subr.mxu0 0.0
      %1352 = vmatpush1.msra.mxu0 0.0
      %1353 = vmatprep.subr.mxu0 0.0
      %1354 = vmatpush1.msra.mxu0 0.0
      %1355 = vmatprep.subr.mxu0 0.0
      %1356 = vmatpush1.msra.mxu0 0.0
      %1357 = vmatprep.subr.mxu0 0.0
      %1358 = vmatpush1.msra.mxu0 0.0
      %1359 = vmatprep.subr.mxu0 0.0
      %1360 = vmatpush1.msra.mxu0 0.0
      %1361 = vmatprep.subr.mxu0 0.0
      %1362 = vmatpush1.msra.mxu0 0.0
      %1363 = vmatprep.subr.mxu0 0.0
      %1364 = vmatpush1.msra.mxu0 0.0
      %1365 = vmatprep.subr.mxu0 0.0
      %1366 = vmatpush1.msra.mxu0 0.0
      %1367 = vmatprep.subr.mxu0 0.0
      %1368 = vmatpush1.msra.mxu0 0.0
      %1369 = vmatprep.subr.mxu0 0.0
      %1370 = vmatpush1.msra.mxu0 0.0
      %1371 = vmatprep.subr.mxu0 0.0
      %1372 = vmatpush1.msra.mxu0 0.0
      %1373 = vmatprep.subr.mxu0 0.0
      %1374 = vmatpush1.msra.mxu0 0.0
      %1375 = vmatprep.mubr.f32.mxu0 0.0
      %1376 = vmatmul.mubr.f32.gmra.mrb[0].mxu0 %v1309
      %v1377 = vpop.f32.mrb[0].mxu0
      %v1378 = vadd.f32 0.0, %v1377
      %v1379 = vpop.f32.mrb[0].mxu0
      %1380 = vdwg.mxu0
      %1381 = vrot.lane.b32.xlu0 %v893, 120
      %v1382 = vpop.permute.xlu0 %1381
      %1383 = vrot.lane.b32.xlu0 %v965, 120
      %v1384 = vpop.permute.xlu0 %1383
      %1385 = vrot.lane.b32.xlu0 %v968, 120
      %v1386 = vpop.permute.xlu0 %1385
      %v1387 = vsel %vm1051, %v1382, 0
      %v1389 = vsel %vm1051, %v1384, 0
      %v1391 = vsel %vm1051, %v1386, 0
      %1393 = vmatprep.subr.mxu0 0.0
      %1394 = vmatpush1.xpose.msra.mxu0 %v1389
      %1395 = vmatprep.subr.mxu0 0.0
      %1396 = vmatpush1.xpose.msra.mxu0 %v1391
      %1397 = vmatprep.subr.mxu0 0.0
      %1398 = vmatpush1.xpose.msra.mxu0 0.0
      %1399 = vmatprep.subr.mxu0 0.0
      %1400 = vmatpush1.xpose.msra.mxu0 0.0
      %1401 = vmatprep.subr.mxu0 0.0
      %1402 = vmatpush1.xpose.msra.mxu0 0.0
      %1403 = vmatprep.subr.mxu0 0.0
      %1404 = vmatpush1.xpose.msra.mxu0 0.0
      %1405 = vmatprep.subr.mxu0 0.0
      %1406 = vmatpush1.xpose.msra.mxu0 0.0
      %1407 = vmatprep.subr.mxu0 0.0
      %1408 = vmatpush1.xpose.msra.mxu0 0.0
      %1409 = vmatprep.subr.mxu0 0.0
      %1410 = vmatpush1.xpose.msra.mxu0 0.0
      %1411 = vmatprep.subr.mxu0 0.0
      %1412 = vmatpush1.xpose.msra.mxu0 0.0
      %1413 = vmatprep.subr.mxu0 0.0
      %1414 = vmatpush1.xpose.msra.mxu0 0.0
      %1415 = vmatprep.subr.mxu0 0.0
      %1416 = vmatpush1.xpose.msra.mxu0 0.0
      %1417 = vmatprep.subr.mxu0 0.0
      %1418 = vmatpush1.xpose.msra.mxu0 0.0
      %1419 = vmatprep.subr.mxu0 0.0
      %1420 = vmatpush1.xpose.msra.mxu0 0.0
      %1421 = vmatprep.subr.mxu0 0.0
      %1422 = vmatpush1.xpose.msra.mxu0 0.0
      %1423 = vmatprep.subr.mxu0 0.0
      %1424 = vmatpush1.xpose.msra.mxu0 0.0
      %1425 = vmatprep.subr.mxu0 0.0
      %1426 = vmatpush1.xpose.msra.mxu0 0.0
      %1427 = vmatprep.subr.mxu0 0.0
      %1428 = vmatpush1.xpose.msra.mxu0 0.0
      %1429 = vmatprep.subr.mxu0 0.0
      %1430 = vmatpush1.xpose.msra.mxu0 0.0
      %1431 = vmatprep.subr.mxu0 0.0
      %1432 = vmatpush1.xpose.msra.mxu0 0.0
      %1433 = vmatprep.subr.mxu0 0.0
      %1434 = vmatpush1.xpose.msra.mxu0 0.0
      %1435 = vmatprep.subr.mxu0 0.0
      %1436 = vmatpush1.xpose.msra.mxu0 0.0
      %1437 = vmatprep.subr.mxu0 0.0
      %1438 = vmatpush1.xpose.msra.mxu0 0.0
      %1439 = vmatprep.subr.mxu0 0.0
      %1440 = vmatpush1.xpose.msra.mxu0 0.0
      %1441 = vmatprep.subr.mxu0 0.0
      %1442 = vmatpush1.xpose.msra.mxu0 0.0
      %1443 = vmatprep.subr.mxu0 0.0
      %1444 = vmatpush1.xpose.msra.mxu0 0.0
      %1445 = vmatprep.subr.mxu0 0.0
      %1446 = vmatpush1.xpose.msra.mxu0 0.0
      %1447 = vmatprep.subr.mxu0 0.0
      %1448 = vmatpush1.xpose.msra.mxu0 0.0
      %1449 = vmatprep.subr.mxu0 0.0
      %1450 = vmatpush1.xpose.msra.mxu0 0.0
      %1451 = vmatprep.subr.mxu0 0.0
      %1452 = vmatpush1.xpose.msra.mxu0 0.0
      %1453 = vmatprep.subr.mxu0 0.0
      %1454 = vmatpush1.xpose.msra.mxu0 0.0
      %1455 = vmatprep.subr.mxu0 0.0
      %1456 = vmatpush1.xpose.msra.mxu0 0.0
      %1457 = vmatprep.mubr.f32.mxu0 0.0
      %1458 = vmatmul.mubr.f32.gmra.mrb[0].mxu0 %v1387
      %v1459 = vpop.f32.mrb[0].mxu0
      %v1460 = vadd.f32 0.0, %v1459
      %v1461 = vpop.f32.mrb[0].mxu0
      %1462 = vdwg.mxu0
      %1463 = vrot.lane.b32.xlu0 %v896, 120
      %v1464 = vpop.permute.xlu0 %1463
      %1465 = vrot.lane.b32.xlu0 %v973, 120
      %v1466 = vpop.permute.xlu0 %1465
      %1467 = vrot.lane.b32.xlu0 %v976, 120
      %v1468 = vpop.permute.xlu0 %1467
      %v1469 = vsel %vm1051, %v1464, 0
      %v1471 = vsel %vm1051, %v1466, 0
      %v1473 = vsel %vm1051, %v1468, 0
      %1475 = vmatprep.subr.mxu0 0.0
      %1476 = vmatpush1.xpose.msra.mxu0 %v1471
      %1477 = vmatprep.subr.mxu0 0.0
      %1478 = vmatpush1.xpose.msra.mxu0 %v1473
      %1479 = vmatprep.subr.mxu0 0.0
      %1480 = vmatpush1.xpose.msra.mxu0 0.0
      %1481 = vmatprep.subr.mxu0 0.0
      %1482 = vmatpush1.xpose.msra.mxu0 0.0
      %1483 = vmatprep.subr.mxu0 0.0
      %1484 = vmatpush1.xpose.msra.mxu0 0.0
      %1485 = vmatprep.subr.mxu0 0.0
      %1486 = vmatpush1.xpose.msra.mxu0 0.0
      %1487 = vmatprep.subr.mxu0 0.0
      %1488 = vmatpush1.xpose.msra.mxu0 0.0
      %1489 = vmatprep.subr.mxu0 0.0
      %1490 = vmatpush1.xpose.msra.mxu0 0.0
      %1491 = vmatprep.subr.mxu0 0.0
      %1492 = vmatpush1.xpose.msra.mxu0 0.0
      %1493 = vmatprep.subr.mxu0 0.0
      %1494 = vmatpush1.xpose.msra.mxu0 0.0
      %1495 = vmatprep.subr.mxu0 0.0
      %1496 = vmatpush1.xpose.msra.mxu0 0.0
      %1497 = vmatprep.subr.mxu0 0.0
      %1498 = vmatpush1.xpose.msra.mxu0 0.0
      %1499 = vmatprep.subr.mxu0 0.0
      %1500 = vmatpush1.xpose.msra.mxu0 0.0
      %1501 = vmatprep.subr.mxu0 0.0
      %1502 = vmatpush1.xpose.msra.mxu0 0.0
      %1503 = vmatprep.subr.mxu0 0.0
      %1504 = vmatpush1.xpose.msra.mxu0 0.0
      %1505 = vmatprep.subr.mxu0 0.0
      %1506 = vmatpush1.xpose.msra.mxu0 0.0
      %1507 = vmatprep.subr.mxu0 0.0
      %1508 = vmatpush1.xpose.msra.mxu0 0.0
      %1509 = vmatprep.subr.mxu0 0.0
      %1510 = vmatpush1.xpose.msra.mxu0 0.0
      %1511 = vmatprep.subr.mxu0 0.0
      %1512 = vmatpush1.xpose.msra.mxu0 0.0
      %1513 = vmatprep.subr.mxu0 0.0
      %1514 = vmatpush1.xpose.msra.mxu0 0.0
      %1515 = vmatprep.subr.mxu0 0.0
      %1516 = vmatpush1.xpose.msra.mxu0 0.0
      %1517 = vmatprep.subr.mxu0 0.0
      %1518 = vmatpush1.xpose.msra.mxu0 0.0
      %1519 = vmatprep.subr.mxu0 0.0
      %1520 = vmatpush1.xpose.msra.mxu0 0.0
      %1521 = vmatprep.subr.mxu0 0.0
      %1522 = vmatpush1.xpose.msra.mxu0 0.0
      %1523 = vmatprep.subr.mxu0 0.0
      %1524 = vmatpush1.xpose.msra.mxu0 0.0
      %1525 = vmatprep.subr.mxu0 0.0
      %1526 = vmatpush1.xpose.msra.mxu0 0.0
      %1527 = vmatprep.subr.mxu0 0.0
      %1528 = vmatpush1.xpose.msra.mxu0 0.0
      %1529 = vmatprep.subr.mxu0 0.0
      %1530 = vmatpush1.xpose.msra.mxu0 0.0
      %1531 = vmatprep.subr.mxu0 0.0
      %1532 = vmatpush1.xpose.msra.mxu0 0.0
      %1533 = vmatprep.subr.mxu0 0.0
      %1534 = vmatpush1.xpose.msra.mxu0 0.0
      %1535 = vmatprep.subr.mxu0 0.0
      %1536 = vmatpush1.xpose.msra.mxu0 0.0
      %1537 = vmatprep.subr.mxu0 0.0
      %1538 = vmatpush1.xpose.msra.mxu0 0.0
      %1539 = vmatprep.mubr.f32.mxu0 0.0
      %1540 = vmatmul.mubr.f32.gmra.mrb[0].mxu0 %v1469
      %v1541 = vpop.f32.mrb[0].mxu0
      %v1542 = vadd.f32 0.0, %v1541
      %v1543 = vpop.f32.mrb[0].mxu0
      %1544 = vdwg.mxu0
      %v1545 = vmul.f32 %v1460, 0.35355338
      %v1546 = vmul.f32 %v1542, 0.35355338
      %v1547 = vsel %vm1212, %v1545, -inf
      %1548 = vmax.xlane.f32.xlu0 %v1547
      %v1549 = vpop.xlane.xlu0 %1548
      %v1550 = vsel %vm1212, %v1546, -inf
      %1551 = vmax.xlane.f32.xlu0 %v1550
      %v1552 = vpop.xlane.xlu0 %1551
      %v1553 = vsub.f32 %v1545, %v1549
      %v1554 = vsub.f32 %v1546, %v1552
      %v1555 = vmul.f32 %v1553, 1.442695
      %v1556 = vpow.pop %v1555
      %v1557 = vmul.f32 %v1554, 1.442695
      %v1558 = vpow.pop %v1557
      %v1559 = vsel %vm1212, %v1556, 0.0
      %1560 = vadd.xlane.f32.xlu0 %v1559
      %v1561 = vpop.xlane.xlu0 %1560
      %v1562 = vsel %vm1212, %v1558, 0.0
      %1563 = vadd.xlane.f32.xlu0 %v1562
      %v1564 = vpop.xlane.xlu0 %1563
      %v1565 = vrcp.pop %v1561
      %v1566 = vrcp.pop %v1564
      %v1567 = vmul.f32 %v1556, %v1565
      %v1568 = vmul.f32 %v1558, %v1566
      %1571 = vrot.lane.b32.xlu0 %v1037, 120
      %v1572 = vpop.permute.xlu0 %1571
      %1573 = vrot.lane.b32.xlu0 %v1040, 120
      %v1574 = vpop.permute.xlu0 %1573
      %v1578 = vsel %vm1212, %v1567, 0
      %1580 = vmatprep.subr.mxu0 0.0
      %1581 = vmatpush1.msra.mxu0 %v1572
      %1582 = vmatprep.subr.mxu0 0.0
      %1583 = vmatpush1.msra.mxu0 %v1574
      %1584 = vmatprep.subr.mxu0 0.0
      %1585 = vmatpush1.msra.mxu0 0.0
      %1586 = vmatprep.subr.mxu0 0.0
      %1587 = vmatpush1.msra.mxu0 0.0
      %1588 = vmatprep.subr.mxu0 0.0
      %1589 = vmatpush1.msra.mxu0 0.0
      %1590 = vmatprep.subr.mxu0 0.0
      %1591 = vmatpush1.msra.mxu0 0.0
      %1592 = vmatprep.subr.mxu0 0.0
      %1593 = vmatpush1.msra.mxu0 0.0
      %1594 = vmatprep.subr.mxu0 0.0
      %1595 = vmatpush1.msra.mxu0 0.0
      %1596 = vmatprep.subr.mxu0 0.0
      %1597 = vmatpush1.msra.mxu0 0.0
      %1598 = vmatprep.subr.mxu0 0.0
      %1599 = vmatpush1.msra.mxu0 0.0
      %1600 = vmatprep.subr.mxu0 0.0
      %1601 = vmatpush1.msra.mxu0 0.0
      %1602 = vmatprep.subr.mxu0 0.0
      %1603 = vmatpush1.msra.mxu0 0.0
      %1604 = vmatprep.subr.mxu0 0.0
      %1605 = vmatpush1.msra.mxu0 0.0
      %1606 = vmatprep.subr.mxu0 0.0
      %1607 = vmatpush1.msra.mxu0 0.0
      %1608 = vmatprep.subr.mxu0 0.0
      %1609 = vmatpush1.msra.mxu0 0.0
      %1610 = vmatprep.subr.mxu0 0.0
      %1611 = vmatpush1.msra.mxu0 0.0
      %1612 = vmatprep.subr.mxu0 0.0
      %1613 = vmatpush1.msra.mxu0 0.0
      %1614 = vmatprep.subr.mxu0 0.0
      %1615 = vmatpush1.msra.mxu0 0.0
      %1616 = vmatprep.subr.mxu0 0.0
      %1617 = vmatpush1.msra.mxu0 0.0
      %1618 = vmatprep.subr.mxu0 0.0
      %1619 = vmatpush1.msra.mxu0 0.0
      %1620 = vmatprep.subr.mxu0 0.0
      %1621 = vmatpush1.msra.mxu0 0.0
      %1622 = vmatprep.subr.mxu0 0.0
      %1623 = vmatpush1.msra.mxu0 0.0
      %1624 = vmatprep.subr.mxu0 0.0
      %1625 = vmatpush1.msra.mxu0 0.0
      %1626 = vmatprep.subr.mxu0 0.0
      %1627 = vmatpush1.msra.mxu0 0.0
      %1628 = vmatprep.subr.mxu0 0.0
      %1629 = vmatpush1.msra.mxu0 0.0
      %1630 = vmatprep.subr.mxu0 0.0
      %1631 = vmatpush1.msra.mxu0 0.0
      %1632 = vmatprep.subr.mxu0 0.0
      %1633 = vmatpush1.msra.mxu0 0.0
      %1634 = vmatprep.subr.mxu0 0.0
      %1635 = vmatpush1.msra.mxu0 0.0
      %1636 = vmatprep.subr.mxu0 0.0
      %1637 = vmatpush1.msra.mxu0 0.0
      %1638 = vmatprep.subr.mxu0 0.0
      %1639 = vmatpush1.msra.mxu0 0.0
      %1640 = vmatprep.subr.mxu0 0.0
      %1641 = vmatpush1.msra.mxu0 0.0
      %1642 = vmatprep.subr.mxu0 0.0
      %1643 = vmatpush1.msra.mxu0 0.0
      %1644 = vmatprep.mubr.f32.mxu0 0.0
      %1645 = vmatmul.mubr.f32.gmra.mrb[0].mxu0 %v1578
      %v1646 = vpop.f32.mrb[0].mxu0
      %v1647 = vadd.f32 0.0, %v1646
      %v1648 = vpop.f32.mrb[0].mxu0
      %1649 = vdwg.mxu0
      %1652 = vrot.lane.b32.xlu0 %v1045, 120
      %v1653 = vpop.permute.xlu0 %1652
      %1654 = vrot.lane.b32.xlu0 %v1048, 120
      %v1655 = vpop.permute.xlu0 %1654
      %v1659 = vsel %vm1212, %v1568, 0
      %1661 = vmatprep.subr.mxu0 0.0
      %1662 = vmatpush1.msra.mxu0 %v1653
      %1663 = vmatprep.subr.mxu0 0.0
      %1664 = vmatpush1.msra.mxu0 %v1655
      %1665 = vmatprep.subr.mxu0 0.0
      %1666 = vmatpush1.msra.mxu0 0.0
      %1667 = vmatprep.subr.mxu0 0.0
      %1668 = vmatpush1.msra.mxu0 0.0
      %1669 = vmatprep.subr.mxu0 0.0
      %1670 = vmatpush1.msra.mxu0 0.0
      %1671 = vmatprep.subr.mxu0 0.0
      %1672 = vmatpush1.msra.mxu0 0.0
      %1673 = vmatprep.subr.mxu0 0.0
      %1674 = vmatpush1.msra.mxu0 0.0
      %1675 = vmatprep.subr.mxu0 0.0
      %1676 = vmatpush1.msra.mxu0 0.0
      %1677 = vmatprep.subr.mxu0 0.0
      %1678 = vmatpush1.msra.mxu0 0.0
      %1679 = vmatprep.subr.mxu0 0.0
      %1680 = vmatpush1.msra.mxu0 0.0
      %1681 = vmatprep.subr.mxu0 0.0
      %1682 = vmatpush1.msra.mxu0 0.0
      %1683 = vmatprep.subr.mxu0 0.0
      %1684 = vmatpush1.msra.mxu0 0.0
      %1685 = vmatprep.subr.mxu0 0.0
      %1686 = vmatpush1.msra.mxu0 0.0
      %1687 = vmatprep.subr.mxu0 0.0
      %1688 = vmatpush1.msra.mxu0 0.0
      %1689 = vmatprep.subr.mxu0 0.0
      %1690 = vmatpush1.msra.mxu0 0.0
      %1691 = vmatprep.subr.mxu0 0.0
      %1692 = vmatpush1.msra.mxu0 0.0
      %1693 = vmatprep.subr.mxu0 0.0
      %1694 = vmatpush1.msra.mxu0 0.0
      %1695 = vmatprep.subr.mxu0 0.0
      %1696 = vmatpush1.msra.mxu0 0.0
      %1697 = vmatprep.subr.mxu0 0.0
      %1698 = vmatpush1.msra.mxu0 0.0
      %1699 = vmatprep.subr.mxu0 0.0
      %1700 = vmatpush1.msra.mxu0 0.0
      %1701 = vmatprep.subr.mxu0 0.0
      %1702 = vmatpush1.msra.mxu0 0.0
      %1703 = vmatprep.subr.mxu0 0.0
      %1704 = vmatpush1.msra.mxu0 0.0
      %1705 = vmatprep.subr.mxu0 0.0
      %1706 = vmatpush1.msra.mxu0 0.0
      %1707 = vmatprep.subr.mxu0 0.0
      %1708 = vmatpush1.msra.mxu0 0.0
      %1709 = vmatprep.subr.mxu0 0.0
      %1710 = vmatpush1.msra.mxu0 0.0
      %1711 = vmatprep.subr.mxu0 0.0
      %1712 = vmatpush1.msra.mxu0 0.0
      %1713 = vmatprep.subr.mxu0 0.0
      %1714 = vmatpush1.msra.mxu0 0.0
      %1715 = vmatprep.subr.mxu0 0.0
      %1716 = vmatpush1.msra.mxu0 0.0
      %1717 = vmatprep.subr.mxu0 0.0
      %1718 = vmatpush1.msra.mxu0 0.0
      %1719 = vmatprep.subr.mxu0 0.0
      %1720 = vmatpush1.msra.mxu0 0.0
      %1721 = vmatprep.subr.mxu0 0.0
      %1722 = vmatpush1.msra.mxu0 0.0
      %1723 = vmatprep.subr.mxu0 0.0
      %1724 = vmatpush1.msra.mxu0 0.0
      %1725 = vmatprep.mubr.f32.mxu0 0.0
      %1726 = vmatmul.mubr.f32.gmra.mrb[0].mxu0 %v1659
      %v1727 = vpop.f32.mrb[0].mxu0
      %v1728 = vadd.f32 0.0, %v1727
      %v1729 = vpop.f32.mrb[0].mxu0
      %1730 = vdwg.mxu0
      %1731 = vrot.lane.b32.xlu0 %v893, 112
      %v1732 = vpop.permute.xlu0 %1731
      %1733 = vrot.lane.b32.xlu0 %v965, 112
      %v1734 = vpop.permute.xlu0 %1733
      %1735 = vrot.lane.b32.xlu0 %v968, 112
      %v1736 = vpop.permute.xlu0 %1735
      %v1737 = vsel %vm1051, %v1732, 0
      %v1739 = vsel %vm1051, %v1734, 0
      %v1741 = vsel %vm1051, %v1736, 0
      %1743 = vmatprep.subr.mxu0 0.0
      %1744 = vmatpush1.xpose.msra.mxu0 %v1739
      %1745 = vmatprep.subr.mxu0 0.0
      %1746 = vmatpush1.xpose.msra.mxu0 %v1741
      %1747 = vmatprep.subr.mxu0 0.0
      %1748 = vmatpush1.xpose.msra.mxu0 0.0
      %1749 = vmatprep.subr.mxu0 0.0
      %1750 = vmatpush1.xpose.msra.mxu0 0.0
      %1751 = vmatprep.subr.mxu0 0.0
      %1752 = vmatpush1.xpose.msra.mxu0 0.0
      %1753 = vmatprep.subr.mxu0 0.0
      %1754 = vmatpush1.xpose.msra.mxu0 0.0
      %1755 = vmatprep.subr.mxu0 0.0
      %1756 = vmatpush1.xpose.msra.mxu0 0.0
      %1757 = vmatprep.subr.mxu0 0.0
      %1758 = vmatpush1.xpose.msra.mxu0 0.0
      %1759 = vmatprep.subr.mxu0 0.0
      %1760 = vmatpush1.xpose.msra.mxu0 0.0
      %1761 = vmatprep.subr.mxu0 0.0
      %1762 = vmatpush1.xpose.msra.mxu0 0.0
      %1763 = vmatprep.subr.mxu0 0.0
      %1764 = vmatpush1.xpose.msra.mxu0 0.0
      %1765 = vmatprep.subr.mxu0 0.0
      %1766 = vmatpush1.xpose.msra.mxu0 0.0
      %1767 = vmatprep.subr.mxu0 0.0
      %1768 = vmatpush1.xpose.msra.mxu0 0.0
      %1769 = vmatprep.subr.mxu0 0.0
      %1770 = vmatpush1.xpose.msra.mxu0 0.0
      %1771 = vmatprep.subr.mxu0 0.0
      %1772 = vmatpush1.xpose.msra.mxu0 0.0
      %1773 = vmatprep.subr.mxu0 0.0
      %1774 = vmatpush1.xpose.msra.mxu0 0.0
      %1775 = vmatprep.subr.mxu0 0.0
      %1776 = vmatpush1.xpose.msra.mxu0 0.0
      %1777 = vmatprep.subr.mxu0 0.0
      %1778 = vmatpush1.xpose.msra.mxu0 0.0
      %1779 = vmatprep.subr.mxu0 0.0
      %1780 = vmatpush1.xpose.msra.mxu0 0.0
      %1781 = vmatprep.subr.mxu0 0.0
      %1782 = vmatpush1.xpose.msra.mxu0 0.0
      %1783 = vmatprep.subr.mxu0 0.0
      %1784 = vmatpush1.xpose.msra.mxu0 0.0
      %1785 = vmatprep.subr.mxu0 0.0
      %1786 = vmatpush1.xpose.msra.mxu0 0.0
      %1787 = vmatprep.subr.mxu0 0.0
      %1788 = vmatpush1.xpose.msra.mxu0 0.0
      %1789 = vmatprep.subr.mxu0 0.0
      %1790 = vmatpush1.xpose.msra.mxu0 0.0
      %1791 = vmatprep.subr.mxu0 0.0
      %1792 = vmatpush1.xpose.msra.mxu0 0.0
      %1793 = vmatprep.subr.mxu0 0.0
      %1794 = vmatpush1.xpose.msra.mxu0 0.0
      %1795 = vmatprep.subr.mxu0 0.0
      %1796 = vmatpush1.xpose.msra.mxu0 0.0
      %1797 = vmatprep.subr.mxu0 0.0
      %1798 = vmatpush1.xpose.msra.mxu0 0.0
      %1799 = vmatprep.subr.mxu0 0.0
      %1800 = vmatpush1.xpose.msra.mxu0 0.0
      %1801 = vmatprep.subr.mxu0 0.0
      %1802 = vmatpush1.xpose.msra.mxu0 0.0
      %1803 = vmatprep.subr.mxu0 0.0
      %1804 = vmatpush1.xpose.msra.mxu0 0.0
      %1805 = vmatprep.subr.mxu0 0.0
      %1806 = vmatpush1.xpose.msra.mxu0 0.0
      %1807 = vmatprep.mubr.f32.mxu0 0.0
      %1808 = vmatmul.mubr.f32.gmra.mrb[0].mxu0 %v1737
      %v1809 = vpop.f32.mrb[0].mxu0
      %v1810 = vadd.f32 0.0, %v1809
      %v1811 = vpop.f32.mrb[0].mxu0
      %1812 = vdwg.mxu0
      %1813 = vrot.lane.b32.xlu0 %v896, 112
      %v1814 = vpop.permute.xlu0 %1813
      %1815 = vrot.lane.b32.xlu0 %v973, 112
      %v1816 = vpop.permute.xlu0 %1815
      %1817 = vrot.lane.b32.xlu0 %v976, 112
      %v1818 = vpop.permute.xlu0 %1817
      %v1819 = vsel %vm1051, %v1814, 0
      %v1821 = vsel %vm1051, %v1816, 0
      %v1823 = vsel %vm1051, %v1818, 0
      %1825 = vmatprep.subr.mxu0 0.0
      %1826 = vmatpush1.xpose.msra.mxu0 %v1821
      %1827 = vmatprep.subr.mxu0 0.0
      %1828 = vmatpush1.xpose.msra.mxu0 %v1823
      %1829 = vmatprep.subr.mxu0 0.0
      %1830 = vmatpush1.xpose.msra.mxu0 0.0
      %1831 = vmatprep.subr.mxu0 0.0
      %1832 = vmatpush1.xpose.msra.mxu0 0.0
      %1833 = vmatprep.subr.mxu0 0.0
      %1834 = vmatpush1.xpose.msra.mxu0 0.0
      %1835 = vmatprep.subr.mxu0 0.0
      %1836 = vmatpush1.xpose.msra.mxu0 0.0
      %1837 = vmatprep.subr.mxu0 0.0
      %1838 = vmatpush1.xpose.msra.mxu0 0.0
      %1839 = vmatprep.subr.mxu0 0.0
      %1840 = vmatpush1.xpose.msra.mxu0 0.0
      %1841 = vmatprep.subr.mxu0 0.0
      %1842 = vmatpush1.xpose.msra.mxu0 0.0
      %1843 = vmatprep.subr.mxu0 0.0
      %1844 = vmatpush1.xpose.msra.mxu0 0.0
      %1845 = vmatprep.subr.mxu0 0.0
      %1846 = vmatpush1.xpose.msra.mxu0 0.0
      %1847 = vmatprep.subr.mxu0 0.0
      %1848 = vmatpush1.xpose.msra.mxu0 0.0
      %1849 = vmatprep.subr.mxu0 0.0
      %1850 = vmatpush1.xpose.msra.mxu0 0.0
      %1851 = vmatprep.subr.mxu0 0.0
      %1852 = vmatpush1.xpose.msra.mxu0 0.0
      %1853 = vmatprep.subr.mxu0 0.0
      %1854 = vmatpush1.xpose.msra.mxu0 0.0
      %1855 = vmatprep.subr.mxu0 0.0
      %1856 = vmatpush1.xpose.msra.mxu0 0.0
      %1857 = vmatprep.subr.mxu0 0.0
      %1858 = vmatpush1.xpose.msra.mxu0 0.0
      %1859 = vmatprep.subr.mxu0 0.0
      %1860 = vmatpush1.xpose.msra.mxu0 0.0
      %1861 = vmatprep.subr.mxu0 0.0
      %1862 = vmatpush1.xpose.msra.mxu0 0.0
      %1863 = vmatprep.subr.mxu0 0.0
      %1864 = vmatpush1.xpose.msra.mxu0 0.0
      %1865 = vmatprep.subr.mxu0 0.0
      %1866 = vmatpush1.xpose.msra.mxu0 0.0
      %1867 = vmatprep.subr.mxu0 0.0
      %1868 = vmatpush1.xpose.msra.mxu0 0.0
      %1869 = vmatprep.subr.mxu0 0.0
      %1870 = vmatpush1.xpose.msra.mxu0 0.0
      %1871 = vmatprep.subr.mxu0 0.0
      %1872 = vmatpush1.xpose.msra.mxu0 0.0
      %1873 = vmatprep.subr.mxu0 0.0
      %1874 = vmatpush1.xpose.msra.mxu0 0.0
      %1875 = vmatprep.subr.mxu0 0.0
      %1876 = vmatpush1.xpose.msra.mxu0 0.0
      %1877 = vmatprep.subr.mxu0 0.0
      %1878 = vmatpush1.xpose.msra.mxu0 0.0
      %1879 = vmatprep.subr.mxu0 0.0
      %1880 = vmatpush1.xpose.msra.mxu0 0.0
      %1881 = vmatprep.subr.mxu0 0.0
      %1882 = vmatpush1.xpose.msra.mxu0 0.0
      %1883 = vmatprep.subr.mxu0 0.0
      %1884 = vmatpush1.xpose.msra.mxu0 0.0
      %1885 = vmatprep.subr.mxu0 0.0
      %1886 = vmatpush1.xpose.msra.mxu0 0.0
      %1887 = vmatprep.subr.mxu0 0.0
      %1888 = vmatpush1.xpose.msra.mxu0 0.0
      %1889 = vmatprep.mubr.f32.mxu0 0.0
      %1890 = vmatmul.mubr.f32.gmra.mrb[0].mxu0 %v1819
      %v1891 = vpop.f32.mrb[0].mxu0
      %v1892 = vadd.f32 0.0, %v1891
      %v1893 = vpop.f32.mrb[0].mxu0
      %1894 = vdwg.mxu0
      %v1895 = vmul.f32 %v1810, 0.35355338
      %v1896 = vmul.f32 %v1892, 0.35355338
      %v1897 = vsel %vm1212, %v1895, -inf
      %1898 = vmax.xlane.f32.xlu0 %v1897
      %v1899 = vpop.xlane.xlu0 %1898
      %v1900 = vsel %vm1212, %v1896, -inf
      %1901 = vmax.xlane.f32.xlu0 %v1900
      %v1902 = vpop.xlane.xlu0 %1901
      %v1903 = vsub.f32 %v1895, %v1899
      %v1904 = vsub.f32 %v1896, %v1902
      %v1905 = vmul.f32 %v1903, 1.442695
      %v1906 = vpow.pop %v1905
      %v1907 = vmul.f32 %v1904, 1.442695
      %v1908 = vpow.pop %v1907
      %v1909 = vsel %vm1212, %v1906, 0.0
      %1910 = vadd.xlane.f32.xlu0 %v1909
      %v1911 = vpop.xlane.xlu0 %1910
      %v1912 = vsel %vm1212, %v1908, 0.0
      %1913 = vadd.xlane.f32.xlu0 %v1912
      %v1914 = vpop.xlane.xlu0 %1913
      %v1915 = vrcp.pop %v1911
      %v1916 = vrcp.pop %v1914
      %v1917 = vmul.f32 %v1906, %v1915
      %v1918 = vmul.f32 %v1908, %v1916
      %1919 = vrot.lane.b32.xlu0 %v1037, 112
      %v1920 = vpop.permute.xlu0 %1919
      %1921 = vrot.lane.b32.xlu0 %v1040, 112
      %v1922 = vpop.permute.xlu0 %1921
      %v1926 = vsel %vm1212, %v1917, 0
      %1928 = vmatprep.subr.mxu0 0.0
      %1929 = vmatpush1.msra.mxu0 %v1920
      %1930 = vmatprep.subr.mxu0 0.0
      %1931 = vmatpush1.msra.mxu0 %v1922
      %1932 = vmatprep.subr.mxu0 0.0
      %1933 = vmatpush1.msra.mxu0 0.0
      %1934 = vmatprep.subr.mxu0 0.0
      %1935 = vmatpush1.msra.mxu0 0.0
      %1936 = vmatprep.subr.mxu0 0.0
      %1937 = vmatpush1.msra.mxu0 0.0
      %1938 = vmatprep.subr.mxu0 0.0
      %1939 = vmatpush1.msra.mxu0 0.0
      %1940 = vmatprep.subr.mxu0 0.0
      %1941 = vmatpush1.msra.mxu0 0.0
      %1942 = vmatprep.subr.mxu0 0.0
      %1943 = vmatpush1.msra.mxu0 0.0
      %1944 = vmatprep.subr.mxu0 0.0
      %1945 = vmatpush1.msra.mxu0 0.0
      %1946 = vmatprep.subr.mxu0 0.0
      %1947 = vmatpush1.msra.mxu0 0.0
      %1948 = vmatprep.subr.mxu0 0.0
      %1949 = vmatpush1.msra.mxu0 0.0
      %1950 = vmatprep.subr.mxu0 0.0
      %1951 = vmatpush1.msra.mxu0 0.0
      %1952 = vmatprep.subr.mxu0 0.0
      %1953 = vmatpush1.msra.mxu0 0.0
      %1954 = vmatprep.subr.mxu0 0.0
      %1955 = vmatpush1.msra.mxu0 0.0
      %1956 = vmatprep.subr.mxu0 0.0
      %1957 = vmatpush1.msra.mxu0 0.0
      %1958 = vmatprep.subr.mxu0 0.0
      %1959 = vmatpush1.msra.mxu0 0.0
      %1960 = vmatprep.subr.mxu0 0.0
      %1961 = vmatpush1.msra.mxu0 0.0
      %1962 = vmatprep.subr.mxu0 0.0
      %1963 = vmatpush1.msra.mxu0 0.0
      %1964 = vmatprep.subr.mxu0 0.0
      %1965 = vmatpush1.msra.mxu0 0.0
      %1966 = vmatprep.subr.mxu0 0.0
      %1967 = vmatpush1.msra.mxu0 0.0
      %1968 = vmatprep.subr.mxu0 0.0
      %1969 = vmatpush1.msra.mxu0 0.0
      %1970 = vmatprep.subr.mxu0 0.0
      %1971 = vmatpush1.msra.mxu0 0.0
      %1972 = vmatprep.subr.mxu0 0.0
      %1973 = vmatpush1.msra.mxu0 0.0
      %1974 = vmatprep.subr.mxu0 0.0
      %1975 = vmatpush1.msra.mxu0 0.0
      %1976 = vmatprep.subr.mxu0 0.0
      %1977 = vmatpush1.msra.mxu0 0.0
      %1978 = vmatprep.subr.mxu0 0.0
      %1979 = vmatpush1.msra.mxu0 0.0
      %1980 = vmatprep.subr.mxu0 0.0
      %1981 = vmatpush1.msra.mxu0 0.0
      %1982 = vmatprep.subr.mxu0 0.0
      %1983 = vmatpush1.msra.mxu0 0.0
      %1984 = vmatprep.subr.mxu0 0.0
      %1985 = vmatpush1.msra.mxu0 0.0
      %1986 = vmatprep.subr.mxu0 0.0
      %1987 = vmatpush1.msra.mxu0 0.0
      %1988 = vmatprep.subr.mxu0 0.0
      %1989 = vmatpush1.msra.mxu0 0.0
      %1990 = vmatprep.subr.mxu0 0.0
      %1991 = vmatpush1.msra.mxu0 0.0
      %1992 = vmatprep.mubr.f32.mxu0 0.0
      %1993 = vmatmul.mubr.f32.gmra.mrb[0].mxu0 %v1926
      %v1994 = vpop.f32.mrb[0].mxu0
      %v1995 = vadd.f32 0.0, %v1994
      %v1996 = vpop.f32.mrb[0].mxu0
      %1997 = vdwg.mxu0
      %1998 = vrot.lane.b32.xlu0 %v1045, 112
      %v1999 = vpop.permute.xlu0 %1998
      %2000 = vrot.lane.b32.xlu0 %v1048, 112
      %v2001 = vpop.permute.xlu0 %2000
      %v2005 = vsel %vm1212, %v1918, 0
      %2007 = vmatprep.subr.mxu0 0.0
      %2008 = vmatpush1.msra.mxu0 %v1999
      %2009 = vmatprep.subr.mxu0 0.0
      %2010 = vmatpush1.msra.mxu0 %v2001
      %2011 = vmatprep.subr.mxu0 0.0
      %2012 = vmatpush1.msra.mxu0 0.0
      %2013 = vmatprep.subr.mxu0 0.0
      %2014 = vmatpush1.msra.mxu0 0.0
      %2015 = vmatprep.subr.mxu0 0.0
      %2016 = vmatpush1.msra.mxu0 0.0
      %2017 = vmatprep.subr.mxu0 0.0
      %2018 = vmatpush1.msra.mxu0 0.0
      %2019 = vmatprep.subr.mxu0 0.0
      %2020 = vmatpush1.msra.mxu0 0.0
      %2021 = vmatprep.subr.mxu0 0.0
      %2022 = vmatpush1.msra.mxu0 0.0
      %2023 = vmatprep.subr.mxu0 0.0
      %2024 = vmatpush1.msra.mxu0 0.0
      %2025 = vmatprep.subr.mxu0 0.0
      %2026 = vmatpush1.msra.mxu0 0.0
      %2027 = vmatprep.subr.mxu0 0.0
      %2028 = vmatpush1.msra.mxu0 0.0
      %2029 = vmatprep.subr.mxu0 0.0
      %2030 = vmatpush1.msra.mxu0 0.0
      %2031 = vmatprep.subr.mxu0 0.0
      %2032 = vmatpush1.msra.mxu0 0.0
      %2033 = vmatprep.subr.mxu0 0.0
      %2034 = vmatpush1.msra.mxu0 0.0
      %2035 = vmatprep.subr.mxu0 0.0
      %2036 = vmatpush1.msra.mxu0 0.0
      %2037 = vmatprep.subr.mxu0 0.0
      %2038 = vmatpush1.msra.mxu0 0.0
      %2039 = vmatprep.subr.mxu0 0.0
      %2040 = vmatpush1.msra.mxu0 0.0
      %2041 = vmatprep.subr.mxu0 0.0
      %2042 = vmatpush1.msra.mxu0 0.0
      %2043 = vmatprep.subr.mxu0 0.0
      %2044 = vmatpush1.msra.mxu0 0.0
      %2045 = vmatprep.subr.mxu0 0.0
      %2046 = vmatpush1.msra.mxu0 0.0
      %2047 = vmatprep.subr.mxu0 0.0
      %2048 = vmatpush1.msra.mxu0 0.0
      %2049 = vmatprep.subr.mxu0 0.0
      %2050 = vmatpush1.msra.mxu0 0.0
      %2051 = vmatprep.subr.mxu0 0.0
      %2052 = vmatpush1.msra.mxu0 0.0
      %2053 = vmatprep.subr.mxu0 0.0
      %2054 = vmatpush1.msra.mxu0 0.0
      %2055 = vmatprep.subr.mxu0 0.0
      %2056 = vmatpush1.msra.mxu0 0.0
      %2057 = vmatprep.subr.mxu0 0.0
      %2058 = vmatpush1.msra.mxu0 0.0
      %2059 = vmatprep.subr.mxu0 0.0
      %2060 = vmatpush1.msra.mxu0 0.0
      %2061 = vmatprep.subr.mxu0 0.0
      %2062 = vmatpush1.msra.mxu0 0.0
      %2063 = vmatprep.subr.mxu0 0.0
      %2064 = vmatpush1.msra.mxu0 0.0
      %2065 = vmatprep.subr.mxu0 0.0
      %2066 = vmatpush1.msra.mxu0 0.0
      %2067 = vmatprep.subr.mxu0 0.0
      %2068 = vmatpush1.msra.mxu0 0.0
      %2069 = vmatprep.subr.mxu0 0.0
      %2070 = vmatpush1.msra.mxu0 0.0
      %2071 = vmatprep.mubr.f32.mxu0 0.0
      %2072 = vmatmul.mubr.f32.gmra.mrb[0].mxu0 %v2005
      %v2073 = vpop.f32.mrb[0].mxu0
      %v2074 = vadd.f32 0.0, %v2073
      %v2075 = vpop.f32.mrb[0].mxu0
      %2076 = vdwg.mxu0
      %2077 = vrot.lane.b32.xlu0 %v893, 104
      %v2078 = vpop.permute.xlu0 %2077
      %2079 = vrot.lane.b32.xlu0 %v965, 104
      %v2080 = vpop.permute.xlu0 %2079
      %2081 = vrot.lane.b32.xlu0 %v968, 104
      %v2082 = vpop.permute.xlu0 %2081
      %v2083 = vsel %vm1051, %v2078, 0
      %v2085 = vsel %vm1051, %v2080, 0
      %v2087 = vsel %vm1051, %v2082, 0
      %2089 = vmatprep.subr.mxu0 0.0
      %2090 = vmatpush1.xpose.msra.mxu0 %v2085
      %2091 = vmatprep.subr.mxu0 0.0
      %2092 = vmatpush1.xpose.msra.mxu0 %v2087
      %2093 = vmatprep.subr.mxu0 0.0
      %2094 = vmatpush1.xpose.msra.mxu0 0.0
      %2095 = vmatprep.subr.mxu0 0.0
      %2096 = vmatpush1.xpose.msra.mxu0 0.0
      %2097 = vmatprep.subr.mxu0 0.0
      %2098 = vmatpush1.xpose.msra.mxu0 0.0
      %2099 = vmatprep.subr.mxu0 0.0
      %2100 = vmatpush1.xpose.msra.mxu0 0.0
      %2101 = vmatprep.subr.mxu0 0.0
      %2102 = vmatpush1.xpose.msra.mxu0 0.0
      %2103 = vmatprep.subr.mxu0 0.0
      %2104 = vmatpush1.xpose.msra.mxu0 0.0
      %2105 = vmatprep.subr.mxu0 0.0
      %2106 = vmatpush1.xpose.msra.mxu0 0.0
      %2107 = vmatprep.subr.mxu0 0.0
      %2108 = vmatpush1.xpose.msra.mxu0 0.0
      %2109 = vmatprep.subr.mxu0 0.0
      %2110 = vmatpush1.xpose.msra.mxu0 0.0
      %2111 = vmatprep.subr.mxu0 0.0
      %2112 = vmatpush1.xpose.msra.mxu0 0.0
      %2113 = vmatprep.subr.mxu0 0.0
      %2114 = vmatpush1.xpose.msra.mxu0 0.0
      %2115 = vmatprep.subr.mxu0 0.0
      %2116 = vmatpush1.xpose.msra.mxu0 0.0
      %2117 = vmatprep.subr.mxu0 0.0
      %2118 = vmatpush1.xpose.msra.mxu0 0.0
      %2119 = vmatprep.subr.mxu0 0.0
      %2120 = vmatpush1.xpose.msra.mxu0 0.0
      %2121 = vmatprep.subr.mxu0 0.0
      %2122 = vmatpush1.xpose.msra.mxu0 0.0
      %2123 = vmatprep.subr.mxu0 0.0
      %2124 = vmatpush1.xpose.msra.mxu0 0.0
      %2125 = vmatprep.subr.mxu0 0.0
      %2126 = vmatpush1.xpose.msra.mxu0 0.0
      %2127 = vmatprep.subr.mxu0 0.0
      %2128 = vmatpush1.xpose.msra.mxu0 0.0
      %2129 = vmatprep.subr.mxu0 0.0
      %2130 = vmatpush1.xpose.msra.mxu0 0.0
      %2131 = vmatprep.subr.mxu0 0.0
      %2132 = vmatpush1.xpose.msra.mxu0 0.0
      %2133 = vmatprep.subr.mxu0 0.0
      %2134 = vmatpush1.xpose.msra.mxu0 0.0
      %2135 = vmatprep.subr.mxu0 0.0
      %2136 = vmatpush1.xpose.msra.mxu0 0.0
      %2137 = vmatprep.subr.mxu0 0.0
      %2138 = vmatpush1.xpose.msra.mxu0 0.0
      %2139 = vmatprep.subr.mxu0 0.0
      %2140 = vmatpush1.xpose.msra.mxu0 0.0
      %2141 = vmatprep.subr.mxu0 0.0
      %2142 = vmatpush1.xpose.msra.mxu0 0.0
      %2143 = vmatprep.subr.mxu0 0.0
      %2144 = vmatpush1.xpose.msra.mxu0 0.0
      %2145 = vmatprep.subr.mxu0 0.0
      %2146 = vmatpush1.xpose.msra.mxu0 0.0
      %2147 = vmatprep.subr.mxu0 0.0
      %2148 = vmatpush1.xpose.msra.mxu0 0.0
      %2149 = vmatprep.subr.mxu0 0.0
      %2150 = vmatpush1.xpose.msra.mxu0 0.0
      %2151 = vmatprep.subr.mxu0 0.0
      %2152 = vmatpush1.xpose.msra.mxu0 0.0
      %2153 = vmatprep.mubr.f32.mxu0 0.0
      %2154 = vmatmul.mubr.f32.gmra.mrb[0].mxu0 %v2083
      %v2155 = vpop.f32.mrb[0].mxu0
      %v2156 = vadd.f32 0.0, %v2155
      %v2157 = vpop.f32.mrb[0].mxu0
      %2158 = vdwg.mxu0
      %2159 = vrot.lane.b32.xlu0 %v896, 104
      %v2160 = vpop.permute.xlu0 %2159
      %2161 = vrot.lane.b32.xlu0 %v973, 104
      %v2162 = vpop.permute.xlu0 %2161
      %2163 = vrot.lane.b32.xlu0 %v976, 104
      %v2164 = vpop.permute.xlu0 %2163
      %v2165 = vsel %vm1051, %v2160, 0
      %v2167 = vsel %vm1051, %v2162, 0
      %v2169 = vsel %vm1051, %v2164, 0
      %2171 = vmatprep.subr.mxu0 0.0
      %2172 = vmatpush1.xpose.msra.mxu0 %v2167
      %2173 = vmatprep.subr.mxu0 0.0
      %2174 = vmatpush1.xpose.msra.mxu0 %v2169
      %2175 = vmatprep.subr.mxu0 0.0
      %2176 = vmatpush1.xpose.msra.mxu0 0.0
      %2177 = vmatprep.subr.mxu0 0.0
      %2178 = vmatpush1.xpose.msra.mxu0 0.0
      %2179 = vmatprep.subr.mxu0 0.0
      %2180 = vmatpush1.xpose.msra.mxu0 0.0
      %2181 = vmatprep.subr.mxu0 0.0
      %2182 = vmatpush1.xpose.msra.mxu0 0.0
      %2183 = vmatprep.subr.mxu0 0.0
      %2184 = vmatpush1.xpose.msra.mxu0 0.0
      %2185 = vmatprep.subr.mxu0 0.0
      %2186 = vmatpush1.xpose.msra.mxu0 0.0
      %2187 = vmatprep.subr.mxu0 0.0
      %2188 = vmatpush1.xpose.msra.mxu0 0.0
      %2189 = vmatprep.subr.mxu0 0.0
      %2190 = vmatpush1.xpose.msra.mxu0 0.0
      %2191 = vmatprep.subr.mxu0 0.0
      %2192 = vmatpush1.xpose.msra.mxu0 0.0
      %2193 = vmatprep.subr.mxu0 0.0
      %2194 = vmatpush1.xpose.msra.mxu0 0.0
      %2195 = vmatprep.subr.mxu0 0.0
      %2196 = vmatpush1.xpose.msra.mxu0 0.0
      %2197 = vmatprep.subr.mxu0 0.0
      %2198 = vmatpush1.xpose.msra.mxu0 0.0
      %2199 = vmatprep.subr.mxu0 0.0
      %2200 = vmatpush1.xpose.msra.mxu0 0.0
      %2201 = vmatprep.subr.mxu0 0.0
      %2202 = vmatpush1.xpose.msra.mxu0 0.0
      %2203 = vmatprep.subr.mxu0 0.0
      %2204 = vmatpush1.xpose.msra.mxu0 0.0
      %2205 = vmatprep.subr.mxu0 0.0
      %2206 = vmatpush1.xpose.msra.mxu0 0.0
      %2207 = vmatprep.subr.mxu0 0.0
      %2208 = vmatpush1.xpose.msra.mxu0 0.0
      %2209 = vmatprep.subr.mxu0 0.0
      %2210 = vmatpush1.xpose.msra.mxu0 0.0
      %2211 = vmatprep.subr.mxu0 0.0
      %2212 = vmatpush1.xpose.msra.mxu0 0.0
      %2213 = vmatprep.subr.mxu0 0.0
      %2214 = vmatpush1.xpose.msra.mxu0 0.0
      %2215 = vmatprep.subr.mxu0 0.0
      %2216 = vmatpush1.xpose.msra.mxu0 0.0
      %2217 = vmatprep.subr.mxu0 0.0
      %2218 = vmatpush1.xpose.msra.mxu0 0.0
      %2219 = vmatprep.subr.mxu0 0.0
      %2220 = vmatpush1.xpose.msra.mxu0 0.0
      %2221 = vmatprep.subr.mxu0 0.0
      %2222 = vmatpush1.xpose.msra.mxu0 0.0
      %2223 = vmatprep.subr.mxu0 0.0
      %2224 = vmatpush1.xpose.msra.mxu0 0.0
      %2225 = vmatprep.subr.mxu0 0.0
      %2226 = vmatpush1.xpose.msra.mxu0 0.0
      %2227 = vmatprep.subr.mxu0 0.0
      %2228 = vmatpush1.xpose.msra.mxu0 0.0
      %2229 = vmatprep.subr.mxu0 0.0
      %2230 = vmatpush1.xpose.msra.mxu0 0.0
      %2231 = vmatprep.subr.mxu0 0.0
      %2232 = vmatpush1.xpose.msra.mxu0 0.0
      %2233 = vmatprep.subr.mxu0 0.0
      %2234 = vmatpush1.xpose.msra.mxu0 0.0
      %2235 = vmatprep.mubr.f32.mxu0 0.0
      %2236 = vmatmul.mubr.f32.gmra.mrb[0].mxu0 %v2165
      %v2237 = vpop.f32.mrb[0].mxu0
      %v2238 = vadd.f32 0.0, %v2237
      %v2239 = vpop.f32.mrb[0].mxu0
      %2240 = vdwg.mxu0
      %v2241 = vmul.f32 %v2156, 0.35355338
      %v2242 = vmul.f32 %v2238, 0.35355338
      %v2243 = vsel %vm1212, %v2241, -inf
      %2244 = vmax.xlane.f32.xlu0 %v2243
      %v2245 = vpop.xlane.xlu0 %2244
      %v2246 = vsel %vm1212, %v2242, -inf
      %2247 = vmax.xlane.f32.xlu0 %v2246
      %v2248 = vpop.xlane.xlu0 %2247
      %v2249 = vsub.f32 %v2241, %v2245
      %v2250 = vsub.f32 %v2242, %v2248
      %v2251 = vmul.f32 %v2249, 1.442695
      %v2252 = vpow.pop %v2251
      %v2253 = vmul.f32 %v2250, 1.442695
      %v2254 = vpow.pop %v2253
      %v2255 = vsel %vm1212, %v2252, 0.0
      %2256 = vadd.xlane.f32.xlu0 %v2255
      %v2257 = vpop.xlane.xlu0 %2256
      %v2258 = vsel %vm1212, %v2254, 0.0
      %2259 = vadd.xlane.f32.xlu0 %v2258
      %v2260 = vpop.xlane.xlu0 %2259
      %v2261 = vrcp.pop %v2257
      %v2262 = vrcp.pop %v2260
      %v2263 = vmul.f32 %v2252, %v2261
      %v2264 = vmul.f32 %v2254, %v2262
      %2265 = vrot.lane.b32.xlu0 %v1037, 104
      %v2266 = vpop.permute.xlu0 %2265
      %2267 = vrot.lane.b32.xlu0 %v1040, 104
      %v2268 = vpop.permute.xlu0 %2267
      %v2272 = vsel %vm1212, %v2263, 0
      %2274 = vmatprep.subr.mxu0 0.0
      %2275 = vmatpush1.msra.mxu0 %v2266
      %2276 = vmatprep.subr.mxu0 0.0
      %2277 = vmatpush1.msra.mxu0 %v2268
      %2278 = vmatprep.subr.mxu0 0.0
      %2279 = vmatpush1.msra.mxu0 0.0
      %2280 = vmatprep.subr.mxu0 0.0
      %2281 = vmatpush1.msra.mxu0 0.0
      %2282 = vmatprep.subr.mxu0 0.0
      %2283 = vmatpush1.msra.mxu0 0.0
      %2284 = vmatprep.subr.mxu0 0.0
      %2285 = vmatpush1.msra.mxu0 0.0
      %2286 = vmatprep.subr.mxu0 0.0
      %2287 = vmatpush1.msra.mxu0 0.0
      %2288 = vmatprep.subr.mxu0 0.0
      %2289 = vmatpush1.msra.mxu0 0.0
      %2290 = vmatprep.subr.mxu0 0.0
      %2291 = vmatpush1.msra.mxu0 0.0
      %2292 = vmatprep.subr.mxu0 0.0
      %2293 = vmatpush1.msra.mxu0 0.0
      %2294 = vmatprep.subr.mxu0 0.0
      %2295 = vmatpush1.msra.mxu0 0.0
      %2296 = vmatprep.subr.mxu0 0.0
      %2297 = vmatpush1.msra.mxu0 0.0
      %2298 = vmatprep.subr.mxu0 0.0
      %2299 = vmatpush1.msra.mxu0 0.0
      %2300 = vmatprep.subr.mxu0 0.0
      %2301 = vmatpush1.msra.mxu0 0.0
      %2302 = vmatprep.subr.mxu0 0.0
      %2303 = vmatpush1.msra.mxu0 0.0
      %2304 = vmatprep.subr.mxu0 0.0
      %2305 = vmatpush1.msra.mxu0 0.0
      %2306 = vmatprep.subr.mxu0 0.0
      %2307 = vmatpush1.msra.mxu0 0.0
      %2308 = vmatprep.subr.mxu0 0.0
      %2309 = vmatpush1.msra.mxu0 0.0
      %2310 = vmatprep.subr.mxu0 0.0
      %2311 = vmatpush1.msra.mxu0 0.0
      %2312 = vmatprep.subr.mxu0 0.0
      %2313 = vmatpush1.msra.mxu0 0.0
      %2314 = vmatprep.subr.mxu0 0.0
      %2315 = vmatpush1.msra.mxu0 0.0
      %2316 = vmatprep.subr.mxu0 0.0
      %2317 = vmatpush1.msra.mxu0 0.0
      %2318 = vmatprep.subr.mxu0 0.0
      %2319 = vmatpush1.msra.mxu0 0.0
      %2320 = vmatprep.subr.mxu0 0.0
      %2321 = vmatpush1.msra.mxu0 0.0
      %2322 = vmatprep.subr.mxu0 0.0
      %2323 = vmatpush1.msra.mxu0 0.0
      %2324 = vmatprep.subr.mxu0 0.0
      %2325 = vmatpush1.msra.mxu0 0.0
      %2326 = vmatprep.subr.mxu0 0.0
      %2327 = vmatpush1.msra.mxu0 0.0
      %2328 = vmatprep.subr.mxu0 0.0
      %2329 = vmatpush1.msra.mxu0 0.0
      %2330 = vmatprep.subr.mxu0 0.0
      %2331 = vmatpush1.msra.mxu0 0.0
      %2332 = vmatprep.subr.mxu0 0.0
      %2333 = vmatpush1.msra.mxu0 0.0
      %2334 = vmatprep.subr.mxu0 0.0
      %2335 = vmatpush1.msra.mxu0 0.0
      %2336 = vmatprep.subr.mxu0 0.0
      %2337 = vmatpush1.msra.mxu0 0.0
      %2338 = vmatprep.mubr.f32.mxu0 0.0
      %2339 = vmatmul.mubr.f32.gmra.mrb[0].mxu0 %v2272
      %v2340 = vpop.f32.mrb[0].mxu0
      %v2341 = vadd.f32 0.0, %v2340
      %v2342 = vpop.f32.mrb[0].mxu0
      %2343 = vdwg.mxu0
      %2344 = vrot.lane.b32.xlu0 %v1045, 104
      %v2345 = vpop.permute.xlu0 %2344
      %2346 = vrot.lane.b32.xlu0 %v1048, 104
      %v2347 = vpop.permute.xlu0 %2346
      %v2351 = vsel %vm1212, %v2264, 0
      %2353 = vmatprep.subr.mxu0 0.0
      %2354 = vmatpush1.msra.mxu0 %v2345
      %2355 = vmatprep.subr.mxu0 0.0
      %2356 = vmatpush1.msra.mxu0 %v2347
      %2357 = vmatprep.subr.mxu0 0.0
      %2358 = vmatpush1.msra.mxu0 0.0
      %2359 = vmatprep.subr.mxu0 0.0
      %2360 = vmatpush1.msra.mxu0 0.0
      %2361 = vmatprep.subr.mxu0 0.0
      %2362 = vmatpush1.msra.mxu0 0.0
      %2363 = vmatprep.subr.mxu0 0.0
      %2364 = vmatpush1.msra.mxu0 0.0
      %2365 = vmatprep.subr.mxu0 0.0
      %2366 = vmatpush1.msra.mxu0 0.0
      %2367 = vmatprep.subr.mxu0 0.0
      %2368 = vmatpush1.msra.mxu0 0.0
      %2369 = vmatprep.subr.mxu0 0.0
      %2370 = vmatpush1.msra.mxu0 0.0
      %2371 = vmatprep.subr.mxu0 0.0
      %2372 = vmatpush1.msra.mxu0 0.0
      %2373 = vmatprep.subr.mxu0 0.0
      %2374 = vmatpush1.msra.mxu0 0.0
      %2375 = vmatprep.subr.mxu0 0.0
      %2376 = vmatpush1.msra.mxu0 0.0
      %2377 = vmatprep.subr.mxu0 0.0
      %2378 = vmatpush1.msra.mxu0 0.0
      %2379 = vmatprep.subr.mxu0 0.0
      %2380 = vmatpush1.msra.mxu0 0.0
      %2381 = vmatprep.subr.mxu0 0.0
      %2382 = vmatpush1.msra.mxu0 0.0
      %2383 = vmatprep.subr.mxu0 0.0
      %2384 = vmatpush1.msra.mxu0 0.0
      %2385 = vmatprep.subr.mxu0 0.0
      %2386 = vmatpush1.msra.mxu0 0.0
      %2387 = vmatprep.subr.mxu0 0.0
      %2388 = vmatpush1.msra.mxu0 0.0
      %2389 = vmatprep.subr.mxu0 0.0
      %2390 = vmatpush1.msra.mxu0 0.0
      %2391 = vmatprep.subr.mxu0 0.0
      %2392 = vmatpush1.msra.mxu0 0.0
      %2393 = vmatprep.subr.mxu0 0.0
      %2394 = vmatpush1.msra.mxu0 0.0
      %2395 = vmatprep.subr.mxu0 0.0
      %2396 = vmatpush1.msra.mxu0 0.0
      %2397 = vmatprep.subr.mxu0 0.0
      %2398 = vmatpush1.msra.mxu0 0.0
      %2399 = vmatprep.subr.mxu0 0.0
      %2400 = vmatpush1.msra.mxu0 0.0
      %2401 = vmatprep.subr.mxu0 0.0
      %2402 = vmatpush1.msra.mxu0 0.0
      %2403 = vmatprep.subr.mxu0 0.0
      %2404 = vmatpush1.msra.mxu0 0.0
      %2405 = vmatprep.subr.mxu0 0.0
      %2406 = vmatpush1.msra.mxu0 0.0
      %2407 = vmatprep.subr.mxu0 0.0
      %2408 = vmatpush1.msra.mxu0 0.0
      %2409 = vmatprep.subr.mxu0 0.0
      %2410 = vmatpush1.msra.mxu0 0.0
      %2411 = vmatprep.subr.mxu0 0.0
      %2412 = vmatpush1.msra.mxu0 0.0
      %2413 = vmatprep.subr.mxu0 0.0
      %2414 = vmatpush1.msra.mxu0 0.0
      %2415 = vmatprep.subr.mxu0 0.0
      %2416 = vmatpush1.msra.mxu0 0.0
      %2417 = vmatprep.mubr.f32.mxu0 0.0
      %2418 = vmatmul.mubr.f32.gmra.mrb[0].mxu0 %v2351
      %v2419 = vpop.f32.mrb[0].mxu0
      %v2420 = vadd.f32 0.0, %v2419
      %v2421 = vpop.f32.mrb[0].mxu0
      %2422 = vdwg.mxu0
      %2425 = vrot.lane.b32.xlu0 %v1647, 8
      %v2426 = vpop.permute.xlu0 %2425
      %2427 = vrot.lane.b32.xlu0 %v1728, 8
      %v2428 = vpop.permute.xlu0 %2427
      %2433 = vrot.lane.b32.xlu0 %v1995, 16
      %v2434 = vpop.permute.xlu0 %2433
      %2435 = vrot.lane.b32.xlu0 %v2074, 16
      %v2436 = vpop.permute.xlu0 %2435
      %2441 = vrot.lane.b32.xlu0 %v2341, 24
      %v2442 = vpop.permute.xlu0 %2441
      %2443 = vrot.lane.b32.xlu0 %v2420, 24
      %v2444 = vpop.permute.xlu0 %2443
      %v2447 = vsel %vm1051, %v1305, %v2426
      %v2448 = vsel %vm1051, %v1378, %v2428
      %v2449 = vsel %vm1212, %v2447, %v2434
      %v2450 = vsel %vm1212, %v2448, %v2436
      %vm2451 = vcmask 195584
      %v2452 = vsel %vm2451, %v2449, %v2442
      %v2453 = vsel %vm2451, %v2450, %v2444
      %v2454 = vld [vmem:[%s752] sm:$0xf]
      %v2455 = vld [vmem:[%s752 + $0x4] sm:$0xf]
      %v2456 = vld [vmem:[%s752 + $0x8] sm:$0xf]
      %v2457 = vld [vmem:[%s752 + $0xc] sm:$0xf]
      %v2458 = vpack.c.bf16 %v2453, %v2452
      %v2459 = vld [vmem:[%s755] sm:$0x1]
      %v2461 = vlaneseq
      %v2462 = vshrl.u32 %v2461, 7
      %v2463 = vsub.s32 0, %v2462
      %v2464 = vrot.slane %v2459, %v2463
      %v2470 = vunpack.c.l.b16 %v2454
      %v2471 = vunpack.c.l.b16 %v2455
      %v2472 = vunpack.c.l.b16 %v2456
      %v2473 = vunpack.c.l.b16 %v2457
      %v2474 = vpack.c.b16 %v2471, %v2470
      %v2475 = vpack.c.b16 %v2473, %v2472
      %v2479 = vsel %vm854, %v2458, 0
      %2481 = vmatprep.subr.bf16.mxu0 0
      %2482 = vmatpush1.bf16.msra.mxu0 %v2474
      %2483 = vmatprep.subr.bf16.mxu0 0
      %2484 = vmatpush1.bf16.msra.mxu0 %v2475
      %2485 = vmatprep.subr.bf16.mxu0 0
      %2486 = vmatpush1.bf16.msra.mxu0 0
      %2487 = vmatprep.subr.bf16.mxu0 0
      %2488 = vmatpush1.bf16.msra.mxu0 0
      %2489 = vmatprep.subr.bf16.mxu0 0
      %2490 = vmatpush1.bf16.msra.mxu0 0
      %2491 = vmatprep.subr.bf16.mxu0 0
      %2492 = vmatpush1.bf16.msra.mxu0 0
      %2493 = vmatprep.subr.bf16.mxu0 0
      %2494 = vmatpush1.bf16.msra.mxu0 0
      %2495 = vmatprep.subr.bf16.mxu0 0
      %2496 = vmatpush1.bf16.msra.mxu0 0
      %2497 = vmatprep.subr.bf16.mxu0 0
      %2498 = vmatpush1.bf16.msra.mxu0 0
      %2499 = vmatprep.subr.bf16.mxu0 0
      %2500 = vmatpush1.bf16.msra.mxu0 0
      %2501 = vmatprep.subr.bf16.mxu0 0
      %2502 = vmatpush1.bf16.msra.mxu0 0
      %2503 = vmatprep.subr.bf16.mxu0 0
      %2504 = vmatpush1.bf16.msra.mxu0 0
      %2505 = vmatprep.subr.bf16.mxu0 0
      %2506 = vmatpush1.bf16.msra.mxu0 0
      %2507 = vmatprep.subr.bf16.mxu0 0
      %2508 = vmatpush1.bf16.msra.mxu0 0
      %2509 = vmatprep.subr.bf16.mxu0 0
      %2510 = vmatpush1.bf16.msra.mxu0 0
      %2511 = vmatprep.subr.bf16.mxu0 0
      %2512 = vmatpush1.bf16.msra.mxu0 0
      %2513 = vmatprep.mubr.bf16.mxu0 0
      %2514 = vmatmul.mubr.bf16.gmra.mrb[0].mxu0 %v2479
      %v2515 = vpop.f32.mrb[0].mxu0
      %v2516 = vadd.f32 %v2464, %v2515
      %v2517 = vpop.f32.mrb[0].mxu0
      %v2518 = vpop.f32.mrb[0].mxu0
      %v2519 = vadd.f32 %v2464, %v2518
      %v2520 = vpop.f32.mrb[0].mxu0
      %2521 = vdwg.mxu0
      %v2522 = vadd.f32 %v792, %v2516
      %v2523 = vadd.f32 %v793, %v2519
      %v2524 = vsel %vm854, %v2522, 0.0
      %2525 = vadd.xlane.f32.xlu0 %v2524
      %v2526 = vpop.xlane.xlu0 %2525
      %v2527 = vsel %vm854, %v2523, 0.0
      %2528 = vadd.xlane.f32.xlu0 %v2527
      %v2529 = vpop.xlane.xlu0 %2528
      %v2530 = vrcp.pop 32.0
      %v2531 = vmul.f32 %v2526, %v2530
      %v2532 = vmul.f32 %v2529, %v2530
      %v2533 = vsub.f32 %v2522, %v2531
      %v2534 = vsub.f32 %v2523, %v2532
      %v2535 = vmul.f32 %v2533, %v2533
      %v2536 = vmul.f32 %v2534, %v2534
      %v2537 = vsel %vm854, %v2535, 0.0
      %2538 = vadd.xlane.f32.xlu0 %v2537
      %v2539 = vpop.xlane.xlu0 %2538
      %v2540 = vsel %vm854, %v2536, 0.0
      %2541 = vadd.xlane.f32.xlu0 %v2540
      %v2542 = vpop.xlane.xlu0 %2541
      %v2543 = vmul.f32 %v2539, %v2530
      %v2544 = vmul.f32 %v2542, %v2530
      %v2545 = vadd.f32 %v2543, 1e-05
      %v2546 = vadd.f32 %v2544, 1e-05
      %v2547 = vrsqrt.pop %v2545
      %v2548 = vrsqrt.pop %v2546
      %v2549 = vmul.f32 %v2533, %v2547
      %v2550 = vmul.f32 %v2534, %v2548
      %v2551 = vld [vmem:[%s758] sm:$0x1]
      %v2553 = vlaneseq
      %v2554 = vshrl.u32 %v2553, 7
      %v2555 = vsub.s32 0, %v2554
      %v2556 = vrot.slane %v2551, %v2555
      %v2558 = vmul.f32 %v2549, %v2556
      %v2559 = vmul.f32 %v2550, %v2556
      %v2560 = vld [vmem:[%s761] sm:$0x1]
      %v2562 = vlaneseq
      %v2563 = vshrl.u32 %v2562, 7
      %v2564 = vsub.s32 0, %v2563
      %v2565 = vrot.slane %v2560, %v2564
      %v2567 = vadd.f32 %v2558, %v2565
      %v2568 = vadd.f32 %v2559, %v2565
      %v2569 = vld [vmem:[%s766] sm:$0xf]
      %v2570 = vld [vmem:[%s766 + $0x4] sm:$0xf]
      %v2571 = vld [vmem:[%s766 + $0x8] sm:$0xf]
      %v2572 = vld [vmem:[%s766 + $0xc] sm:$0xf]
      %v2573 = vpack.c.bf16 %v2568, %v2567
      %v2574 = vld [vmem:[%s769] sm:$0x1]
      %v2576 = vlaneseq
      %v2577 = vshrl.u32 %v2576, 7
      %v2578 = vsub.s32 0, %v2577
      %v2579 = vrot.slane %v2574, %v2578
      %v2585 = vunpack.c.l.b16 %v2569
      %v2586 = vunpack.c.l.b16 %v2570
      %v2587 = vunpack.c.l.b16 %v2571
      %v2588 = vunpack.c.l.b16 %v2572
      %v2589 = vpack.c.b16 %v2586, %v2585
      %v2590 = vpack.c.b16 %v2588, %v2587
      %v2594 = vsel %vm854, %v2573, 0
      %2596 = vmatprep.subr.bf16.mxu0 0
      %2597 = vmatpush1.bf16.msra.mxu0 %v2589
      %2598 = vmatprep.subr.bf16.mxu0 0
      %2599 = vmatpush1.bf16.msra.mxu0 %v2590
      %2600 = vmatprep.subr.bf16.mxu0 0
      %2601 = vmatpush1.bf16.msra.mxu0 0
      %2602 = vmatprep.subr.bf16.mxu0 0
      %2603 = vmatpush1.bf16.msra.mxu0 0
      %2604 = vmatprep.subr.bf16.mxu0 0
      %2605 = vmatpush1.bf16.msra.mxu0 0
      %2606 = vmatprep.subr.bf16.mxu0 0
      %2607 = vmatpush1.bf16.msra.mxu0 0
      %2608 = vmatprep.subr.bf16.mxu0 0
      %2609 = vmatpush1.bf16.msra.mxu0 0
      %2610 = vmatprep.subr.bf16.mxu0 0
      %2611 = vmatpush1.bf16.msra.mxu0 0
      %2612 = vmatprep.subr.bf16.mxu0 0
      %2613 = vmatpush1.bf16.msra.mxu0 0
      %2614 = vmatprep.subr.bf16.mxu0 0
      %2615 = vmatpush1.bf16.msra.mxu0 0
      %2616 = vmatprep.subr.bf16.mxu0 0
      %2617 = vmatpush1.bf16.msra.mxu0 0
      %2618 = vmatprep.subr.bf16.mxu0 0
      %2619 = vmatpush1.bf16.msra.mxu0 0
      %2620 = vmatprep.subr.bf16.mxu0 0
      %2621 = vmatpush1.bf16.msra.mxu0 0
      %2622 = vmatprep.subr.bf16.mxu0 0
      %2623 = vmatpush1.bf16.msra.mxu0 0
      %2624 = vmatprep.subr.bf16.mxu0 0
      %2625 = vmatpush1.bf16.msra.mxu0 0
      %2626 = vmatprep.subr.bf16.mxu0 0
      %2627 = vmatpush1.bf16.msra.mxu0 0
      %2628 = vmatprep.mubr.bf16.mxu0 0
      %2629 = vmatmul.mubr.bf16.gmra.mrb[0].mxu0 %v2594
      %v2630 = vpop.f32.mrb[0].mxu0
      %v2631 = vadd.f32 %v2579, %v2630
      %v2632 = vpop.f32.mrb[0].mxu0
      %v2633 = vpop.f32.mrb[0].mxu0
      %v2634 = vadd.f32 %v2579, %v2633
      %v2635 = vpop.f32.mrb[0].mxu0
      %2636 = vdwg.mxu0
      %v2637 = vmax.f32 %v2631, 0.0
      %v2638 = vmax.f32 %v2634, 0.0
      %v2639 = vld [vmem:[%s774] sm:$0xf]
      %v2640 = vld [vmem:[%s774 + $0x4] sm:$0xf]
      %v2641 = vld [vmem:[%s774 + $0x8] sm:$0xf]
      %v2642 = vld [vmem:[%s774 + $0xc] sm:$0xf]
      %v2643 = vld [vmem:[%s774 + $0x10] sm:$0xf]
      %v2644 = vld [vmem:[%s774 + $0x14] sm:$0xf]
      %v2645 = vld [vmem:[%s774 + $0x18] sm:$0xf]
      %v2646 = vld [vmem:[%s774 + $0x1c] sm:$0xf]
      %v2647 = vpack.c.bf16 %v2638, %v2637
      %v2648 = vld [vmem:[%s777] sm:$0x1]
      %v2650 = vlaneseq
      %v2651 = vshrl.u32 %v2650, 7
      %v2652 = vsub.s32 0, %v2651
      %v2653 = vrot.slane %v2648, %v2652
      %v2663 = vunpack.c.l.b16 %v2639
      %v2664 = vunpack.c.l.b16 %v2640
      %v2665 = vunpack.c.l.b16 %v2641
      %v2666 = vunpack.c.l.b16 %v2642
      %v2667 = vunpack.c.l.b16 %v2643
      %v2668 = vunpack.c.l.b16 %v2644
      %v2669 = vunpack.c.l.b16 %v2645
      %v2670 = vunpack.c.l.b16 %v2646
      %v2671 = vpack.c.b16 %v2664, %v2663
      %v2672 = vpack.c.b16 %v2666, %v2665
      %v2673 = vpack.c.b16 %v2668, %v2667
      %v2674 = vpack.c.b16 %v2670, %v2669
      %vm2679 = vcmask 523264
      %v2681 = vsel %vm2679, %v2647, 0
      %2683 = vmatprep.subr.bf16.mxu0 0
      %2684 = vmatpush1.bf16.msra.mxu0 %v2671
      %2685 = vmatprep.subr.bf16.mxu0 0
      %2686 = vmatpush1.bf16.msra.mxu0 %v2672
      %2687 = vmatprep.subr.bf16.mxu0 0
      %2688 = vmatpush1.bf16.msra.mxu0 %v2673
      %2689 = vmatprep.subr.bf16.mxu0 0
      %2690 = vmatpush1.bf16.msra.mxu0 %v2674
      %2691 = vmatprep.subr.bf16.mxu0 0
      %2692 = vmatpush1.bf16.msra.mxu0 0
      %2693 = vmatprep.subr.bf16.mxu0 0
      %2694 = vmatpush1.bf16.msra.mxu0 0
      %2695 = vmatprep.subr.bf16.mxu0 0
      %2696 = vmatpush1.bf16.msra.mxu0 0
      %2697 = vmatprep.subr.bf16.mxu0 0
      %2698 = vmatpush1.bf16.msra.mxu0 0
      %2699 = vmatprep.subr.bf16.mxu0 0
      %2700 = vmatpush1.bf16.msra.mxu0 0
      %2701 = vmatprep.subr.bf16.mxu0 0
      %2702 = vmatpush1.bf16.msra.mxu0 0
      %2703 = vmatprep.subr.bf16.mxu0 0
      %2704 = vmatpush1.bf16.msra.mxu0 0
      %2705 = vmatprep.subr.bf16.mxu0 0
      %2706 = vmatpush1.bf16.msra.mxu0 0
      %2707 = vmatprep.subr.bf16.mxu0 0
      %2708 = vmatpush1.bf16.msra.mxu0 0
      %2709 = vmatprep.subr.bf16.mxu0 0
      %2710 = vmatpush1.bf16.msra.mxu0 0
      %2711 = vmatprep.subr.bf16.mxu0 0
      %2712 = vmatpush1.bf16.msra.mxu0 0
      %2713 = vmatprep.subr.bf16.mxu0 0
      %2714 = vmatpush1.bf16.msra.mxu0 0
      %2715 = vmatprep.mubr.bf16.mxu0 0
      %2716 = vmatmul.mubr.bf16.gmra.mrb[0].mxu0 %v2681
      %v2717 = vpop.f32.mrb[0].mxu0
      %v2718 = vadd.f32 %v2653, %v2717
      %v2719 = vpop.f32.mrb[0].mxu0
      %v2720 = vpop.f32.mrb[0].mxu0
      %v2721 = vadd.f32 %v2653, %v2720
      %v2722 = vpop.f32.mrb[0].mxu0
      %2723 = vdwg.mxu0
      %v2724 = vadd.f32 %v2567, %v2718
      %v2725 = vadd.f32 %v2568, %v2721
      %v2726 = vsel %vm854, %v2724, 0.0
      %2727 = vadd.xlane.f32.xlu0 %v2726
      %v2728 = vpop.xlane.xlu0 %2727
      %v2729 = vsel %vm854, %v2725, 0.0
      %2730 = vadd.xlane.f32.xlu0 %v2729
      %v2731 = vpop.xlane.xlu0 %2730
      %v2732 = vmul.f32 %v2728, %v2530
      %v2733 = vmul.f32 %v2731, %v2530
      %v2734 = vsub.f32 %v2724, %v2732
      %v2735 = vsub.f32 %v2725, %v2733
      %v2736 = vmul.f32 %v2734, %v2734
      %v2737 = vmul.f32 %v2735, %v2735
      %v2738 = vsel %vm854, %v2736, 0.0
      %2739 = vadd.xlane.f32.xlu0 %v2738
      %v2740 = vpop.xlane.xlu0 %2739
      %v2741 = vsel %vm854, %v2737, 0.0
      %2742 = vadd.xlane.f32.xlu0 %v2741
      %v2743 = vpop.xlane.xlu0 %2742
      %v2744 = vmul.f32 %v2740, %v2530
      %v2745 = vmul.f32 %v2743, %v2530
      %v2746 = vadd.f32 %v2744, 1e-05
      %v2747 = vadd.f32 %v2745, 1e-05
      %v2748 = vrsqrt.pop %v2746
      %v2749 = vrsqrt.pop %v2747
      %v2750 = vmul.f32 %v2734, %v2748
      %v2751 = vmul.f32 %v2735, %v2749
      %v2752 = vld [vmem:[%s780] sm:$0x1]
      %v2754 = vlaneseq
      %v2755 = vshrl.u32 %v2754, 7
      %v2756 = vsub.s32 0, %v2755
      %v2757 = vrot.slane %v2752, %v2756
      %v2759 = vmul.f32 %v2750, %v2757
      %v2760 = vmul.f32 %v2751, %v2757
      %v2761 = vld [vmem:[%s783] sm:$0x1]
      %v2763 = vlaneseq
      %v2764 = vshrl.u32 %v2763, 7
      %v2765 = vsub.s32 0, %v2764
      %v2766 = vrot.slane %v2761, %v2765
      %v2768 = vadd.f32 %v2759, %v2766
      %v2769 = vadd.f32 %v2760, %v2766
      %2770 = vst.msk [vmem:[%s788] sm:$0xff] %vm854, %v2768
      %2771 = vst.msk [vmem:[%s788 + $0x8] sm:$0xff] %vm854, %v2769
      %p2772 = scmp.lt.s32.totalorder %s28, 2
      %s2773 = scalar_select %p2772, %s28, 2
      %s2774 = smul.addr %s2773, 2
      %s2775 = smul.addr %s2774, 8
      %s2776 = scalar_lea.vmem %s17, %s2775
      // Predicated region
      $region89: #{multiemo_core.6} parent=87 // pred_check
        %p2777 = pneg %p483
      $region90: #{multiemo_core.6} parent=87 // pred_check_branch
        %2779 = sbr.rel (%p2777) target = $region92
      $region91: #{multiemo_core.6} parent=87 // pred_region
        _
      $region92: #{multiemo_core.6} parent=87 // pred_fallthru
        _
    $region88: #{multiemo_core.6} parent=5 // pred_fallthru
      _
    %p2780 = scmp.le.s32.totalorder 2, %s23
    // Predicated region
    $region93: #{multiemo_core.6} parent=5 // pred_check
      %p2781 = pneg %p2780
    $region94: #{multiemo_core.6} parent=5 // pred_check_branch
      %2783 = sbr.rel (%p2781) target = $region96
    $region95: #{multiemo_core.6} parent=5 // pred_region
      %s2784 = ssub.s32 %s23, 2
      // Predicated region
      $region97: #{multiemo_core.6} parent=95 // pred_check
        %p2785 = pneg %p489
      $region98: #{multiemo_core.6} parent=95 // pred_check_branch
        %2787 = sbr.rel (%p2785) target = $region100
      $region99: #{multiemo_core.6} parent=95 // pred_region
        %p2788 = scmp.lt.s32.totalorder %s29, 2
        %s2789 = scalar_select %p2788, %s29, 2
        %s2790 = smul.addr %s2789, 2
        %s2791 = smul.addr %s2790, 8
        %s2792 = scalar_lea.vmem %s17, %s2791
      $region100: #{multiemo_core.6} parent=95 // pred_fallthru
        _
    $region96: #{multiemo_core.6} parent=5 // pred_fallthru
      _
  $region6: #{multiemo_core.6} parent=0 // loop_footer
    %s27 = sadd.s32 1, %s23
  $region7: #{multiemo_core.6} parent=0 // loop_footer_branch
    %22 = sbr.rel target = $region3
  $region8: #{multiemo_core.6} parent=0 // loop_exit
    _

</llo_original>
